<compile_context>
chip_gen: v7x
topology: tpu7x:2x2x1
jax: 0.10.0
libtpu: 0.0.40
codegen_flags: <defaults>
</compile_context>

<pallas_src>
import functools

import jax
import jax.numpy as jnp
from jax.experimental import pallas as pl
from jax.experimental.pallas import tpu as pltpu

LANE = 128                       # pad Cout up to a multiple of this (lane-dense stores)
VMEM_LIMIT = 32 * 1024 * 1024    # safe scoped-VMEM request on v5e / v6e / v7x


def _round_up(x, m):
    return ((x + m - 1) // m) * m


# ---------------------------------------------------------------------------
# Pallas kernel: 3x3 conv (9 per-tap MXU matmuls) + folded-BN affine
#                [+ residual add] [+ ReLU]
# ---------------------------------------------------------------------------
def _conv3x3_kernel(*refs, num_phases, taps, relu, has_residual):
    phase_refs = refs[:num_phases]            # each (Lp, Cin)    bf16 phase plane
    w_ref = refs[num_phases]                  # (9, Cin, Coutp)   bf16, BN scale folded
    b_ref = refs[num_phases + 1]              # (1, Coutp)        f32 folded BN bias
    r_ref = refs[num_phases + 2] if has_residual else None   # (M, Coutp) f32
    o_ref = refs[-1]                          # (M, Coutp)
    m, coutp = o_ref.shape

    acc = jnp.zeros((m, coutp), jnp.float32)
    # 9 taps: each is a contiguous static slice of a phase plane -> MXU matmul.
    for t, (p, off) in enumerate(taps):
        xs = phase_refs[p][pl.ds(off, m), :]                          # (M, Cin) bf16
        acc = acc + jnp.dot(xs, w_ref[t],
                            preferred_element_type=jnp.float32)       # f32 accumulation

    y = acc + b_ref[...]
    if has_residual:
        y = y + r_ref[...]
    if relu:
        y = jnp.maximum(y, 0.0)
    o_ref[...] = y.astype(o_ref.dtype)


# ---------------------------------------------------------------------------
# Host-side wrapper for one (possibly multi-branch) 3x3 conv + folded BN.
# ---------------------------------------------------------------------------
def conv3x3_bn(x_nhwc, branches, *, stride, relu, residual=None):
    """3x3 conv (padding=1, given stride) + folded BatchNorm.

    `branches` is a list of (w_oihw, bn_scale, bn_bias) sharing the same input;
    branch outputs are concatenated along channels (used to fuse conv1 with the
    conv shortcut).  Optionally adds `residual` (NHWC, channels == total Cout)
    and applies ReLU.  Returns (N, Ho, Wo, total Cout) float32.
    """
    N, H, W, cin = x_nhwc.shape
    s = int(stride)
    ho = (H - 1) // s + 1
    wo = (W - 1) // s + 1

    # ---- fold BN scale into weights; concat branches along Cout --------------
    w_list, b_list = [], []
    for (w_oihw, bn_scale, bn_bias) in branches:
        wt = jnp.transpose(w_oihw, (2, 3, 1, 0))                 # (3,3,Cin,Cout)
        wt = wt * bn_scale[None, None, None, :]                  # fold BN scale
        w_list.append(wt)
        b_list.append(bn_bias)
    w_cat = jnp.concatenate(w_list, axis=-1)
    b_cat = jnp.concatenate(b_list, axis=-1)
    cout = w_cat.shape[-1]
    coutp = _round_up(max(cout, LANE), LANE)                     # lane-dense output

    w_mat = jnp.pad(w_cat, ((0, 0), (0, 0), (0, 0), (0, coutp - cout)))
    w_mat = w_mat.reshape(9, cin, coutp).astype(jnp.bfloat16)    # bf16 MXU input
    b_mat = jnp.pad(b_cat, (0, coutp - cout)).reshape(1, coutp).astype(jnp.float32)

    # ---- build flattened bf16 input phase planes (total bytes == input) ------
    wp = _round_up(W + 2, s)                                     # padded width, mult of s
    xpad = jnp.pad(x_nhwc, ((0, 0), (1, 1), (1, wp - W - 1), (0, 0))).astype(jnp.bfloat16)
    wph = wp // s                                                # phase-plane width
    m = ho * wph                                                 # rows computed per image
    max_off = (2 // s) * wph + (2 // s)
    lp = m + max_off                                             # required flat length

    nphase = min(s, 3)
    phases, phase_idx = [], {}
    for pa in range(nphase):
        for pb in range(nphase):
            ph = xpad[:, pa::s, pb::s, :].reshape(N, -1, cin)
            cur = ph.shape[1]
            if cur < lp:
                ph = jnp.pad(ph, ((0, 0), (0, lp - cur), (0, 0)))
            else:
                ph = ph[:, :lp, :]
            phase_idx[(pa, pb)] = len(phases)
            phases.append(ph)

    # tap (kh, kw) -> (phase plane, static flat offset)
    taps = []
    for kh in range(3):
        for kw in range(3):
            p = phase_idx[(kh % s, kw % s)]
            off = (kh // s) * wph + (kw // s)
            taps.append((p, off))
    taps = tuple(taps)

    # ---- pallas_call ----------------------------------------------------------
    args = list(phases) + [w_mat, b_mat]
    in_specs = (
        [pl.BlockSpec((None, lp, cin), lambda n: (n, 0, 0))] * len(phases)
        + [pl.BlockSpec((9, cin, coutp), lambda n: (0, 0, 0)),
           pl.BlockSpec((1, coutp), lambda n: (0, 0))]
    )
    has_residual = residual is not None
    if has_residual:
        assert residual.shape == (N, ho, wo, cout), (residual.shape, (N, ho, wo, cout))
        r = jnp.pad(residual, ((0, 0), (0, 0), (0, wph - wo), (0, coutp - cout)))
        r = r.reshape(N, m, coutp).astype(jnp.float32)
        args.append(r)
        in_specs.append(pl.BlockSpec((None, m, coutp), lambda n: (n, 0, 0)))

    kernel = functools.partial(
        _conv3x3_kernel, num_phases=len(phases), taps=taps,
        relu=relu, has_residual=has_residual)

    out_flat = pl.pallas_call(
        kernel,
        out_shape=jax.ShapeDtypeStruct((N, m, coutp), jnp.float32),
        grid=(N,),
        in_specs=in_specs,
        out_specs=pl.BlockSpec((None, m, coutp), lambda n: (n, 0, 0)),
        compiler_params=pltpu.CompilerParams(
            dimension_semantics=("parallel",),
            vmem_limit_bytes=VMEM_LIMIT),
    )(*args)

    # strip the small per-row column padding and the channel padding
    return out_flat.reshape(N, ho, wph, coutp)[:, :, :wo, :cout]


def fold_bn(gamma, beta, mean, var, eps=1e-5):
    scale = gamma / jnp.sqrt(var + eps)
    bias = beta - mean * scale
    return scale, bias


# ---------------------------------------------------------------------------
# ResidualBlock forward
# ---------------------------------------------------------------------------
def residual_block_forward(x_nchw, params, stride):
    x = jnp.transpose(x_nchw, (0, 2, 3, 1))               # NCHW -> NHWC

    w1, s1, b1 = params["conv1"]
    w2, s2, b2 = params["conv2"]
    cout = w1.shape[0]

    if params["shortcut"] is not None:
        wsc, ssc, bsc = params["shortcut"]
        # conv1 and the conv shortcut share identical input patches -> one fused
        # pallas_call with weights/bias concatenated along Cout (2*Cout lanes).
        y = conv3x3_bn(x, [(w1, s1, b1), (wsc, ssc, bsc)], stride=stride, relu=False)
        h = jnp.maximum(y[..., :cout], 0.0)                # ReLU on the conv1 half
        sc = y[..., cout:]                                 # BN-only shortcut half
    else:
        h = conv3x3_bn(x, [(w1, s1, b1)], stride=stride, relu=True)
        sc = x                                             # identity shortcut

    # conv2 + BN2 + residual add + final ReLU, fused in one kernel.
    out = conv3x3_bn(h, [(w2, s2, b2)], stride=1, relu=True, residual=sc)
    return jnp.transpose(out, (0, 3, 1, 2))                # NHWC -> NCHW


# ---------------------------------------------------------------------------
# Pure-JAX f32 reference (correctness check only)
# ---------------------------------------------------------------------------
def _ref_conv3x3(x_nchw, w, stride):
    return jax.lax.conv_general_dilated(
        x_nchw, w, window_strides=(stride, stride),
        padding=((1, 1), (1, 1)),
        dimension_numbers=("NCHW", "OIHW", "NCHW"))


def _ref_bn(y, bn, eps=1e-5):
    g, b, m, v = (t[None, :, None, None] for t in bn)
    return (y - m) / jnp.sqrt(v + eps) * g + b


if __name__ == "__main__":
    key = jax.random.PRNGKey(0)
    in_ch, out_ch, stride = 4, 8, 2
    N, H, W = 2, 16, 16
    ks = jax.random.split(key, 8)

    x = jax.random.normal(ks[0], (N, in_ch, H, W), jnp.float32)

    def bn_params(k, c):
        k1, k2, k3, k4 = jax.random.split(k, 4)
        gamma = 1.0 + 0.1 * jax.random.normal(k1, (c,), jnp.float32)
        beta = 0.1 * jax.random.normal(k2, (c,), jnp.float32)
        mean = 0.1 * jax.random.normal(k3, (c,), jnp.float32)
        var = jax.random.uniform(k4, (c,), jnp.float32, minval=0.5, maxval=1.5)
        return gamma, beta, mean, var

    w1 = 0.1 * jax.random.normal(ks[1], (out_ch, in_ch, 3, 3), jnp.float32)
    w2 = 0.1 * jax.random.normal(ks[2], (out_ch, out_ch, 3, 3), jnp.float32)
    wsc = 0.1 * jax.random.normal(ks[3], (out_ch, in_ch, 3, 3), jnp.float32)
    bn1 = bn_params(ks[4], out_ch)
    bn2 = bn_params(ks[5], out_ch)
    bnsc = bn_params(ks[6], out_ch)

    params = {
        "conv1": (w1,) + fold_bn(*bn1),
        "conv2": (w2,) + fold_bn(*bn2),
        "shortcut": (wsc,) + fold_bn(*bnsc),   # stride!=1 or in!=out -> conv shortcut
    }

    fwd = jax.jit(functools.partial(residual_block_forward, stride=stride))
    out = jax.block_until_ready(fwd(x, params))

    # Reference check (f32 XLA convs). The Pallas kernel uses bf16 MXU inputs with
    # f32 accumulation, so tolerance is bf16-level rather than f32-level.
    ref_h = jnp.maximum(_ref_bn(_ref_conv3x3(x, w1, stride), bn1), 0.0)
    ref_left = _ref_bn(_ref_conv3x3(ref_h, w2, 1), bn2)
    ref_sc = _ref_bn(_ref_conv3x3(x, wsc, stride), bnsc)
    ref_out = jnp.maximum(ref_left + ref_sc, 0.0)

    assert out.shape == ref_out.shape, (out.shape, ref_out.shape)
    max_err = float(jnp.max(jnp.abs(out - ref_out)))
    assert bool(jnp.allclose(out, ref_out, atol=5e-2, rtol=5e-2)), (
        f"mismatch vs reference (max abs err {max_err})")
    print("KERNEL_OK")
</pallas_src>

<mosaic_0001>
module attributes {stable_mosaic.version = 11 : i64} {
  func.func @_conv3x3_kernel(%arg0: i32, %arg1: memref<1x82x4xbf16, #tpu.memory_space<vmem>>, %arg2: memref<1x82x4xbf16, #tpu.memory_space<vmem>>, %arg3: memref<1x82x4xbf16, #tpu.memory_space<vmem>>, %arg4: memref<1x82x4xbf16, #tpu.memory_space<vmem>>, %arg5: memref<9x4x128xbf16, #tpu.memory_space<vmem>>, %arg6: memref<1x128xf32, #tpu.memory_space<vmem>>, %arg7: memref<1x72x128xf32, #tpu.memory_space<vmem>>) attributes {dimension_semantics = [#tpu.dimension_semantics<parallel>], iteration_bounds = array<i64: 2>, scalar_prefetch = 0 : i64, scratch_operands = 0 : i64, tpu.core_type = #tpu.core_type<tc>, window_params = [{transform_indices = @transform_0, window_bounds = array<i64: 1, 82, 4>}, {transform_indices = @transform_1, window_bounds = array<i64: 1, 82, 4>}, {transform_indices = @transform_2, window_bounds = array<i64: 1, 82, 4>}, {transform_indices = @transform_3, window_bounds = array<i64: 1, 82, 4>}, {pipeline_mode = #tpu.pipeline_mode<synchronous>, transform_indices = @transform_4, window_bounds = array<i64: 9, 4, 128>}, {pipeline_mode = #tpu.pipeline_mode<synchronous>, transform_indices = @transform_5, window_bounds = array<i64: 1, 128>}, {transform_indices = @transform_6, window_bounds = array<i64: 1, 72, 128>}]} {
    %cst = arith.constant 0.000000e+00 : f32
    %0 = vector.broadcast %cst : f32 to vector<72x128xf32>
    %c0 = arith.constant 0 : index
    %c0_0 = arith.constant 0 : index
    %c0_1 = arith.constant 0 : index
    %1 = vector.load %arg1[%c0, %c0_0, %c0_1] : memref<1x82x4xbf16, #tpu.memory_space<vmem>>, vector<1x72x4xbf16>
    %2 = vector.shape_cast %1 : vector<1x72x4xbf16> to vector<72x4xbf16>
    %c0_2 = arith.constant 0 : index
    %c0_3 = arith.constant 0 : index
    %c0_4 = arith.constant 0 : index
    %3 = vector.load %arg5[%c0_2, %c0_3, %c0_4] : memref<9x4x128xbf16, #tpu.memory_space<vmem>>, vector<1x4x128xbf16>
    %4 = vector.shape_cast %3 : vector<1x4x128xbf16> to vector<4x128xbf16>
    %cst_5 = arith.constant dense<0.000000e+00> : vector<72x128xf32>
    %5 = tpu.matmul %2, %4, %cst_5 {dimension_numbers = #tpu.dot_dimension_numbers<[1], [0], [0], [1], [0, 0, 1, 1], [], []>} : vector<72x4xbf16>, vector<4x128xbf16>, vector<72x128xf32> -> vector<72x128xf32>
    %6 = arith.addf %0, %5 : vector<72x128xf32>
    %c0_6 = arith.constant 0 : index
    %c0_7 = arith.constant 0 : index
    %c0_8 = arith.constant 0 : index
    %7 = vector.load %arg2[%c0_6, %c0_7, %c0_8] : memref<1x82x4xbf16, #tpu.memory_space<vmem>>, vector<1x72x4xbf16>
    %8 = vector.shape_cast %7 : vector<1x72x4xbf16> to vector<72x4xbf16>
    %c1 = arith.constant 1 : index
    %c0_9 = arith.constant 0 : index
    %c0_10 = arith.constant 0 : index
    %9 = vector.load %arg5[%c1, %c0_9, %c0_10] : memref<9x4x128xbf16, #tpu.memory_space<vmem>>, vector<1x4x128xbf16>
    %10 = vector.shape_cast %9 : vector<1x4x128xbf16> to vector<4x128xbf16>
    %cst_11 = arith.constant dense<0.000000e+00> : vector<72x128xf32>
    %11 = tpu.matmul %8, %10, %cst_11 {dimension_numbers = #tpu.dot_dimension_numbers<[1], [0], [0], [1], [0, 0, 1, 1], [], []>} : vector<72x4xbf16>, vector<4x128xbf16>, vector<72x128xf32> -> vector<72x128xf32>
    %12 = arith.addf %6, %11 : vector<72x128xf32>
    %c0_12 = arith.constant 0 : index
    %c1_13 = arith.constant 1 : index
    %c0_14 = arith.constant 0 : index
    %13 = vector.load %arg1[%c0_12, %c1_13, %c0_14] : memref<1x82x4xbf16, #tpu.memory_space<vmem>>, vector<1x72x4xbf16>
    %14 = vector.shape_cast %13 : vector<1x72x4xbf16> to vector<72x4xbf16>
    %c2 = arith.constant 2 : index
    %c0_15 = arith.constant 0 : index
    %c0_16 = arith.constant 0 : index
    %15 = vector.load %arg5[%c2, %c0_15, %c0_16] : memref<9x4x128xbf16, #tpu.memory_space<vmem>>, vector<1x4x128xbf16>
    %16 = vector.shape_cast %15 : vector<1x4x128xbf16> to vector<4x128xbf16>
    %cst_17 = arith.constant dense<0.000000e+00> : vector<72x128xf32>
    %17 = tpu.matmul %14, %16, %cst_17 {dimension_numbers = #tpu.dot_dimension_numbers<[1], [0], [0], [1], [0, 0, 1, 1], [], []>} : vector<72x4xbf16>, vector<4x128xbf16>, vector<72x128xf32> -> vector<72x128xf32>
    %18 = arith.addf %12, %17 : vector<72x128xf32>
    %c0_18 = arith.constant 0 : index
    %c0_19 = arith.constant 0 : index
    %c0_20 = arith.constant 0 : index
    %19 = vector.load %arg3[%c0_18, %c0_19, %c0_20] : memref<1x82x4xbf16, #tpu.memory_space<vmem>>, vector<1x72x4xbf16>
    %20 = vector.shape_cast %19 : vector<1x72x4xbf16> to vector<72x4xbf16>
    %c3 = arith.constant 3 : index
    %c0_21 = arith.constant 0 : index
    %c0_22 = arith.constant 0 : index
    %21 = vector.load %arg5[%c3, %c0_21, %c0_22] : memref<9x4x128xbf16, #tpu.memory_space<vmem>>, vector<1x4x128xbf16>
    %22 = vector.shape_cast %21 : vector<1x4x128xbf16> to vector<4x128xbf16>
    %cst_23 = arith.constant dense<0.000000e+00> : vector<72x128xf32>
    %23 = tpu.matmul %20, %22, %cst_23 {dimension_numbers = #tpu.dot_dimension_numbers<[1], [0], [0], [1], [0, 0, 1, 1], [], []>} : vector<72x4xbf16>, vector<4x128xbf16>, vector<72x128xf32> -> vector<72x128xf32>
    %24 = arith.addf %18, %23 : vector<72x128xf32>
    %c0_24 = arith.constant 0 : index
    %c0_25 = arith.constant 0 : index
    %c0_26 = arith.constant 0 : index
    %25 = vector.load %arg4[%c0_24, %c0_25, %c0_26] : memref<1x82x4xbf16, #tpu.memory_space<vmem>>, vector<1x72x4xbf16>
    %26 = vector.shape_cast %25 : vector<1x72x4xbf16> to vector<72x4xbf16>
    %c4 = arith.constant 4 : index
    %c0_27 = arith.constant 0 : index
    %c0_28 = arith.constant 0 : index
    %27 = vector.load %arg5[%c4, %c0_27, %c0_28] : memref<9x4x128xbf16, #tpu.memory_space<vmem>>, vector<1x4x128xbf16>
    %28 = vector.shape_cast %27 : vector<1x4x128xbf16> to vector<4x128xbf16>
    %cst_29 = arith.constant dense<0.000000e+00> : vector<72x128xf32>
    %29 = tpu.matmul %26, %28, %cst_29 {dimension_numbers = #tpu.dot_dimension_numbers<[1], [0], [0], [1], [0, 0, 1, 1], [], []>} : vector<72x4xbf16>, vector<4x128xbf16>, vector<72x128xf32> -> vector<72x128xf32>
    %30 = arith.addf %24, %29 : vector<72x128xf32>
    %c0_30 = arith.constant 0 : index
    %c1_31 = arith.constant 1 : index
    %c0_32 = arith.constant 0 : index
    %31 = vector.load %arg3[%c0_30, %c1_31, %c0_32] : memref<1x82x4xbf16, #tpu.memory_space<vmem>>, vector<1x72x4xbf16>
    %32 = vector.shape_cast %31 : vector<1x72x4xbf16> to vector<72x4xbf16>
    %c5 = arith.constant 5 : index
    %c0_33 = arith.constant 0 : index
    %c0_34 = arith.constant 0 : index
    %33 = vector.load %arg5[%c5, %c0_33, %c0_34] : memref<9x4x128xbf16, #tpu.memory_space<vmem>>, vector<1x4x128xbf16>
    %34 = vector.shape_cast %33 : vector<1x4x128xbf16> to vector<4x128xbf16>
    %cst_35 = arith.constant dense<0.000000e+00> : vector<72x128xf32>
    %35 = tpu.matmul %32, %34, %cst_35 {dimension_numbers = #tpu.dot_dimension_numbers<[1], [0], [0], [1], [0, 0, 1, 1], [], []>} : vector<72x4xbf16>, vector<4x128xbf16>, vector<72x128xf32> -> vector<72x128xf32>
    %36 = arith.addf %30, %35 : vector<72x128xf32>
    %c0_36 = arith.constant 0 : index
    %c9 = arith.constant 9 : index
    %c0_37 = arith.constant 0 : index
    %37 = vector.load %arg1[%c0_36, %c9, %c0_37] : memref<1x82x4xbf16, #tpu.memory_space<vmem>>, vector<1x72x4xbf16>
    %38 = vector.shape_cast %37 : vector<1x72x4xbf16> to vector<72x4xbf16>
    %c6 = arith.constant 6 : index
    %c0_38 = arith.constant 0 : index
    %c0_39 = arith.constant 0 : index
    %39 = vector.load %arg5[%c6, %c0_38, %c0_39] : memref<9x4x128xbf16, #tpu.memory_space<vmem>>, vector<1x4x128xbf16>
    %40 = vector.shape_cast %39 : vector<1x4x128xbf16> to vector<4x128xbf16>
    %cst_40 = arith.constant dense<0.000000e+00> : vector<72x128xf32>
    %41 = tpu.matmul %38, %40, %cst_40 {dimension_numbers = #tpu.dot_dimension_numbers<[1], [0], [0], [1], [0, 0, 1, 1], [], []>} : vector<72x4xbf16>, vector<4x128xbf16>, vector<72x128xf32> -> vector<72x128xf32>
    %42 = arith.addf %36, %41 : vector<72x128xf32>
    %c0_41 = arith.constant 0 : index
    %c9_42 = arith.constant 9 : index
    %c0_43 = arith.constant 0 : index
    %43 = vector.load %arg2[%c0_41, %c9_42, %c0_43] : memref<1x82x4xbf16, #tpu.memory_space<vmem>>, vector<1x72x4xbf16>
    %44 = vector.shape_cast %43 : vector<1x72x4xbf16> to vector<72x4xbf16>
    %c7 = arith.constant 7 : index
    %c0_44 = arith.constant 0 : index
    %c0_45 = arith.constant 0 : index
    %45 = vector.load %arg5[%c7, %c0_44, %c0_45] : memref<9x4x128xbf16, #tpu.memory_space<vmem>>, vector<1x4x128xbf16>
    %46 = vector.shape_cast %45 : vector<1x4x128xbf16> to vector<4x128xbf16>
    %cst_46 = arith.constant dense<0.000000e+00> : vector<72x128xf32>
    %47 = tpu.matmul %44, %46, %cst_46 {dimension_numbers = #tpu.dot_dimension_numbers<[1], [0], [0], [1], [0, 0, 1, 1], [], []>} : vector<72x4xbf16>, vector<4x128xbf16>, vector<72x128xf32> -> vector<72x128xf32>
    %48 = arith.addf %42, %47 : vector<72x128xf32>
    %c0_47 = arith.constant 0 : index
    %c10 = arith.constant 10 : index
    %c0_48 = arith.constant 0 : index
    %49 = vector.load %arg1[%c0_47, %c10, %c0_48] : memref<1x82x4xbf16, #tpu.memory_space<vmem>>, vector<1x72x4xbf16>
    %50 = vector.shape_cast %49 : vector<1x72x4xbf16> to vector<72x4xbf16>
    %c8 = arith.constant 8 : index
    %c0_49 = arith.constant 0 : index
    %c0_50 = arith.constant 0 : index
    %51 = vector.load %arg5[%c8, %c0_49, %c0_50] : memref<9x4x128xbf16, #tpu.memory_space<vmem>>, vector<1x4x128xbf16>
    %52 = vector.shape_cast %51 : vector<1x4x128xbf16> to vector<4x128xbf16>
    %cst_51 = arith.constant dense<0.000000e+00> : vector<72x128xf32>
    %53 = tpu.matmul %50, %52, %cst_51 {dimension_numbers = #tpu.dot_dimension_numbers<[1], [0], [0], [1], [0, 0, 1, 1], [], []>} : vector<72x4xbf16>, vector<4x128xbf16>, vector<72x128xf32> -> vector<72x128xf32>
    %54 = arith.addf %48, %53 : vector<72x128xf32>
    %c0_52 = arith.constant 0 : index
    %c0_53 = arith.constant 0 : index
    %55 = vector.load %arg6[%c0_52, %c0_53] : memref<1x128xf32, #tpu.memory_space<vmem>>, vector<1x128xf32>
    %56 = vector.broadcast %55 : vector<1x128xf32> to vector<72x128xf32>
    %57 = arith.addf %54, %56 : vector<72x128xf32>
    %c0_54 = arith.constant 0 : index
    %c0_55 = arith.constant 0 : index
    %c0_56 = arith.constant 0 : index
    %58 = vector.load %arg7[%c0_54, %c0_55, %c0_56] : memref<1x72x128xf32, #tpu.memory_space<vmem>>, vector<1x72x128xf32>
    %59 = vector.shape_cast %58 : vector<1x72x128xf32> to vector<72x128xf32>
    %60 = vector.shape_cast %57 : vector<72x128xf32> to vector<1x72x128xf32>
    tpu.vector_store %arg7[%c0_54, %c0_55, %c0_56], %60 {strides = array<i32>} : memref<1x72x128xf32, #tpu.memory_space<vmem>>, vector<1x72x128xf32>,
    return
  }
  func.func @transform_0(%arg0: i32) -> (i32, i32, i32) {
    %c0_i32 = arith.constant 0 : i32
    %c0_i32_0 = arith.constant 0 : i32
    %c0_i32_1 = arith.constant 0 : i32
    return %arg0, %c0_i32, %c0_i32_0 : i32, i32, i32
  }
  func.func @transform_1(%arg0: i32) -> (i32, i32, i32) {
    %c0_i32 = arith.constant 0 : i32
    %c0_i32_0 = arith.constant 0 : i32
    %c0_i32_1 = arith.constant 0 : i32
    return %arg0, %c0_i32, %c0_i32_0 : i32, i32, i32
  }
  func.func @transform_2(%arg0: i32) -> (i32, i32, i32) {
    %c0_i32 = arith.constant 0 : i32
    %c0_i32_0 = arith.constant 0 : i32
    %c0_i32_1 = arith.constant 0 : i32
    return %arg0, %c0_i32, %c0_i32_0 : i32, i32, i32
  }
  func.func @transform_3(%arg0: i32) -> (i32, i32, i32) {
    %c0_i32 = arith.constant 0 : i32
    %c0_i32_0 = arith.constant 0 : i32
    %c0_i32_1 = arith.constant 0 : i32
    return %arg0, %c0_i32, %c0_i32_0 : i32, i32, i32
  }
  func.func @transform_4(%arg0: i32) -> (i32, i32, i32) {
    %c0_i32 = arith.constant 0 : i32
    %c0_i32_0 = arith.constant 0 : i32
    %c0_i32_1 = arith.constant 0 : i32
    %c0_i32_2 = arith.constant 0 : i32
    return %c0_i32, %c0_i32_0, %c0_i32_1 : i32, i32, i32
  }
  func.func @transform_5(%arg0: i32) -> (i32, i32) {
    %c0_i32 = arith.constant 0 : i32
    %c0_i32_0 = arith.constant 0 : i32
    %c0_i32_1 = arith.constant 0 : i32
    return %c0_i32, %c0_i32_0 : i32, i32
  }
  func.func @transform_6(%arg0: i32) -> (i32, i32, i32) {
    %c0_i32 = arith.constant 0 : i32
    %c0_i32_0 = arith.constant 0 : i32
    %c0_i32_1 = arith.constant 0 : i32
    return %arg0, %c0_i32, %c0_i32_0 : i32, i32, i32
  }
}

module attributes {stable_mosaic.version = 11 : i64} {
  func.func @_conv3x3_kernel(%arg0: i32, %arg1: memref<1x102x8xbf16, #tpu.memory_space<vmem>>, %arg2: memref<9x8x128xbf16, #tpu.memory_space<vmem>>, %arg3: memref<1x128xf32, #tpu.memory_space<vmem>>, %arg4: memref<1x80x128xf32, #tpu.memory_space<vmem>>, %arg5: memref<1x80x128xf32, #tpu.memory_space<vmem>>) attributes {dimension_semantics = [#tpu.dimension_semantics<parallel>], iteration_bounds = array<i64: 2>, scalar_prefetch = 0 : i64, scratch_operands = 0 : i64, tpu.core_type = #tpu.core_type<tc>, window_params = [{transform_indices = @transform_0, window_bounds = array<i64: 1, 102, 8>}, {pipeline_mode = #tpu.pipeline_mode<synchronous>, transform_indices = @transform_1, window_bounds = array<i64: 9, 8, 128>}, {pipeline_mode = #tpu.pipeline_mode<synchronous>, transform_indices = @transform_2, window_bounds = array<i64: 1, 128>}, {transform_indices = @transform_3, window_bounds = array<i64: 1, 80, 128>}, {transform_indices = @transform_4, window_bounds = array<i64: 1, 80, 128>}]} {
    %cst = arith.constant 0.000000e+00 : f32
    %0 = vector.broadcast %cst : f32 to vector<80x128xf32>
    %c0 = arith.constant 0 : index
    %c0_0 = arith.constant 0 : index
    %c0_1 = arith.constant 0 : index
    %1 = vector.load %arg1[%c0, %c0_0, %c0_1] : memref<1x102x8xbf16, #tpu.memory_space<vmem>>, vector<1x80x8xbf16>
    %2 = vector.shape_cast %1 : vector<1x80x8xbf16> to vector<80x8xbf16>
    %c0_2 = arith.constant 0 : index
    %c0_3 = arith.constant 0 : index
    %c0_4 = arith.constant 0 : index
    %3 = vector.load %arg2[%c0_2, %c0_3, %c0_4] : memref<9x8x128xbf16, #tpu.memory_space<vmem>>, vector<1x8x128xbf16>
    %4 = vector.shape_cast %3 : vector<1x8x128xbf16> to vector<8x128xbf16>
    %cst_5 = arith.constant dense<0.000000e+00> : vector<80x128xf32>
    %5 = tpu.matmul %2, %4, %cst_5 {dimension_numbers = #tpu.dot_dimension_numbers<[1], [0], [0], [1], [0, 0, 1, 1], [], []>} : vector<80x8xbf16>, vector<8x128xbf16>, vector<80x128xf32> -> vector<80x128xf32>
    %6 = arith.addf %0, %5 : vector<80x128xf32>
    %c0_6 = arith.constant 0 : index
    %c1 = arith.constant 1 : index
    %c0_7 = arith.constant 0 : index
    %7 = vector.load %arg1[%c0_6, %c1, %c0_7] : memref<1x102x8xbf16, #tpu.memory_space<vmem>>, vector<1x80x8xbf16>
    %8 = vector.shape_cast %7 : vector<1x80x8xbf16> to vector<80x8xbf16>
    %c1_8 = arith.constant 1 : index
    %c0_9 = arith.constant 0 : index
    %c0_10 = arith.constant 0 : index
    %9 = vector.load %arg2[%c1_8, %c0_9, %c0_10] : memref<9x8x128xbf16, #tpu.memory_space<vmem>>, vector<1x8x128xbf16>
    %10 = vector.shape_cast %9 : vector<1x8x128xbf16> to vector<8x128xbf16>
    %cst_11 = arith.constant dense<0.000000e+00> : vector<80x128xf32>
    %11 = tpu.matmul %8, %10, %cst_11 {dimension_numbers = #tpu.dot_dimension_numbers<[1], [0], [0], [1], [0, 0, 1, 1], [], []>} : vector<80x8xbf16>, vector<8x128xbf16>, vector<80x128xf32> -> vector<80x128xf32>
    %12 = arith.addf %6, %11 : vector<80x128xf32>
    %c0_12 = arith.constant 0 : index
    %c2 = arith.constant 2 : index
    %c0_13 = arith.constant 0 : index
    %13 = vector.load %arg1[%c0_12, %c2, %c0_13] : memref<1x102x8xbf16, #tpu.memory_space<vmem>>, vector<1x80x8xbf16>
    %14 = vector.shape_cast %13 : vector<1x80x8xbf16> to vector<80x8xbf16>
    %c2_14 = arith.constant 2 : index
    %c0_15 = arith.constant 0 : index
    %c0_16 = arith.constant 0 : index
    %15 = vector.load %arg2[%c2_14, %c0_15, %c0_16] : memref<9x8x128xbf16, #tpu.memory_space<vmem>>, vector<1x8x128xbf16>
    %16 = vector.shape_cast %15 : vector<1x8x128xbf16> to vector<8x128xbf16>
    %cst_17 = arith.constant dense<0.000000e+00> : vector<80x128xf32>
    %17 = tpu.matmul %14, %16, %cst_17 {dimension_numbers = #tpu.dot_dimension_numbers<[1], [0], [0], [1], [0, 0, 1, 1], [], []>} : vector<80x8xbf16>, vector<8x128xbf16>, vector<80x128xf32> -> vector<80x128xf32>
    %18 = arith.addf %12, %17 : vector<80x128xf32>
    %c0_18 = arith.constant 0 : index
    %c10 = arith.constant 10 : index
    %c0_19 = arith.constant 0 : index
    %19 = vector.load %arg1[%c0_18, %c10, %c0_19] : memref<1x102x8xbf16, #tpu.memory_space<vmem>>, vector<1x80x8xbf16>
    %20 = vector.shape_cast %19 : vector<1x80x8xbf16> to vector<80x8xbf16>
    %c3 = arith.constant 3 : index
    %c0_20 = arith.constant 0 : index
    %c0_21 = arith.constant 0 : index
    %21 = vector.load %arg2[%c3, %c0_20, %c0_21] : memref<9x8x128xbf16, #tpu.memory_space<vmem>>, vector<1x8x128xbf16>
    %22 = vector.shape_cast %21 : vector<1x8x128xbf16> to vector<8x128xbf16>
    %cst_22 = arith.constant dense<0.000000e+00> : vector<80x128xf32>
    %23 = tpu.matmul %20, %22, %cst_22 {dimension_numbers = #tpu.dot_dimension_numbers<[1], [0], [0], [1], [0, 0, 1, 1], [], []>} : vector<80x8xbf16>, vector<8x128xbf16>, vector<80x128xf32> -> vector<80x128xf32>
    %24 = arith.addf %18, %23 : vector<80x128xf32>
    %c0_23 = arith.constant 0 : index
    %c11 = arith.constant 11 : index
    %c0_24 = arith.constant 0 : index
    %25 = vector.load %arg1[%c0_23, %c11, %c0_24] : memref<1x102x8xbf16, #tpu.memory_space<vmem>>, vector<1x80x8xbf16>
    %26 = vector.shape_cast %25 : vector<1x80x8xbf16> to vector<80x8xbf16>
    %c4 = arith.constant 4 : index
    %c0_25 = arith.constant 0 : index
    %c0_26 = arith.constant 0 : index
    %27 = vector.load %arg2[%c4, %c0_25, %c0_26] : memref<9x8x128xbf16, #tpu.memory_space<vmem>>, vector<1x8x128xbf16>
    %28 = vector.shape_cast %27 : vector<1x8x128xbf16> to vector<8x128xbf16>
    %cst_27 = arith.constant dense<0.000000e+00> : vector<80x128xf32>
    %29 = tpu.matmul %26, %28, %cst_27 {dimension_numbers = #tpu.dot_dimension_numbers<[1], [0], [0], [1], [0, 0, 1, 1], [], []>} : vector<80x8xbf16>, vector<8x128xbf16>, vector<80x128xf32> -> vector<80x128xf32>
    %30 = arith.addf %24, %29 : vector<80x128xf32>
    %c0_28 = arith.constant 0 : index
    %c12 = arith.constant 12 : index
    %c0_29 = arith.constant 0 : index
    %31 = vector.load %arg1[%c0_28, %c12, %c0_29] : memref<1x102x8xbf16, #tpu.memory_space<vmem>>, vector<1x80x8xbf16>
    %32 = vector.shape_cast %31 : vector<1x80x8xbf16> to vector<80x8xbf16>
    %c5 = arith.constant 5 : index
    %c0_30 = arith.constant 0 : index
    %c0_31 = arith.constant 0 : index
    %33 = vector.load %arg2[%c5, %c0_30, %c0_31] : memref<9x8x128xbf16, #tpu.memory_space<vmem>>, vector<1x8x128xbf16>
    %34 = vector.shape_cast %33 : vector<1x8x128xbf16> to vector<8x128xbf16>
    %cst_32 = arith.constant dense<0.000000e+00> : vector<80x128xf32>
    %35 = tpu.matmul %32, %34, %cst_32 {dimension_numbers = #tpu.dot_dimension_numbers<[1], [0], [0], [1], [0, 0, 1, 1], [], []>} : vector<80x8xbf16>, vector<8x128xbf16>, vector<80x128xf32> -> vector<80x128xf32>
    %36 = arith.addf %30, %35 : vector<80x128xf32>
    %c0_33 = arith.constant 0 : index
    %c20 = arith.constant 20 : index
    %c0_34 = arith.constant 0 : index
    %37 = vector.load %arg1[%c0_33, %c20, %c0_34] : memref<1x102x8xbf16, #tpu.memory_space<vmem>>, vector<1x80x8xbf16>
    %38 = vector.shape_cast %37 : vector<1x80x8xbf16> to vector<80x8xbf16>
    %c6 = arith.constant 6 : index
    %c0_35 = arith.constant 0 : index
    %c0_36 = arith.constant 0 : index
    %39 = vector.load %arg2[%c6, %c0_35, %c0_36] : memref<9x8x128xbf16, #tpu.memory_space<vmem>>, vector<1x8x128xbf16>
    %40 = vector.shape_cast %39 : vector<1x8x128xbf16> to vector<8x128xbf16>
    %cst_37 = arith.constant dense<0.000000e+00> : vector<80x128xf32>
    %41 = tpu.matmul %38, %40, %cst_37 {dimension_numbers = #tpu.dot_dimension_numbers<[1], [0], [0], [1], [0, 0, 1, 1], [], []>} : vector<80x8xbf16>, vector<8x128xbf16>, vector<80x128xf32> -> vector<80x128xf32>
    %42 = arith.addf %36, %41 : vector<80x128xf32>
    %c0_38 = arith.constant 0 : index
    %c21 = arith.constant 21 : index
    %c0_39 = arith.constant 0 : index
    %43 = vector.load %arg1[%c0_38, %c21, %c0_39] : memref<1x102x8xbf16, #tpu.memory_space<vmem>>, vector<1x80x8xbf16>
    %44 = vector.shape_cast %43 : vector<1x80x8xbf16> to vector<80x8xbf16>
    %c7 = arith.constant 7 : index
    %c0_40 = arith.constant 0 : index
    %c0_41 = arith.constant 0 : index
    %45 = vector.load %arg2[%c7, %c0_40, %c0_41] : memref<9x8x128xbf16, #tpu.memory_space<vmem>>, vector<1x8x128xbf16>
    %46 = vector.shape_cast %45 : vector<1x8x128xbf16> to vector<8x128xbf16>
    %cst_42 = arith.constant dense<0.000000e+00> : vector<80x128xf32>
    %47 = tpu.matmul %44, %46, %cst_42 {dimension_numbers = #tpu.dot_dimension_numbers<[1], [0], [0], [1], [0, 0, 1, 1], [], []>} : vector<80x8xbf16>, vector<8x128xbf16>, vector<80x128xf32> -> vector<80x128xf32>
    %48 = arith.addf %42, %47 : vector<80x128xf32>
    %c0_43 = arith.constant 0 : index
    %c22 = arith.constant 22 : index
    %c0_44 = arith.constant 0 : index
    %49 = vector.load %arg1[%c0_43, %c22, %c0_44] : memref<1x102x8xbf16, #tpu.memory_space<vmem>>, vector<1x80x8xbf16>
    %50 = vector.shape_cast %49 : vector<1x80x8xbf16> to vector<80x8xbf16>
    %c8 = arith.constant 8 : index
    %c0_45 = arith.constant 0 : index
    %c0_46 = arith.constant 0 : index
    %51 = vector.load %arg2[%c8, %c0_45, %c0_46] : memref<9x8x128xbf16, #tpu.memory_space<vmem>>, vector<1x8x128xbf16>
    %52 = vector.shape_cast %51 : vector<1x8x128xbf16> to vector<8x128xbf16>
    %cst_47 = arith.constant dense<0.000000e+00> : vector<80x128xf32>
    %53 = tpu.matmul %50, %52, %cst_47 {dimension_numbers = #tpu.dot_dimension_numbers<[1], [0], [0], [1], [0, 0, 1, 1], [], []>} : vector<80x8xbf16>, vector<8x128xbf16>, vector<80x128xf32> -> vector<80x128xf32>
    %54 = arith.addf %48, %53 : vector<80x128xf32>
    %c0_48 = arith.constant 0 : index
    %c0_49 = arith.constant 0 : index
    %55 = vector.load %arg3[%c0_48, %c0_49] : memref<1x128xf32, #tpu.memory_space<vmem>>, vector<1x128xf32>
    %56 = vector.broadcast %55 : vector<1x128xf32> to vector<80x128xf32>
    %57 = arith.addf %54, %56 : vector<80x128xf32>
    %c0_50 = arith.constant 0 : index
    %c0_51 = arith.constant 0 : index
    %c0_52 = arith.constant 0 : index
    %58 = vector.load %arg4[%c0_50, %c0_51, %c0_52] : memref<1x80x128xf32, #tpu.memory_space<vmem>>, vector<1x80x128xf32>
    %59 = vector.shape_cast %58 : vector<1x80x128xf32> to vector<80x128xf32>
    %60 = arith.addf %57, %59 : vector<80x128xf32>
    %cst_53 = arith.constant 0.000000e+00 : f32
    %61 = vector.broadcast %cst_53 : f32 to vector<80x128xf32>
    %62 = arith.maximumf %60, %61 : vector<80x128xf32>
    %c0_54 = arith.constant 0 : index
    %c0_55 = arith.constant 0 : index
    %c0_56 = arith.constant 0 : index
    %63 = vector.load %arg5[%c0_54, %c0_55, %c0_56] : memref<1x80x128xf32, #tpu.memory_space<vmem>>, vector<1x80x128xf32>
    %64 = vector.shape_cast %63 : vector<1x80x128xf32> to vector<80x128xf32>
    %65 = vector.shape_cast %62 : vector<80x128xf32> to vector<1x80x128xf32>
    tpu.vector_store %arg5[%c0_54, %c0_55, %c0_56], %65 {strides = array<i32>} : memref<1x80x128xf32, #tpu.memory_space<vmem>>, vector<1x80x128xf32>,
    return
  }
  func.func @transform_0(%arg0: i32) -> (i32, i32, i32) {
    %c0_i32 = arith.constant 0 : i32
    %c0_i32_0 = arith.constant 0 : i32
    %c0_i32_1 = arith.constant 0 : i32
    return %arg0, %c0_i32, %c0_i32_0 : i32, i32, i32
  }
  func.func @transform_1(%arg0: i32) -> (i32, i32, i32) {
    %c0_i32 = arith.constant 0 : i32
    %c0_i32_0 = arith.constant 0 : i32
    %c0_i32_1 = arith.constant 0 : i32
    %c0_i32_2 = arith.constant 0 : i32
    return %c0_i32, %c0_i32_0, %c0_i32_1 : i32, i32, i32
  }
  func.func @transform_2(%arg0: i32) -> (i32, i32) {
    %c0_i32 = arith.constant 0 : i32
    %c0_i32_0 = arith.constant 0 : i32
    %c0_i32_1 = arith.constant 0 : i32
    return %c0_i32, %c0_i32_0 : i32, i32
  }
  func.func @transform_3(%arg0: i32) -> (i32, i32, i32) {
    %c0_i32 = arith.constant 0 : i32
    %c0_i32_0 = arith.constant 0 : i32
    %c0_i32_1 = arith.constant 0 : i32
    return %arg0, %c0_i32, %c0_i32_0 : i32, i32, i32
  }
  func.func @transform_4(%arg0: i32) -> (i32, i32, i32) {
    %c0_i32 = arith.constant 0 : i32
    %c0_i32_0 = arith.constant 0 : i32
    %c0_i32_1 = arith.constant 0 : i32
    return %arg0, %c0_i32, %c0_i32_0 : i32, i32, i32
  }
}

</mosaic_0001>

<llo_original>
// kernel: residual_block_forward.2
$region0: #{residual_block_forward.2}
  #allocation0 [shape = 'u32[]', space=smem, size = 0x4, offset = 0x4, fixed_abs, tag = 'smem constant byte address 0x4 - core index']
  #allocation1 [shape = 'u32[144,128]{1,0:T(1,128)}', space=vmem, size = 0x12000, scoped, tag = 'internal scratch']
  %s0 = inlined_call_operand.vmem [shape: bf16[2,82,4], index: 0, kind: input, shape index: {}]
  %s1 = inlined_call_operand.vmem [shape: bf16[2,82,4], index: 1, kind: input, shape index: {}]
  %s2 = inlined_call_operand.vmem [shape: bf16[2,82,4], index: 2, kind: input, shape index: {}]
  %s3 = inlined_call_operand.vmem [shape: bf16[2,82,4], index: 3, kind: input, shape index: {}]
  %s4 = inlined_call_operand.vmem [shape: bf16[9,4,128], index: 4, kind: input, shape index: {}]
  %s5 = inlined_call_operand.vmem [shape: f32[1,128], index: 5, kind: input, shape index: {}]
  %s6 = inlined_call_operand.vmem [shape: f32[2,72,128], index: 6, kind: output, shape index: {}]
  %s7 = sld [smem:[#allocation0]]
  $region57: #{residual_block_forward.2} parent=0
    _
  %s9 = ssub.s32 1, %s7
  %s10 = scalar_select 0, %s9, %s7
  loop: start=0, step=1, limit=4
  $region2: #{residual_block_forward.2} parent=0 // loop_pre_header
    _
  $region3: #{residual_block_forward.2} parent=0 // loop_header
    %s12 = sphi 0, %s16
    %p13 = scmp.ge.s32.totalorder %s12, 4
    %s22 = sphi 0, %s24
    %s25 = sphi 0, %s22
    %s26 = sphi 0, %s25
    %s42 = sphi 0, %s26
    %s48 = sphi 0, %s50
    %s51 = sphi 0, %s48
    %s52 = sphi 0, %s51
    %s68 = sphi 0, %s52
    %s74 = sphi 0, %s76
    %s77 = sphi 0, %s74
    %s78 = sphi 0, %s77
    %s94 = sphi 0, %s78
    %s100 = sphi 0, %s102
    %s103 = sphi 0, %s100
    %s104 = sphi 0, %s103
    %s120 = sphi 0, %s104
    %s124 = sphi 0, %s124
    %s126 = sphi 0, %s124
    %s127 = sphi 0, %s126
    %s141 = sphi 0, %s127
    %s145 = sphi 0, %s145
    %s147 = sphi 0, %s145
    %s148 = sphi 0, %s147
    %s162 = sphi 0, %s148
    %s168 = sphi 0, %s170
    %s171 = sphi 0, %s168
    %s172 = sphi 0, %s171
    %s188 = sphi 0, %s172
  $region4: #{residual_block_forward.2} parent=0 // loop_header_branch
    %15 = sbr.rel (%p13) target = $region8
  $region5: #{residual_block_forward.2} parent=0 // loop_body
    %s17 = ssub.s32 %s12, 1
    %s18 = ssub.s32 %s12, 2
    %s19 = sadd.s32 %s12, 1
    %s20 = ssub.s32 %s12, %s19
    %p21 = scmp.eq.s32.totalorder %s20, 0
    %s23 = sadd.s32 %s22, 1
    %s24 = scalar_select %p21, %s22, %s23
    %p27 = pneg %p21
    %p28 = scmp.eq.s32.totalorder %s12, 1
    %p29 = por %p27, %p28
    %p30 = scmp.ne.s32.totalorder %s22, %s25
    %p31 = scmp.eq.s32.totalorder %s12, 0
    %p32 = por %p30, %p31
    %p33 = scmp.ne.s32.totalorder %s22, %s25
    %p34 = scmp.eq.s32.totalorder %s17, 1
    %p35 = por %p33, %p34
    %p36 = scmp.ne.s32.totalorder %s25, %s26
    %p37 = scmp.eq.s32.totalorder %s17, 0
    %p38 = por %p36, %p37
    %p39 = scmp.ne.s32.totalorder %s25, %s26
    %p40 = scmp.eq.s32.totalorder %s18, 1
    %p41 = por %p39, %p40
    %p43 = scmp.ne.s32.totalorder %s26, %s42
    %p44 = scmp.eq.s32.totalorder %s18, 0
    %p45 = por %p43, %p44
    %s46 = ssub.s32 %s12, %s19
    %p47 = scmp.eq.s32.totalorder %s46, 0
    %s49 = sadd.s32 %s48, 1
    %s50 = scalar_select %p47, %s48, %s49
    %p53 = pneg %p47
    %p54 = scmp.eq.s32.totalorder %s12, 1
    %p55 = por %p53, %p54
    %p56 = scmp.ne.s32.totalorder %s48, %s51
    %p57 = scmp.eq.s32.totalorder %s12, 0
    %p58 = por %p56, %p57
    %p59 = scmp.ne.s32.totalorder %s48, %s51
    %p60 = scmp.eq.s32.totalorder %s17, 1
    %p61 = por %p59, %p60
    %p62 = scmp.ne.s32.totalorder %s51, %s52
    %p63 = scmp.eq.s32.totalorder %s17, 0
    %p64 = por %p62, %p63
    %p65 = scmp.ne.s32.totalorder %s51, %s52
    %p66 = scmp.eq.s32.totalorder %s18, 1
    %p67 = por %p65, %p66
    %p69 = scmp.ne.s32.totalorder %s52, %s68
    %p70 = scmp.eq.s32.totalorder %s18, 0
    %p71 = por %p69, %p70
    %s72 = ssub.s32 %s12, %s19
    %p73 = scmp.eq.s32.totalorder %s72, 0
    %s75 = sadd.s32 %s74, 1
    %s76 = scalar_select %p73, %s74, %s75
    %p79 = pneg %p73
    %p80 = scmp.eq.s32.totalorder %s12, 1
    %p81 = por %p79, %p80
    %p82 = scmp.ne.s32.totalorder %s74, %s77
    %p83 = scmp.eq.s32.totalorder %s12, 0
    %p84 = por %p82, %p83
    %p85 = scmp.ne.s32.totalorder %s74, %s77
    %p86 = scmp.eq.s32.totalorder %s17, 1
    %p87 = por %p85, %p86
    %p88 = scmp.ne.s32.totalorder %s77, %s78
    %p89 = scmp.eq.s32.totalorder %s17, 0
    %p90 = por %p88, %p89
    %p91 = scmp.ne.s32.totalorder %s77, %s78
    %p92 = scmp.eq.s32.totalorder %s18, 1
    %p93 = por %p91, %p92
    %p95 = scmp.ne.s32.totalorder %s78, %s94
    %p96 = scmp.eq.s32.totalorder %s18, 0
    %p97 = por %p95, %p96
    %s98 = ssub.s32 %s12, %s19
    %p99 = scmp.eq.s32.totalorder %s98, 0
    %s101 = sadd.s32 %s100, 1
    %s102 = scalar_select %p99, %s100, %s101
    %p105 = pneg %p99
    %p106 = scmp.eq.s32.totalorder %s12, 1
    %p107 = por %p105, %p106
    %p108 = scmp.ne.s32.totalorder %s100, %s103
    %p109 = scmp.eq.s32.totalorder %s12, 0
    %p110 = por %p108, %p109
    %p111 = scmp.ne.s32.totalorder %s100, %s103
    %p112 = scmp.eq.s32.totalorder %s17, 1
    %p113 = por %p111, %p112
    %p114 = scmp.ne.s32.totalorder %s103, %s104
    %p115 = scmp.eq.s32.totalorder %s17, 0
    %p116 = por %p114, %p115
    %p117 = scmp.ne.s32.totalorder %s103, %s104
    %p118 = scmp.eq.s32.totalorder %s18, 1
    %p119 = por %p117, %p118
    %p121 = scmp.ne.s32.totalorder %s104, %s120
    %p122 = scmp.eq.s32.totalorder %s18, 0
    %p123 = por %p121, %p122
    %s125 = sadd.s32 %s124, 1
    %p128 = scmp.eq.s32.totalorder %s12, 1
    %p129 = scmp.ne.s32.totalorder %s124, %s126
    %p130 = scmp.eq.s32.totalorder %s12, 0
    %p131 = por %p129, %p130
    %p132 = scmp.ne.s32.totalorder %s124, %s126
    %p133 = scmp.eq.s32.totalorder %s17, 1
    %p134 = por %p132, %p133
    %p135 = scmp.ne.s32.totalorder %s126, %s127
    %p136 = scmp.eq.s32.totalorder %s17, 0
    %p137 = por %p135, %p136
    %p138 = scmp.ne.s32.totalorder %s126, %s127
    %p139 = scmp.eq.s32.totalorder %s18, 1
    %p140 = por %p138, %p139
    %p142 = scmp.ne.s32.totalorder %s127, %s141
    %p143 = scmp.eq.s32.totalorder %s18, 0
    %p144 = por %p142, %p143
    %s146 = sadd.s32 %s145, 1
    %p149 = scmp.eq.s32.totalorder %s12, 1
    %p150 = scmp.ne.s32.totalorder %s145, %s147
    %p151 = scmp.eq.s32.totalorder %s12, 0
    %p152 = por %p150, %p151
    %p153 = scmp.ne.s32.totalorder %s145, %s147
    %p154 = scmp.eq.s32.totalorder %s17, 1
    %p155 = por %p153, %p154
    %p156 = scmp.ne.s32.totalorder %s147, %s148
    %p157 = scmp.eq.s32.totalorder %s17, 0
    %p158 = por %p156, %p157
    %p159 = scmp.ne.s32.totalorder %s147, %s148
    %p160 = scmp.eq.s32.totalorder %s18, 1
    %p161 = por %p159, %p160
    %p163 = scmp.ne.s32.totalorder %s148, %s162
    %p164 = scmp.eq.s32.totalorder %s18, 0
    %p165 = por %p163, %p164
    %s166 = ssub.s32 %s12, %s19
    %p167 = scmp.eq.s32.totalorder %s166, 0
    %s169 = sadd.s32 %s168, 1
    %s170 = scalar_select %p167, %s168, %s169
    %p173 = pneg %p167
    %p174 = scmp.eq.s32.totalorder %s12, 1
    %p175 = por %p173, %p174
    %p176 = scmp.ne.s32.totalorder %s168, %s171
    %p177 = scmp.eq.s32.totalorder %s12, 0
    %p178 = por %p176, %p177
    %p179 = scmp.ne.s32.totalorder %s168, %s171
    %p180 = scmp.eq.s32.totalorder %s17, 1
    %p181 = por %p179, %p180
    %p182 = scmp.ne.s32.totalorder %s171, %s172
    %p183 = scmp.eq.s32.totalorder %s17, 0
    %p184 = por %p182, %p183
    %p185 = scmp.ne.s32.totalorder %s171, %s172
    %p186 = scmp.eq.s32.totalorder %s18, 1
    %p187 = por %p185, %p186
    %p189 = scmp.ne.s32.totalorder %s172, %s188
    %p190 = scmp.eq.s32.totalorder %s18, 0
    %p191 = por %p189, %p190
    %p192 = scmp.le.s32.totalorder 1, %s12
    %p193 = scmp.lt.s32.totalorder %s12, 3
    %p194 = pnand %p192, %p193
    %p195 = pneg %p194
    // Predicated region
    $region9: #{residual_block_forward.2} parent=5 // pred_check
      _
    $region10: #{residual_block_forward.2} parent=5 // pred_check_branch
      %197 = sbr.rel (%p194) target = $region12
    $region11: #{residual_block_forward.2} parent=5 // pred_region
      %s198 = ssub.s32 %s12, 1
      // Predicated region
      $region13: #{residual_block_forward.2} parent=11 // pred_check
        %p199 = pneg %p137
      $region14: #{residual_block_forward.2} parent=11 // pred_check_branch
        %201 = sbr.rel (%p199) target = $region16
      $region15: #{residual_block_forward.2} parent=11 // pred_region
        _
      $region16: #{residual_block_forward.2} parent=11 // pred_fallthru
        _
      // Predicated region
      $region17: #{residual_block_forward.2} parent=11 // pred_check
        %p202 = pneg %p158
      $region18: #{residual_block_forward.2} parent=11 // pred_check_branch
        %204 = sbr.rel (%p202) target = $region20
      $region19: #{residual_block_forward.2} parent=11 // pred_region
        _
      $region20: #{residual_block_forward.2} parent=11 // pred_fallthru
        _
    $region12: #{residual_block_forward.2} parent=5 // pred_fallthru
      _
    %p205 = scmp.lt.s32.totalorder %s12, 2
    // Predicated region
    $region21: #{residual_block_forward.2} parent=5 // pred_check
      %p206 = pneg %p205
    $region22: #{residual_block_forward.2} parent=5 // pred_check_branch
      %208 = sbr.rel (%p206) target = $region24
    $region23: #{residual_block_forward.2} parent=5 // pred_region
      // Predicated region
      $region25: #{residual_block_forward.2} parent=23 // pred_check
        %p209 = pneg %p32
      $region26: #{residual_block_forward.2} parent=23 // pred_check_branch
        %211 = sbr.rel (%p209) target = $region28
      $region27: #{residual_block_forward.2} parent=23 // pred_region
        %p212 = scmp.lt.s32.totalorder %s12, 1
        %s213 = scalar_select %p212, %s12, 1
        %s214 = smul.addr %s213, 11
        %s215 = smul.addr %s214, 4
        %s216 = scalar_lea.vmem %s0, %s215
      $region28: #{residual_block_forward.2} parent=23 // pred_fallthru
        _
      // Predicated region
      $region29: #{residual_block_forward.2} parent=23 // pred_check
        %p217 = pneg %p58
      $region30: #{residual_block_forward.2} parent=23 // pred_check_branch
        %219 = sbr.rel (%p217) target = $region32
      $region31: #{residual_block_forward.2} parent=23 // pred_region
        %p220 = scmp.lt.s32.totalorder %s12, 1
        %s221 = scalar_select %p220, %s12, 1
        %s222 = smul.addr %s221, 11
        %s223 = smul.addr %s222, 4
        %s224 = scalar_lea.vmem %s1, %s223
      $region32: #{residual_block_forward.2} parent=23 // pred_fallthru
        _
      // Predicated region
      $region33: #{residual_block_forward.2} parent=23 // pred_check
        %p225 = pneg %p84
      $region34: #{residual_block_forward.2} parent=23 // pred_check_branch
        %227 = sbr.rel (%p225) target = $region36
      $region35: #{residual_block_forward.2} parent=23 // pred_region
        %p228 = scmp.lt.s32.totalorder %s12, 1
        %s229 = scalar_select %p228, %s12, 1
        %s230 = smul.addr %s229, 11
        %s231 = smul.addr %s230, 4
        %s232 = scalar_lea.vmem %s2, %s231
      $region36: #{residual_block_forward.2} parent=23 // pred_fallthru
        _
      // Predicated region
      $region37: #{residual_block_forward.2} parent=23 // pred_check
        %p233 = pneg %p110
      $region38: #{residual_block_forward.2} parent=23 // pred_check_branch
        %235 = sbr.rel (%p233) target = $region40
      $region39: #{residual_block_forward.2} parent=23 // pred_region
        %p236 = scmp.lt.s32.totalorder %s12, 1
        %s237 = scalar_select %p236, %s12, 1
        %s238 = smul.addr %s237, 11
        %s239 = smul.addr %s238, 4
        %s240 = scalar_lea.vmem %s3, %s239
      $region40: #{residual_block_forward.2} parent=23 // pred_fallthru
        _
    $region24: #{residual_block_forward.2} parent=5 // pred_fallthru
      _
    %p241 = scmp.le.s32.totalorder 1, %s12
    %p242 = scmp.lt.s32.totalorder %s12, 3
    %p243 = pnand %p241, %p242
    %p244 = pneg %p243
    // Predicated region
    $region41: #{residual_block_forward.2} parent=5 // pred_check
      _
    $region42: #{residual_block_forward.2} parent=5 // pred_check_branch
      %246 = sbr.rel (%p243) target = $region44
    $region43: #{residual_block_forward.2} parent=5 // pred_region
      %s247 = ssub.s32 %s12, 1
      %p248 = scmp.lt.s32.totalorder %s17, 1
      %s249 = scalar_select %p248, %s17, 1
      %s250 = smul.addr %s249, 11
      %s251 = smul.addr %s250, 4
      %s252 = scalar_lea.vmem %s0, %s251
      %p253 = pneg %p38
      %p254 = pneg %p35
      %p255 = scmp.lt.s32.totalorder %s17, 1
      %s256 = scalar_select %p255, %s17, 1
      %s257 = smul.addr %s256, 11
      %s258 = smul.addr %s257, 4
      %s259 = scalar_lea.vmem %s1, %s258
      %p260 = pneg %p64
      %p261 = pneg %p61
      %p262 = scmp.lt.s32.totalorder %s17, 1
      %s263 = scalar_select %p262, %s17, 1
      %s264 = smul.addr %s263, 11
      %s265 = smul.addr %s264, 4
      %s266 = scalar_lea.vmem %s2, %s265
      %p267 = pneg %p90
      %p268 = pneg %p87
      %p269 = scmp.lt.s32.totalorder %s17, 1
      %s270 = scalar_select %p269, %s17, 1
      %s271 = smul.addr %s270, 11
      %s272 = smul.addr %s271, 4
      %s273 = scalar_lea.vmem %s3, %s272
      %p274 = pneg %p116
      %p275 = pneg %p113
      %p276 = pneg %p137
      %p277 = pneg %p134
      %p278 = pneg %p158
      %p279 = pneg %p155
      %p280 = pneg %p184
      %p281 = pneg %p181
      %p282 = scmp.lt.s32.totalorder %s17, 1
      %s283 = scalar_select %p282, %s17, 1
      %s284 = smul.addr %s283, 9
      %s285 = smul.addr %s284, 8
      %s286 = scalar_lea.vmem %s6, %s285
      %p287 = scmp.lt.s32.totalorder %s17, 1
      %s288 = scalar_select %p287, %s17, 1
      %s289 = smul.addr %s288, 11
      %s290 = smul.addr %s289, 4
      %s291 = scalar_lea.vmem %s0, %s290
      %p292 = scmp.lt.s32.totalorder %s17, 1
      %s293 = scalar_select %p292, %s17, 1
      %s294 = smul.addr %s293, 11
      %s295 = smul.addr %s294, 4
      %s296 = scalar_lea.vmem %s1, %s295
      %p297 = scmp.lt.s32.totalorder %s17, 1
      %s298 = scalar_select %p297, %s17, 1
      %s299 = smul.addr %s298, 11
      %s300 = smul.addr %s299, 4
      %s301 = scalar_lea.vmem %s2, %s300
      %p302 = scmp.lt.s32.totalorder %s17, 1
      %s303 = scalar_select %p302, %s17, 1
      %s304 = smul.addr %s303, 11
      %s305 = smul.addr %s304, 4
      %s306 = scalar_lea.vmem %s3, %s305
      %p307 = scmp.lt.s32.totalorder %s17, 1
      %s308 = scalar_select %p307, %s17, 1
      %s309 = smul.addr %s308, 9
      %s310 = smul.addr %s309, 8
      %s311 = scalar_lea.vmem %s6, %s310
      %v313 = vld [vmem:[%s291] sm:$0xf]
      %v314 = vld [vmem:[%s291 + $0x4] sm:$0xf]
      %v315 = vld [vmem:[%s291 + $0x8] sm:$0xf]
      %v316 = vld [vmem:[%s291 + $0xc] sm:$0xf]
      %v317 = vld [vmem:[%s291 + $0x10] sm:$0xf]
      %v318 = vld [vmem:[%s291 + $0x14] sm:$0xf]
      %v319 = vld [vmem:[%s291 + $0x18] sm:$0xf]
      %v320 = vld [vmem:[%s291 + $0x1c] sm:$0xf]
      %v321 = vld [vmem:[%s291 + $0x20] sm:$0xf]
      %v322 = vld [vmem:[%s4] sm:$0x3]
      %v323 = vld [vmem:[%s296] sm:$0xf]
      %v324 = vld [vmem:[%s296 + $0x4] sm:$0xf]
      %v325 = vld [vmem:[%s296 + $0x8] sm:$0xf]
      %v326 = vld [vmem:[%s296 + $0xc] sm:$0xf]
      %v327 = vld [vmem:[%s296 + $0x10] sm:$0xf]
      %v328 = vld [vmem:[%s296 + $0x14] sm:$0xf]
      %v329 = vld [vmem:[%s296 + $0x18] sm:$0xf]
      %v330 = vld [vmem:[%s296 + $0x1c] sm:$0xf]
      %v331 = vld [vmem:[%s296 + $0x20] sm:$0xf]
      %s332 = scalar_lea.vmem %s4, 2
      %v333 = vld [vmem:[%s332] sm:$0x3]
      %v343 = vunpack.c.l.b16 %v323
      %v344 = vunpack.c.l.b16 %v324
      %v345 = vunpack.c.l.b16 %v325
      %v346 = vunpack.c.l.b16 %v326
      %v347 = vunpack.c.l.b16 %v327
      %v348 = vunpack.c.l.b16 %v328
      %v349 = vunpack.c.l.b16 %v329
      %v350 = vunpack.c.l.b16 %v330
      %v351 = vunpack.c.l.b16 %v331
      %v352 = vpack.c.b16 %v344, %v343
      %v353 = vpack.c.b16 %v346, %v345
      %v354 = vpack.c.b16 %v348, %v347
      %v355 = vpack.c.b16 %v350, %v349
      %v356 = vpack.c.b16 %v351, %v351
      %vm357 = vcmask 31744
      %v359 = vsel %vm357, %v352, 0
      %v362 = vsel %vm357, %v353, 0
      %v365 = vsel %vm357, %v354, 0
      %v368 = vsel %vm357, %v355, 0
      %v371 = vsel %vm357, %v356, 0
      %vm373 = vcmask 1041408
      %v375 = vsel %vm373, %v333, 0
      %377 = vmatprep.subr.bf16.mxu0 0
      %378 = vmatpush1.bf16.msra.mxu0 %v375
      %379 = vmatprep.subr.bf16.mxu0 0
      %380 = vmatpush1.bf16.msra.mxu0 0
      %381 = vmatprep.subr.bf16.mxu0 0
      %382 = vmatpush1.bf16.msra.mxu0 0
      %383 = vmatprep.subr.bf16.mxu0 0
      %384 = vmatpush1.bf16.msra.mxu0 0
      %385 = vmatprep.subr.bf16.mxu0 0
      %386 = vmatpush1.bf16.msra.mxu0 0
      %387 = vmatprep.subr.bf16.mxu0 0
      %388 = vmatpush1.bf16.msra.mxu0 0
      %389 = vmatprep.subr.bf16.mxu0 0
      %390 = vmatpush1.bf16.msra.mxu0 0
      %391 = vmatprep.subr.bf16.mxu0 0
      %392 = vmatpush1.bf16.msra.mxu0 0
      %393 = vmatprep.subr.bf16.mxu0 0
      %394 = vmatpush1.bf16.msra.mxu0 0
      %395 = vmatprep.subr.bf16.mxu0 0
      %396 = vmatpush1.bf16.msra.mxu0 0
      %397 = vmatprep.subr.bf16.mxu0 0
      %398 = vmatpush1.bf16.msra.mxu0 0
      %399 = vmatprep.subr.bf16.mxu0 0
      %400 = vmatpush1.bf16.msra.mxu0 0
      %401 = vmatprep.subr.bf16.mxu0 0
      %402 = vmatpush1.bf16.msra.mxu0 0
      %403 = vmatprep.subr.bf16.mxu0 0
      %404 = vmatpush1.bf16.msra.mxu0 0
      %405 = vmatprep.subr.bf16.mxu0 0
      %406 = vmatpush1.bf16.msra.mxu0 0
      %407 = vmatprep.subr.bf16.mxu0 0
      %408 = vmatpush1.bf16.msra.mxu0 0
      %409 = vmatprep.mubr.bf16.mxu0 0
      %410 = vmatmul.mubr.bf16.gmra.mrb[0].mxu0 %v359
      %v411 = vpop.f32.mrb[0].mxu0
      %v412 = vadd.f32 0.0, %v411
      %v413 = vpop.f32.mrb[0].mxu0
      %v414 = vpop.f32.mrb[0].mxu0
      %v415 = vadd.f32 0.0, %v414
      %v416 = vpop.f32.mrb[0].mxu0
      %417 = vmatprep.mubr.bf16.mxu0 0
      %418 = vmatmul.mubr.bf16.gmra.mrb[0].mxu0 %v362
      %v419 = vpop.f32.mrb[0].mxu0
      %v420 = vadd.f32 0.0, %v419
      %v421 = vpop.f32.mrb[0].mxu0
      %v422 = vpop.f32.mrb[0].mxu0
      %v423 = vadd.f32 0.0, %v422
      %v424 = vpop.f32.mrb[0].mxu0
      %425 = vmatprep.mubr.bf16.mxu0 0
      %426 = vmatmul.mubr.bf16.gmra.mrb[0].mxu0 %v365
      %v427 = vpop.f32.mrb[0].mxu0
      %v428 = vadd.f32 0.0, %v427
      %v429 = vpop.f32.mrb[0].mxu0
      %v430 = vpop.f32.mrb[0].mxu0
      %v431 = vadd.f32 0.0, %v430
      %v432 = vpop.f32.mrb[0].mxu0
      %433 = vmatprep.mubr.bf16.mxu0 0
      %434 = vmatmul.mubr.bf16.gmra.mrb[0].mxu0 %v368
      %v435 = vpop.f32.mrb[0].mxu0
      %v436 = vadd.f32 0.0, %v435
      %v437 = vpop.f32.mrb[0].mxu0
      %v438 = vpop.f32.mrb[0].mxu0
      %v439 = vadd.f32 0.0, %v438
      %v440 = vpop.f32.mrb[0].mxu0
      %441 = vmatprep.mubr.bf16.mxu0 0
      %442 = vmatmul.mubr.bf16.gmra.mrb[0].mxu0 %v371
      %v443 = vpop.f32.mrb[0].mxu0
      %v444 = vadd.f32 0.0, %v443
      %v445 = vpop.f32.mrb[0].mxu0
      %v446 = vpop.f32.mrb[0].mxu0
      %v447 = vpop.f32.mrb[0].mxu0
      %448 = vdwg.mxu0
      %v458 = vunpack.c.l.b16 %v313
      %v459 = vunpack.c.l.b16 %v314
      %v460 = vunpack.c.l.b16 %v315
      %v461 = vunpack.c.l.b16 %v316
      %v462 = vunpack.c.l.b16 %v317
      %v463 = vunpack.c.l.b16 %v318
      %v464 = vunpack.c.l.b16 %v319
      %v465 = vunpack.c.l.b16 %v320
      %v466 = vunpack.c.l.b16 %v321
      %v467 = vpack.c.b16 %v459, %v458
      %v468 = vpack.c.b16 %v461, %v460
      %v469 = vpack.c.b16 %v463, %v462
      %v470 = vpack.c.b16 %v465, %v464
      %v471 = vpack.c.b16 %v466, %v466
      %v473 = vsel %vm357, %v467, 0
      %v476 = vsel %vm357, %v468, 0
      %v479 = vsel %vm357, %v469, 0
      %v482 = vsel %vm357, %v470, 0
      %v485 = vsel %vm357, %v471, 0
      %v488 = vsel %vm373, %v322, 0
      %490 = vmatprep.subr.bf16.mxu0 0
      %491 = vmatpush1.bf16.msra.mxu0 %v488
      %492 = vmatprep.subr.bf16.mxu0 0
      %493 = vmatpush1.bf16.msra.mxu0 0
      %494 = vmatprep.subr.bf16.mxu0 0
      %495 = vmatpush1.bf16.msra.mxu0 0
      %496 = vmatprep.subr.bf16.mxu0 0
      %497 = vmatpush1.bf16.msra.mxu0 0
      %498 = vmatprep.subr.bf16.mxu0 0
      %499 = vmatpush1.bf16.msra.mxu0 0
      %500 = vmatprep.subr.bf16.mxu0 0
      %501 = vmatpush1.bf16.msra.mxu0 0
      %502 = vmatprep.subr.bf16.mxu0 0
      %503 = vmatpush1.bf16.msra.mxu0 0
      %504 = vmatprep.subr.bf16.mxu0 0
      %505 = vmatpush1.bf16.msra.mxu0 0
      %506 = vmatprep.subr.bf16.mxu0 0
      %507 = vmatpush1.bf16.msra.mxu0 0
      %508 = vmatprep.subr.bf16.mxu0 0
      %509 = vmatpush1.bf16.msra.mxu0 0
      %510 = vmatprep.subr.bf16.mxu0 0
      %511 = vmatpush1.bf16.msra.mxu0 0
      %512 = vmatprep.subr.bf16.mxu0 0
      %513 = vmatpush1.bf16.msra.mxu0 0
      %514 = vmatprep.subr.bf16.mxu0 0
      %515 = vmatpush1.bf16.msra.mxu0 0
      %516 = vmatprep.subr.bf16.mxu0 0
      %517 = vmatpush1.bf16.msra.mxu0 0
      %518 = vmatprep.subr.bf16.mxu0 0
      %519 = vmatpush1.bf16.msra.mxu0 0
      %520 = vmatprep.subr.bf16.mxu0 0
      %521 = vmatpush1.bf16.msra.mxu0 0
      %522 = vmatprep.mubr.bf16.mxu0 0
      %523 = vmatmul.mubr.bf16.gmra.mrb[0].mxu0 %v473
      %v524 = vpop.f32.mrb[0].mxu0
      %v525 = vadd.f32 %v412, %v524
      %v526 = vpop.f32.mrb[0].mxu0
      %v527 = vpop.f32.mrb[0].mxu0
      %v528 = vadd.f32 %v415, %v527
      %v529 = vpop.f32.mrb[0].mxu0
      %530 = vmatprep.mubr.bf16.mxu0 0
      %531 = vmatmul.mubr.bf16.gmra.mrb[0].mxu0 %v476
      %v532 = vpop.f32.mrb[0].mxu0
      %v533 = vadd.f32 %v420, %v532
      %v534 = vpop.f32.mrb[0].mxu0
      %v535 = vpop.f32.mrb[0].mxu0
      %v536 = vadd.f32 %v423, %v535
      %v537 = vpop.f32.mrb[0].mxu0
      %538 = vmatprep.mubr.bf16.mxu0 0
      %539 = vmatmul.mubr.bf16.gmra.mrb[0].mxu0 %v479
      %v540 = vpop.f32.mrb[0].mxu0
      %v541 = vadd.f32 %v428, %v540
      %v542 = vpop.f32.mrb[0].mxu0
      %v543 = vpop.f32.mrb[0].mxu0
      %v544 = vadd.f32 %v431, %v543
      %v545 = vpop.f32.mrb[0].mxu0
      %546 = vmatprep.mubr.bf16.mxu0 0
      %547 = vmatmul.mubr.bf16.gmra.mrb[0].mxu0 %v482
      %v548 = vpop.f32.mrb[0].mxu0
      %v549 = vadd.f32 %v436, %v548
      %v550 = vpop.f32.mrb[0].mxu0
      %v551 = vpop.f32.mrb[0].mxu0
      %v552 = vadd.f32 %v439, %v551
      %v553 = vpop.f32.mrb[0].mxu0
      %554 = vmatprep.mubr.bf16.mxu0 0
      %555 = vmatmul.mubr.bf16.gmra.mrb[0].mxu0 %v485
      %v556 = vpop.f32.mrb[0].mxu0
      %v557 = vadd.f32 %v444, %v556
      %v558 = vpop.f32.mrb[0].mxu0
      %v559 = vpop.f32.mrb[0].mxu0
      %v560 = vpop.f32.mrb[0].mxu0
      %561 = vdwg.mxu0
      %v562 = vld [vmem:[%s291] sm:$0xf]
      %v563 = vld [vmem:[%s291 + $0x4] sm:$0xf]
      %v564 = vld [vmem:[%s291 + $0x8] sm:$0xf]
      %v565 = vld [vmem:[%s291 + $0xc] sm:$0xf]
      %v566 = vld [vmem:[%s291 + $0x10] sm:$0xf]
      %v567 = vld [vmem:[%s291 + $0x14] sm:$0xf]
      %v568 = vld [vmem:[%s291 + $0x18] sm:$0xf]
      %v569 = vld [vmem:[%s291 + $0x1c] sm:$0xf]
      %v570 = vld [vmem:[%s291 + $0x20] sm:$0xf]
      %v571 = vld [vmem:[%s291 + $0x24] sm:$0x1]
      %s572 = scalar_lea.vmem %s4, 4
      %v573 = vld [vmem:[%s572] sm:$0x3]
      %v584 = vunpack.c.l.b16 %v562
      %v585 = vunpack.c.l.b16 %v563
      %v586 = vunpack.c.l.b16 %v564
      %v587 = vunpack.c.l.b16 %v565
      %v588 = vunpack.c.l.b16 %v566
      %v589 = vunpack.c.l.b16 %v567
      %v590 = vunpack.c.l.b16 %v568
      %v591 = vunpack.c.l.b16 %v569
      %v592 = vunpack.c.l.b16 %v570
      %v593 = vunpack.c.l.b16 %v571
      %v594 = vpack.c.b16 %v585, %v584
      %v595 = vpack.c.b16 %v587, %v586
      %v596 = vpack.c.b16 %v589, %v588
      %v597 = vpack.c.b16 %v591, %v590
      %v598 = vpack.c.b16 %v593, %v592
      %vm599 = vsmask.f32 7424
      %v601 = vshrl.u32 %v594, 16
      %v603 = vshll.u32 %v594, 16
      %v605 = vrot.slane %v603, 1
      %v606 = vor.u32 %v601, %v605
      %v608 = vshll.u32 %v595, 16
      %v610 = vrot.slane %v608, 1
      %v611 = vsel %vm599, %v606, %v610
      %v612 = vshrl.u32 %v595, 16
      %v614 = vor.u32 %v612, %v610
      %v616 = vshll.u32 %v596, 16
      %v618 = vrot.slane %v616, 1
      %v619 = vsel %vm599, %v614, %v618
      %v620 = vshrl.u32 %v596, 16
      %v622 = vor.u32 %v620, %v618
      %v624 = vshll.u32 %v597, 16
      %v626 = vrot.slane %v624, 1
      %v627 = vsel %vm599, %v622, %v626
      %v628 = vshrl.u32 %v597, 16
      %v630 = vor.u32 %v628, %v626
      %v632 = vshll.u32 %v598, 16
      %v634 = vrot.slane %v632, 1
      %v635 = vsel %vm599, %v630, %v634
      %v636 = vshrl.u32 %v598, 16
      %v638 = vor.u32 %v636, %v634
      %v640 = vsel %vm357, %v611, 0
      %v643 = vsel %vm357, %v619, 0
      %v646 = vsel %vm357, %v627, 0
      %v649 = vsel %vm357, %v635, 0
      %v652 = vsel %vm357, %v638, 0
      %v655 = vsel %vm373, %v573, 0
      %657 = vmatprep.subr.bf16.mxu0 0
      %658 = vmatpush1.bf16.msra.mxu0 %v655
      %659 = vmatprep.subr.bf16.mxu0 0
      %660 = vmatpush1.bf16.msra.mxu0 0
      %661 = vmatprep.subr.bf16.mxu0 0
      %662 = vmatpush1.bf16.msra.mxu0 0
      %663 = vmatprep.subr.bf16.mxu0 0
      %664 = vmatpush1.bf16.msra.mxu0 0
      %665 = vmatprep.subr.bf16.mxu0 0
      %666 = vmatpush1.bf16.msra.mxu0 0
      %667 = vmatprep.subr.bf16.mxu0 0
      %668 = vmatpush1.bf16.msra.mxu0 0
      %669 = vmatprep.subr.bf16.mxu0 0
      %670 = vmatpush1.bf16.msra.mxu0 0
      %671 = vmatprep.subr.bf16.mxu0 0
      %672 = vmatpush1.bf16.msra.mxu0 0
      %673 = vmatprep.subr.bf16.mxu0 0
      %674 = vmatpush1.bf16.msra.mxu0 0
      %675 = vmatprep.subr.bf16.mxu0 0
      %676 = vmatpush1.bf16.msra.mxu0 0
      %677 = vmatprep.subr.bf16.mxu0 0
      %678 = vmatpush1.bf16.msra.mxu0 0
      %679 = vmatprep.subr.bf16.mxu0 0
      %680 = vmatpush1.bf16.msra.mxu0 0
      %681 = vmatprep.subr.bf16.mxu0 0
      %682 = vmatpush1.bf16.msra.mxu0 0
      %683 = vmatprep.subr.bf16.mxu0 0
      %684 = vmatpush1.bf16.msra.mxu0 0
      %685 = vmatprep.subr.bf16.mxu0 0
      %686 = vmatpush1.bf16.msra.mxu0 0
      %687 = vmatprep.subr.bf16.mxu0 0
      %688 = vmatpush1.bf16.msra.mxu0 0
      %689 = vmatprep.mubr.bf16.mxu0 0
      %690 = vmatmul.mubr.bf16.gmra.mrb[0].mxu0 %v640
      %v691 = vpop.f32.mrb[0].mxu0
      %v692 = vadd.f32 0.0, %v691
      %v693 = vpop.f32.mrb[0].mxu0
      %v694 = vpop.f32.mrb[0].mxu0
      %v695 = vadd.f32 0.0, %v694
      %v696 = vpop.f32.mrb[0].mxu0
      %697 = vmatprep.mubr.bf16.mxu0 0
      %698 = vmatmul.mubr.bf16.gmra.mrb[0].mxu0 %v643
      %v699 = vpop.f32.mrb[0].mxu0
      %v700 = vadd.f32 0.0, %v699
      %v701 = vpop.f32.mrb[0].mxu0
      %v702 = vpop.f32.mrb[0].mxu0
      %v703 = vadd.f32 0.0, %v702
      %v704 = vpop.f32.mrb[0].mxu0
      %705 = vmatprep.mubr.bf16.mxu0 0
      %706 = vmatmul.mubr.bf16.gmra.mrb[0].mxu0 %v646
      %v707 = vpop.f32.mrb[0].mxu0
      %v708 = vadd.f32 0.0, %v707
      %v709 = vpop.f32.mrb[0].mxu0
      %v710 = vpop.f32.mrb[0].mxu0
      %v711 = vadd.f32 0.0, %v710
      %v712 = vpop.f32.mrb[0].mxu0
      %713 = vmatprep.mubr.bf16.mxu0 0
      %714 = vmatmul.mubr.bf16.gmra.mrb[0].mxu0 %v649
      %v715 = vpop.f32.mrb[0].mxu0
      %v716 = vadd.f32 0.0, %v715
      %v717 = vpop.f32.mrb[0].mxu0
      %v718 = vpop.f32.mrb[0].mxu0
      %v719 = vadd.f32 0.0, %v718
      %v720 = vpop.f32.mrb[0].mxu0
      %721 = vmatprep.mubr.bf16.mxu0 0
      %722 = vmatmul.mubr.bf16.gmra.mrb[0].mxu0 %v652
      %v723 = vpop.f32.mrb[0].mxu0
      %v724 = vadd.f32 0.0, %v723
      %v725 = vpop.f32.mrb[0].mxu0
      %v726 = vpop.f32.mrb[0].mxu0
      %v727 = vpop.f32.mrb[0].mxu0
      %728 = vdwg.mxu0
      %v729 = vadd.f32 %v525, %v692
      %v730 = vadd.f32 %v528, %v695
      %v731 = vadd.f32 %v533, %v700
      %v732 = vadd.f32 %v536, %v703
      %v733 = vadd.f32 %v541, %v708
      %v734 = vadd.f32 %v544, %v711
      %v735 = vadd.f32 %v549, %v716
      %v736 = vadd.f32 %v552, %v719
      %v737 = vadd.f32 %v557, %v724
      %v738 = vld [vmem:[%s301] sm:$0xf]
      %v739 = vld [vmem:[%s301 + $0x4] sm:$0xf]
      %v740 = vld [vmem:[%s301 + $0x8] sm:$0xf]
      %v741 = vld [vmem:[%s301 + $0xc] sm:$0xf]
      %v742 = vld [vmem:[%s301 + $0x10] sm:$0xf]
      %v743 = vld [vmem:[%s301 + $0x14] sm:$0xf]
      %v744 = vld [vmem:[%s301 + $0x18] sm:$0xf]
      %v745 = vld [vmem:[%s301 + $0x1c] sm:$0xf]
      %v746 = vld [vmem:[%s301 + $0x20] sm:$0xf]
      %s747 = scalar_lea.vmem %s4, 6
      %v748 = vld [vmem:[%s747] sm:$0x3]
      %v758 = vunpack.c.l.b16 %v738
      %v759 = vunpack.c.l.b16 %v739
      %v760 = vunpack.c.l.b16 %v740
      %v761 = vunpack.c.l.b16 %v741
      %v762 = vunpack.c.l.b16 %v742
      %v763 = vunpack.c.l.b16 %v743
      %v764 = vunpack.c.l.b16 %v744
      %v765 = vunpack.c.l.b16 %v745
      %v766 = vunpack.c.l.b16 %v746
      %v767 = vpack.c.b16 %v759, %v758
      %v768 = vpack.c.b16 %v761, %v760
      %v769 = vpack.c.b16 %v763, %v762
      %v770 = vpack.c.b16 %v765, %v764
      %v771 = vpack.c.b16 %v766, %v766
      %v773 = vsel %vm357, %v767, 0
      %v776 = vsel %vm357, %v768, 0
      %v779 = vsel %vm357, %v769, 0
      %v782 = vsel %vm357, %v770, 0
      %v785 = vsel %vm357, %v771, 0
      %v788 = vsel %vm373, %v748, 0
      %790 = vmatprep.subr.bf16.mxu0 0
      %791 = vmatpush1.bf16.msra.mxu0 %v788
      %792 = vmatprep.subr.bf16.mxu0 0
      %793 = vmatpush1.bf16.msra.mxu0 0
      %794 = vmatprep.subr.bf16.mxu0 0
      %795 = vmatpush1.bf16.msra.mxu0 0
      %796 = vmatprep.subr.bf16.mxu0 0
      %797 = vmatpush1.bf16.msra.mxu0 0
      %798 = vmatprep.subr.bf16.mxu0 0
      %799 = vmatpush1.bf16.msra.mxu0 0
      %800 = vmatprep.subr.bf16.mxu0 0
      %801 = vmatpush1.bf16.msra.mxu0 0
      %802 = vmatprep.subr.bf16.mxu0 0
      %803 = vmatpush1.bf16.msra.mxu0 0
      %804 = vmatprep.subr.bf16.mxu0 0
      %805 = vmatpush1.bf16.msra.mxu0 0
      %806 = vmatprep.subr.bf16.mxu0 0
      %807 = vmatpush1.bf16.msra.mxu0 0
      %808 = vmatprep.subr.bf16.mxu0 0
      %809 = vmatpush1.bf16.msra.mxu0 0
      %810 = vmatprep.subr.bf16.mxu0 0
      %811 = vmatpush1.bf16.msra.mxu0 0
      %812 = vmatprep.subr.bf16.mxu0 0
      %813 = vmatpush1.bf16.msra.mxu0 0
      %814 = vmatprep.subr.bf16.mxu0 0
      %815 = vmatpush1.bf16.msra.mxu0 0
      %816 = vmatprep.subr.bf16.mxu0 0
      %817 = vmatpush1.bf16.msra.mxu0 0
      %818 = vmatprep.subr.bf16.mxu0 0
      %819 = vmatpush1.bf16.msra.mxu0 0
      %820 = vmatprep.subr.bf16.mxu0 0
      %821 = vmatpush1.bf16.msra.mxu0 0
      %822 = vmatprep.mubr.bf16.mxu0 0
      %823 = vmatmul.mubr.bf16.gmra.mrb[0].mxu0 %v773
      %v824 = vpop.f32.mrb[0].mxu0
      %v825 = vadd.f32 0.0, %v824
      %v826 = vpop.f32.mrb[0].mxu0
      %v827 = vpop.f32.mrb[0].mxu0
      %v828 = vadd.f32 0.0, %v827
      %v829 = vpop.f32.mrb[0].mxu0
      %830 = vmatprep.mubr.bf16.mxu0 0
      %831 = vmatmul.mubr.bf16.gmra.mrb[0].mxu0 %v776
      %v832 = vpop.f32.mrb[0].mxu0
      %v833 = vadd.f32 0.0, %v832
      %v834 = vpop.f32.mrb[0].mxu0
      %v835 = vpop.f32.mrb[0].mxu0
      %v836 = vadd.f32 0.0, %v835
      %v837 = vpop.f32.mrb[0].mxu0
      %838 = vmatprep.mubr.bf16.mxu0 0
      %839 = vmatmul.mubr.bf16.gmra.mrb[0].mxu0 %v779
      %v840 = vpop.f32.mrb[0].mxu0
      %v841 = vadd.f32 0.0, %v840
      %v842 = vpop.f32.mrb[0].mxu0
      %v843 = vpop.f32.mrb[0].mxu0
      %v844 = vadd.f32 0.0, %v843
      %v845 = vpop.f32.mrb[0].mxu0
      %846 = vmatprep.mubr.bf16.mxu0 0
      %847 = vmatmul.mubr.bf16.gmra.mrb[0].mxu0 %v782
      %v848 = vpop.f32.mrb[0].mxu0
      %v849 = vadd.f32 0.0, %v848
      %v850 = vpop.f32.mrb[0].mxu0
      %v851 = vpop.f32.mrb[0].mxu0
      %v852 = vadd.f32 0.0, %v851
      %v853 = vpop.f32.mrb[0].mxu0
      %854 = vmatprep.mubr.bf16.mxu0 0
      %855 = vmatmul.mubr.bf16.gmra.mrb[0].mxu0 %v785
      %v856 = vpop.f32.mrb[0].mxu0
      %v857 = vadd.f32 0.0, %v856
      %v858 = vpop.f32.mrb[0].mxu0
      %v859 = vpop.f32.mrb[0].mxu0
      %v860 = vpop.f32.mrb[0].mxu0
      %861 = vdwg.mxu0
      %v862 = vadd.f32 %v729, %v825
      %v863 = vadd.f32 %v730, %v828
      %v864 = vadd.f32 %v731, %v833
      %v865 = vadd.f32 %v732, %v836
      %v866 = vadd.f32 %v733, %v841
      %v867 = vadd.f32 %v734, %v844
      %v868 = vadd.f32 %v735, %v849
      %v869 = vadd.f32 %v736, %v852
      %v870 = vadd.f32 %v737, %v857
      %v871 = vld [vmem:[%s306] sm:$0xf]
      %v872 = vld [vmem:[%s306 + $0x4] sm:$0xf]
      %v873 = vld [vmem:[%s306 + $0x8] sm:$0xf]
      %v874 = vld [vmem:[%s306 + $0xc] sm:$0xf]
      %v875 = vld [vmem:[%s306 + $0x10] sm:$0xf]
      %v876 = vld [vmem:[%s306 + $0x14] sm:$0xf]
      %v877 = vld [vmem:[%s306 + $0x18] sm:$0xf]
      %v878 = vld [vmem:[%s306 + $0x1c] sm:$0xf]
      %v879 = vld [vmem:[%s306 + $0x20] sm:$0xf]
      %s880 = scalar_lea.vmem %s4, 8
      %v881 = vld [vmem:[%s880] sm:$0x3]
      %v891 = vunpack.c.l.b16 %v871
      %v892 = vunpack.c.l.b16 %v872
      %v893 = vunpack.c.l.b16 %v873
      %v894 = vunpack.c.l.b16 %v874
      %v895 = vunpack.c.l.b16 %v875
      %v896 = vunpack.c.l.b16 %v876
      %v897 = vunpack.c.l.b16 %v877
      %v898 = vunpack.c.l.b16 %v878
      %v899 = vunpack.c.l.b16 %v879
      %v900 = vpack.c.b16 %v892, %v891
      %v901 = vpack.c.b16 %v894, %v893
      %v902 = vpack.c.b16 %v896, %v895
      %v903 = vpack.c.b16 %v898, %v897
      %v904 = vpack.c.b16 %v899, %v899
      %v906 = vsel %vm357, %v900, 0
      %v909 = vsel %vm357, %v901, 0
      %v912 = vsel %vm357, %v902, 0
      %v915 = vsel %vm357, %v903, 0
      %v918 = vsel %vm357, %v904, 0
      %v921 = vsel %vm373, %v881, 0
      %923 = vmatprep.subr.bf16.mxu0 0
      %924 = vmatpush1.bf16.msra.mxu0 %v921
      %925 = vmatprep.subr.bf16.mxu0 0
      %926 = vmatpush1.bf16.msra.mxu0 0
      %927 = vmatprep.subr.bf16.mxu0 0
      %928 = vmatpush1.bf16.msra.mxu0 0
      %929 = vmatprep.subr.bf16.mxu0 0
      %930 = vmatpush1.bf16.msra.mxu0 0
      %931 = vmatprep.subr.bf16.mxu0 0
      %932 = vmatpush1.bf16.msra.mxu0 0
      %933 = vmatprep.subr.bf16.mxu0 0
      %934 = vmatpush1.bf16.msra.mxu0 0
      %935 = vmatprep.subr.bf16.mxu0 0
      %936 = vmatpush1.bf16.msra.mxu0 0
      %937 = vmatprep.subr.bf16.mxu0 0
      %938 = vmatpush1.bf16.msra.mxu0 0
      %939 = vmatprep.subr.bf16.mxu0 0
      %940 = vmatpush1.bf16.msra.mxu0 0
      %941 = vmatprep.subr.bf16.mxu0 0
      %942 = vmatpush1.bf16.msra.mxu0 0
      %943 = vmatprep.subr.bf16.mxu0 0
      %944 = vmatpush1.bf16.msra.mxu0 0
      %945 = vmatprep.subr.bf16.mxu0 0
      %946 = vmatpush1.bf16.msra.mxu0 0
      %947 = vmatprep.subr.bf16.mxu0 0
      %948 = vmatpush1.bf16.msra.mxu0 0
      %949 = vmatprep.subr.bf16.mxu0 0
      %950 = vmatpush1.bf16.msra.mxu0 0
      %951 = vmatprep.subr.bf16.mxu0 0
      %952 = vmatpush1.bf16.msra.mxu0 0
      %953 = vmatprep.subr.bf16.mxu0 0
      %954 = vmatpush1.bf16.msra.mxu0 0
      %955 = vmatprep.mubr.bf16.mxu0 0
      %956 = vmatmul.mubr.bf16.gmra.mrb[0].mxu0 %v906
      %v957 = vpop.f32.mrb[0].mxu0
      %v958 = vadd.f32 0.0, %v957
      %v959 = vpop.f32.mrb[0].mxu0
      %v960 = vpop.f32.mrb[0].mxu0
      %v961 = vadd.f32 0.0, %v960
      %v962 = vpop.f32.mrb[0].mxu0
      %963 = vmatprep.mubr.bf16.mxu0 0
      %964 = vmatmul.mubr.bf16.gmra.mrb[0].mxu0 %v909
      %v965 = vpop.f32.mrb[0].mxu0
      %v966 = vadd.f32 0.0, %v965
      %v967 = vpop.f32.mrb[0].mxu0
      %v968 = vpop.f32.mrb[0].mxu0
      %v969 = vadd.f32 0.0, %v968
      %v970 = vpop.f32.mrb[0].mxu0
      %971 = vmatprep.mubr.bf16.mxu0 0
      %972 = vmatmul.mubr.bf16.gmra.mrb[0].mxu0 %v912
      %v973 = vpop.f32.mrb[0].mxu0
      %v974 = vadd.f32 0.0, %v973
      %v975 = vpop.f32.mrb[0].mxu0
      %v976 = vpop.f32.mrb[0].mxu0
      %v977 = vadd.f32 0.0, %v976
      %v978 = vpop.f32.mrb[0].mxu0
      %979 = vmatprep.mubr.bf16.mxu0 0
      %980 = vmatmul.mubr.bf16.gmra.mrb[0].mxu0 %v915
      %v981 = vpop.f32.mrb[0].mxu0
      %v982 = vadd.f32 0.0, %v981
      %v983 = vpop.f32.mrb[0].mxu0
      %v984 = vpop.f32.mrb[0].mxu0
      %v985 = vadd.f32 0.0, %v984
      %v986 = vpop.f32.mrb[0].mxu0
      %987 = vmatprep.mubr.bf16.mxu0 0
      %988 = vmatmul.mubr.bf16.gmra.mrb[0].mxu0 %v918
      %v989 = vpop.f32.mrb[0].mxu0
      %v990 = vadd.f32 0.0, %v989
      %v991 = vpop.f32.mrb[0].mxu0
      %v992 = vpop.f32.mrb[0].mxu0
      %v993 = vpop.f32.mrb[0].mxu0
      %994 = vdwg.mxu0
      %v995 = vadd.f32 %v862, %v958
      %v996 = vadd.f32 %v863, %v961
      %v997 = vadd.f32 %v864, %v966
      %v998 = vadd.f32 %v865, %v969
      %v999 = vadd.f32 %v866, %v974
      %v1000 = vadd.f32 %v867, %v977
      %v1001 = vadd.f32 %v868, %v982
      %v1002 = vadd.f32 %v869, %v985
      %v1003 = vadd.f32 %v870, %v990
      %v1004 = vld [vmem:[%s301] sm:$0xf]
      %v1005 = vld [vmem:[%s301 + $0x4] sm:$0xf]
      %v1006 = vld [vmem:[%s301 + $0x8] sm:$0xf]
      %v1007 = vld [vmem:[%s301 + $0xc] sm:$0xf]
      %v1008 = vld [vmem:[%s301 + $0x10] sm:$0xf]
      %v1009 = vld [vmem:[%s301 + $0x14] sm:$0xf]
      %v1010 = vld [vmem:[%s301 + $0x18] sm:$0xf]
      %v1011 = vld [vmem:[%s301 + $0x1c] sm:$0xf]
      %v1012 = vld [vmem:[%s301 + $0x20] sm:$0xf]
      %v1013 = vld [vmem:[%s301 + $0x24] sm:$0x1]
      %s1014 = scalar_lea.vmem %s4, 10
      %v1015 = vld [vmem:[%s1014] sm:$0x3]
      %v1026 = vunpack.c.l.b16 %v1004
      %v1027 = vunpack.c.l.b16 %v1005
      %v1028 = vunpack.c.l.b16 %v1006
      %v1029 = vunpack.c.l.b16 %v1007
      %v1030 = vunpack.c.l.b16 %v1008
      %v1031 = vunpack.c.l.b16 %v1009
      %v1032 = vunpack.c.l.b16 %v1010
      %v1033 = vunpack.c.l.b16 %v1011
      %v1034 = vunpack.c.l.b16 %v1012
      %v1035 = vunpack.c.l.b16 %v1013
      %v1036 = vpack.c.b16 %v1027, %v1026
      %v1037 = vpack.c.b16 %v1029, %v1028
      %v1038 = vpack.c.b16 %v1031, %v1030
      %v1039 = vpack.c.b16 %v1033, %v1032
      %v1040 = vpack.c.b16 %v1035, %v1034
      %v1042 = vshrl.u32 %v1036, 16
      %v1044 = vshll.u32 %v1036, 16
      %v1046 = vrot.slane %v1044, 1
      %v1047 = vor.u32 %v1042, %v1046
      %v1049 = vshll.u32 %v1037, 16
      %v1051 = vrot.slane %v1049, 1
      %v1052 = vsel %vm599, %v1047, %v1051
      %v1053 = vshrl.u32 %v1037, 16
      %v1055 = vor.u32 %v1053, %v1051
      %v1057 = vshll.u32 %v1038, 16
      %v1059 = vrot.slane %v1057, 1
      %v1060 = vsel %vm599, %v1055, %v1059
      %v1061 = vshrl.u32 %v1038, 16
      %v1063 = vor.u32 %v1061, %v1059
      %v1065 = vshll.u32 %v1039, 16
      %v1067 = vrot.slane %v1065, 1
      %v1068 = vsel %vm599, %v1063, %v1067
      %v1069 = vshrl.u32 %v1039, 16
      %v1071 = vor.u32 %v1069, %v1067
      %v1073 = vshll.u32 %v1040, 16
      %v1075 = vrot.slane %v1073, 1
      %v1076 = vsel %vm599, %v1071, %v1075
      %v1077 = vshrl.u32 %v1040, 16
      %v1079 = vor.u32 %v1077, %v1075
      %v1081 = vsel %vm357, %v1052, 0
      %v1084 = vsel %vm357, %v1060, 0
      %v1087 = vsel %vm357, %v1068, 0
      %v1090 = vsel %vm357, %v1076, 0
      %v1093 = vsel %vm357, %v1079, 0
      %v1096 = vsel %vm373, %v1015, 0
      %1098 = vmatprep.subr.bf16.mxu0 0
      %1099 = vmatpush1.bf16.msra.mxu0 %v1096
      %1100 = vmatprep.subr.bf16.mxu0 0
      %1101 = vmatpush1.bf16.msra.mxu0 0
      %1102 = vmatprep.subr.bf16.mxu0 0
      %1103 = vmatpush1.bf16.msra.mxu0 0
      %1104 = vmatprep.subr.bf16.mxu0 0
      %1105 = vmatpush1.bf16.msra.mxu0 0
      %1106 = vmatprep.subr.bf16.mxu0 0
      %1107 = vmatpush1.bf16.msra.mxu0 0
      %1108 = vmatprep.subr.bf16.mxu0 0
      %1109 = vmatpush1.bf16.msra.mxu0 0
      %1110 = vmatprep.subr.bf16.mxu0 0
      %1111 = vmatpush1.bf16.msra.mxu0 0
      %1112 = vmatprep.subr.bf16.mxu0 0
      %1113 = vmatpush1.bf16.msra.mxu0 0
      %1114 = vmatprep.subr.bf16.mxu0 0
      %1115 = vmatpush1.bf16.msra.mxu0 0
      %1116 = vmatprep.subr.bf16.mxu0 0
      %1117 = vmatpush1.bf16.msra.mxu0 0
      %1118 = vmatprep.subr.bf16.mxu0 0
      %1119 = vmatpush1.bf16.msra.mxu0 0
      %1120 = vmatprep.subr.bf16.mxu0 0
      %1121 = vmatpush1.bf16.msra.mxu0 0
      %1122 = vmatprep.subr.bf16.mxu0 0
      %1123 = vmatpush1.bf16.msra.mxu0 0
      %1124 = vmatprep.subr.bf16.mxu0 0
      %1125 = vmatpush1.bf16.msra.mxu0 0
      %1126 = vmatprep.subr.bf16.mxu0 0
      %1127 = vmatpush1.bf16.msra.mxu0 0
      %1128 = vmatprep.subr.bf16.mxu0 0
      %1129 = vmatpush1.bf16.msra.mxu0 0
      %1130 = vmatprep.mubr.bf16.mxu0 0
      %1131 = vmatmul.mubr.bf16.gmra.mrb[0].mxu0 %v1081
      %v1132 = vpop.f32.mrb[0].mxu0
      %v1133 = vadd.f32 0.0, %v1132
      %v1134 = vpop.f32.mrb[0].mxu0
      %v1135 = vpop.f32.mrb[0].mxu0
      %v1136 = vadd.f32 0.0, %v1135
      %v1137 = vpop.f32.mrb[0].mxu0
      %1138 = vmatprep.mubr.bf16.mxu0 0
      %1139 = vmatmul.mubr.bf16.gmra.mrb[0].mxu0 %v1084
      %v1140 = vpop.f32.mrb[0].mxu0
      %v1141 = vadd.f32 0.0, %v1140
      %v1142 = vpop.f32.mrb[0].mxu0
      %v1143 = vpop.f32.mrb[0].mxu0
      %v1144 = vadd.f32 0.0, %v1143
      %v1145 = vpop.f32.mrb[0].mxu0
      %1146 = vmatprep.mubr.bf16.mxu0 0
      %1147 = vmatmul.mubr.bf16.gmra.mrb[0].mxu0 %v1087
      %v1148 = vpop.f32.mrb[0].mxu0
      %v1149 = vadd.f32 0.0, %v1148
      %v1150 = vpop.f32.mrb[0].mxu0
      %v1151 = vpop.f32.mrb[0].mxu0
      %v1152 = vadd.f32 0.0, %v1151
      %v1153 = vpop.f32.mrb[0].mxu0
      %1154 = vmatprep.mubr.bf16.mxu0 0
      %1155 = vmatmul.mubr.bf16.gmra.mrb[0].mxu0 %v1090
      %v1156 = vpop.f32.mrb[0].mxu0
      %v1157 = vadd.f32 0.0, %v1156
      %v1158 = vpop.f32.mrb[0].mxu0
      %v1159 = vpop.f32.mrb[0].mxu0
      %v1160 = vadd.f32 0.0, %v1159
      %v1161 = vpop.f32.mrb[0].mxu0
      %1162 = vmatprep.mubr.bf16.mxu0 0
      %1163 = vmatmul.mubr.bf16.gmra.mrb[0].mxu0 %v1093
      %v1164 = vpop.f32.mrb[0].mxu0
      %v1165 = vadd.f32 0.0, %v1164
      %v1166 = vpop.f32.mrb[0].mxu0
      %v1167 = vpop.f32.mrb[0].mxu0
      %v1168 = vpop.f32.mrb[0].mxu0
      %1169 = vdwg.mxu0
      %v1170 = vadd.f32 %v995, %v1133
      %v1171 = vadd.f32 %v996, %v1136
      %v1172 = vadd.f32 %v997, %v1141
      %v1173 = vadd.f32 %v998, %v1144
      %v1174 = vadd.f32 %v999, %v1149
      %v1175 = vadd.f32 %v1000, %v1152
      %v1176 = vadd.f32 %v1001, %v1157
      %v1177 = vadd.f32 %v1002, %v1160
      %v1178 = vadd.f32 %v1003, %v1165
      %v1179 = vld [vmem:[%s291 + $0x4] sm:$0xf]
      %v1180 = vld [vmem:[%s291 + $0x8] sm:$0xf]
      %v1181 = vld [vmem:[%s291 + $0xc] sm:$0xf]
      %v1182 = vld [vmem:[%s291 + $0x10] sm:$0xf]
      %v1183 = vld [vmem:[%s291 + $0x14] sm:$0xf]
      %v1184 = vld [vmem:[%s291 + $0x18] sm:$0xf]
      %v1185 = vld [vmem:[%s291 + $0x1c] sm:$0xf]
      %v1186 = vld [vmem:[%s291 + $0x20] sm:$0xf]
      %v1187 = vld [vmem:[%s291 + $0x24] sm:$0xf]
      %v1188 = vld [vmem:[%s291 + $0x28] sm:$0x1]
      %s1189 = scalar_lea.vmem %s4, 12
      %v1190 = vld [vmem:[%s1189] sm:$0x3]
      %v1201 = vunpack.c.l.b16 %v1179
      %v1202 = vunpack.c.l.b16 %v1180
      %v1203 = vunpack.c.l.b16 %v1181
      %v1204 = vunpack.c.l.b16 %v1182
      %v1205 = vunpack.c.l.b16 %v1183
      %v1206 = vunpack.c.l.b16 %v1184
      %v1207 = vunpack.c.l.b16 %v1185
      %v1208 = vunpack.c.l.b16 %v1186
      %v1209 = vunpack.c.l.b16 %v1187
      %v1210 = vunpack.c.l.b16 %v1188
      %v1211 = vpack.c.b16 %v1202, %v1201
      %v1212 = vpack.c.b16 %v1204, %v1203
      %v1213 = vpack.c.b16 %v1206, %v1205
      %v1214 = vpack.c.b16 %v1208, %v1207
      %v1215 = vpack.c.b16 %v1210, %v1209
      %v1217 = vshrl.u32 %v1211, 16
      %v1219 = vshll.u32 %v1211, 16
      %v1221 = vrot.slane %v1219, 1
      %v1222 = vor.u32 %v1217, %v1221
      %v1224 = vshll.u32 %v1212, 16
      %v1226 = vrot.slane %v1224, 1
      %v1227 = vsel %vm599, %v1222, %v1226
      %v1228 = vshrl.u32 %v1212, 16
      %v1230 = vor.u32 %v1228, %v1226
      %v1232 = vshll.u32 %v1213, 16
      %v1234 = vrot.slane %v1232, 1
      %v1235 = vsel %vm599, %v1230, %v1234
      %v1236 = vshrl.u32 %v1213, 16
      %v1238 = vor.u32 %v1236, %v1234
      %v1240 = vshll.u32 %v1214, 16
      %v1242 = vrot.slane %v1240, 1
      %v1243 = vsel %vm599, %v1238, %v1242
      %v1244 = vshrl.u32 %v1214, 16
      %v1246 = vor.u32 %v1244, %v1242
      %v1248 = vshll.u32 %v1215, 16
      %v1250 = vrot.slane %v1248, 1
      %v1251 = vsel %vm599, %v1246, %v1250
      %v1252 = vshrl.u32 %v1215, 16
      %v1254 = vor.u32 %v1252, %v1250
      %v1256 = vsel %vm357, %v1227, 0
      %v1259 = vsel %vm357, %v1235, 0
      %v1262 = vsel %vm357, %v1243, 0
      %v1265 = vsel %vm357, %v1251, 0
      %v1268 = vsel %vm357, %v1254, 0
      %v1271 = vsel %vm373, %v1190, 0
      %1273 = vmatprep.subr.bf16.mxu0 0
      %1274 = vmatpush1.bf16.msra.mxu0 %v1271
      %1275 = vmatprep.subr.bf16.mxu0 0
      %1276 = vmatpush1.bf16.msra.mxu0 0
      %1277 = vmatprep.subr.bf16.mxu0 0
      %1278 = vmatpush1.bf16.msra.mxu0 0
      %1279 = vmatprep.subr.bf16.mxu0 0
      %1280 = vmatpush1.bf16.msra.mxu0 0
      %1281 = vmatprep.subr.bf16.mxu0 0
      %1282 = vmatpush1.bf16.msra.mxu0 0
      %1283 = vmatprep.subr.bf16.mxu0 0
      %1284 = vmatpush1.bf16.msra.mxu0 0
      %1285 = vmatprep.subr.bf16.mxu0 0
      %1286 = vmatpush1.bf16.msra.mxu0 0
      %1287 = vmatprep.subr.bf16.mxu0 0
      %1288 = vmatpush1.bf16.msra.mxu0 0
      %1289 = vmatprep.subr.bf16.mxu0 0
      %1290 = vmatpush1.bf16.msra.mxu0 0
      %1291 = vmatprep.subr.bf16.mxu0 0
      %1292 = vmatpush1.bf16.msra.mxu0 0
      %1293 = vmatprep.subr.bf16.mxu0 0
      %1294 = vmatpush1.bf16.msra.mxu0 0
      %1295 = vmatprep.subr.bf16.mxu0 0
      %1296 = vmatpush1.bf16.msra.mxu0 0
      %1297 = vmatprep.subr.bf16.mxu0 0
      %1298 = vmatpush1.bf16.msra.mxu0 0
      %1299 = vmatprep.subr.bf16.mxu0 0
      %1300 = vmatpush1.bf16.msra.mxu0 0
      %1301 = vmatprep.subr.bf16.mxu0 0
      %1302 = vmatpush1.bf16.msra.mxu0 0
      %1303 = vmatprep.subr.bf16.mxu0 0
      %1304 = vmatpush1.bf16.msra.mxu0 0
      %1305 = vmatprep.mubr.bf16.mxu0 0
      %1306 = vmatmul.mubr.bf16.gmra.mrb[0].mxu0 %v1256
      %v1307 = vpop.f32.mrb[0].mxu0
      %v1308 = vadd.f32 0.0, %v1307
      %v1309 = vpop.f32.mrb[0].mxu0
      %v1310 = vpop.f32.mrb[0].mxu0
      %v1311 = vadd.f32 0.0, %v1310
      %v1312 = vpop.f32.mrb[0].mxu0
      %1313 = vmatprep.mubr.bf16.mxu0 0
      %1314 = vmatmul.mubr.bf16.gmra.mrb[0].mxu0 %v1259
      %v1315 = vpop.f32.mrb[0].mxu0
      %v1316 = vadd.f32 0.0, %v1315
      %v1317 = vpop.f32.mrb[0].mxu0
      %v1318 = vpop.f32.mrb[0].mxu0
      %v1319 = vadd.f32 0.0, %v1318
      %v1320 = vpop.f32.mrb[0].mxu0
      %1321 = vmatprep.mubr.bf16.mxu0 0
      %1322 = vmatmul.mubr.bf16.gmra.mrb[0].mxu0 %v1262
      %v1323 = vpop.f32.mrb[0].mxu0
      %v1324 = vadd.f32 0.0, %v1323
      %v1325 = vpop.f32.mrb[0].mxu0
      %v1326 = vpop.f32.mrb[0].mxu0
      %v1327 = vadd.f32 0.0, %v1326
      %v1328 = vpop.f32.mrb[0].mxu0
      %1329 = vmatprep.mubr.bf16.mxu0 0
      %1330 = vmatmul.mubr.bf16.gmra.mrb[0].mxu0 %v1265
      %v1331 = vpop.f32.mrb[0].mxu0
      %v1332 = vadd.f32 0.0, %v1331
      %v1333 = vpop.f32.mrb[0].mxu0
      %v1334 = vpop.f32.mrb[0].mxu0
      %v1335 = vadd.f32 0.0, %v1334
      %v1336 = vpop.f32.mrb[0].mxu0
      %1337 = vmatprep.mubr.bf16.mxu0 0
      %1338 = vmatmul.mubr.bf16.gmra.mrb[0].mxu0 %v1268
      %v1339 = vpop.f32.mrb[0].mxu0
      %v1340 = vadd.f32 0.0, %v1339
      %v1341 = vpop.f32.mrb[0].mxu0
      %v1342 = vpop.f32.mrb[0].mxu0
      %v1343 = vpop.f32.mrb[0].mxu0
      %1344 = vdwg.mxu0
      %v1345 = vadd.f32 %v1170, %v1308
      %v1346 = vadd.f32 %v1171, %v1311
      %v1347 = vadd.f32 %v1172, %v1316
      %v1348 = vadd.f32 %v1173, %v1319
      %v1349 = vadd.f32 %v1174, %v1324
      %v1350 = vadd.f32 %v1175, %v1327
      %v1351 = vadd.f32 %v1176, %v1332
      %v1352 = vadd.f32 %v1177, %v1335
      %v1353 = vadd.f32 %v1178, %v1340
      %v1354 = vld [vmem:[%s296 + $0x4] sm:$0xf]
      %v1355 = vld [vmem:[%s296 + $0x8] sm:$0xf]
      %v1356 = vld [vmem:[%s296 + $0xc] sm:$0xf]
      %v1357 = vld [vmem:[%s296 + $0x10] sm:$0xf]
      %v1358 = vld [vmem:[%s296 + $0x14] sm:$0xf]
      %v1359 = vld [vmem:[%s296 + $0x18] sm:$0xf]
      %v1360 = vld [vmem:[%s296 + $0x1c] sm:$0xf]
      %v1361 = vld [vmem:[%s296 + $0x20] sm:$0xf]
      %v1362 = vld [vmem:[%s296 + $0x24] sm:$0xf]
      %v1363 = vld [vmem:[%s296 + $0x28] sm:$0x1]
      %s1364 = scalar_lea.vmem %s4, 14
      %v1365 = vld [vmem:[%s1364] sm:$0x3]
      %v1376 = vunpack.c.l.b16 %v1354
      %v1377 = vunpack.c.l.b16 %v1355
      %v1378 = vunpack.c.l.b16 %v1356
      %v1379 = vunpack.c.l.b16 %v1357
      %v1380 = vunpack.c.l.b16 %v1358
      %v1381 = vunpack.c.l.b16 %v1359
      %v1382 = vunpack.c.l.b16 %v1360
      %v1383 = vunpack.c.l.b16 %v1361
      %v1384 = vunpack.c.l.b16 %v1362
      %v1385 = vunpack.c.l.b16 %v1363
      %v1386 = vpack.c.b16 %v1377, %v1376
      %v1387 = vpack.c.b16 %v1379, %v1378
      %v1388 = vpack.c.b16 %v1381, %v1380
      %v1389 = vpack.c.b16 %v1383, %v1382
      %v1390 = vpack.c.b16 %v1385, %v1384
      %v1392 = vshrl.u32 %v1386, 16
      %v1394 = vshll.u32 %v1386, 16
      %v1396 = vrot.slane %v1394, 1
      %v1397 = vor.u32 %v1392, %v1396
      %v1399 = vshll.u32 %v1387, 16
      %v1401 = vrot.slane %v1399, 1
      %v1402 = vsel %vm599, %v1397, %v1401
      %v1403 = vshrl.u32 %v1387, 16
      %v1405 = vor.u32 %v1403, %v1401
      %v1407 = vshll.u32 %v1388, 16
      %v1409 = vrot.slane %v1407, 1
      %v1410 = vsel %vm599, %v1405, %v1409
      %v1411 = vshrl.u32 %v1388, 16
      %v1413 = vor.u32 %v1411, %v1409
      %v1415 = vshll.u32 %v1389, 16
      %v1417 = vrot.slane %v1415, 1
      %v1418 = vsel %vm599, %v1413, %v1417
      %v1419 = vshrl.u32 %v1389, 16
      %v1421 = vor.u32 %v1419, %v1417
      %v1423 = vshll.u32 %v1390, 16
      %v1425 = vrot.slane %v1423, 1
      %v1426 = vsel %vm599, %v1421, %v1425
      %v1427 = vshrl.u32 %v1390, 16
      %v1429 = vor.u32 %v1427, %v1425
      %v1431 = vsel %vm357, %v1402, 0
      %v1434 = vsel %vm357, %v1410, 0
      %v1437 = vsel %vm357, %v1418, 0
      %v1440 = vsel %vm357, %v1426, 0
      %v1443 = vsel %vm357, %v1429, 0
      %v1446 = vsel %vm373, %v1365, 0
      %1448 = vmatprep.subr.bf16.mxu0 0
      %1449 = vmatpush1.bf16.msra.mxu0 %v1446
      %1450 = vmatprep.subr.bf16.mxu0 0
      %1451 = vmatpush1.bf16.msra.mxu0 0
      %1452 = vmatprep.subr.bf16.mxu0 0
      %1453 = vmatpush1.bf16.msra.mxu0 0
      %1454 = vmatprep.subr.bf16.mxu0 0
      %1455 = vmatpush1.bf16.msra.mxu0 0
      %1456 = vmatprep.subr.bf16.mxu0 0
      %1457 = vmatpush1.bf16.msra.mxu0 0
      %1458 = vmatprep.subr.bf16.mxu0 0
      %1459 = vmatpush1.bf16.msra.mxu0 0
      %1460 = vmatprep.subr.bf16.mxu0 0
      %1461 = vmatpush1.bf16.msra.mxu0 0
      %1462 = vmatprep.subr.bf16.mxu0 0
      %1463 = vmatpush1.bf16.msra.mxu0 0
      %1464 = vmatprep.subr.bf16.mxu0 0
      %1465 = vmatpush1.bf16.msra.mxu0 0
      %1466 = vmatprep.subr.bf16.mxu0 0
      %1467 = vmatpush1.bf16.msra.mxu0 0
      %1468 = vmatprep.subr.bf16.mxu0 0
      %1469 = vmatpush1.bf16.msra.mxu0 0
      %1470 = vmatprep.subr.bf16.mxu0 0
      %1471 = vmatpush1.bf16.msra.mxu0 0
      %1472 = vmatprep.subr.bf16.mxu0 0
      %1473 = vmatpush1.bf16.msra.mxu0 0
      %1474 = vmatprep.subr.bf16.mxu0 0
      %1475 = vmatpush1.bf16.msra.mxu0 0
      %1476 = vmatprep.subr.bf16.mxu0 0
      %1477 = vmatpush1.bf16.msra.mxu0 0
      %1478 = vmatprep.subr.bf16.mxu0 0
      %1479 = vmatpush1.bf16.msra.mxu0 0
      %1480 = vmatprep.mubr.bf16.mxu0 0
      %1481 = vmatmul.mubr.bf16.gmra.mrb[0].mxu0 %v1431
      %v1482 = vpop.f32.mrb[0].mxu0
      %v1483 = vadd.f32 0.0, %v1482
      %v1484 = vpop.f32.mrb[0].mxu0
      %v1485 = vpop.f32.mrb[0].mxu0
      %v1486 = vadd.f32 0.0, %v1485
      %v1487 = vpop.f32.mrb[0].mxu0
      %1488 = vmatprep.mubr.bf16.mxu0 0
      %1489 = vmatmul.mubr.bf16.gmra.mrb[0].mxu0 %v1434
      %v1490 = vpop.f32.mrb[0].mxu0
      %v1491 = vadd.f32 0.0, %v1490
      %v1492 = vpop.f32.mrb[0].mxu0
      %v1493 = vpop.f32.mrb[0].mxu0
      %v1494 = vadd.f32 0.0, %v1493
      %v1495 = vpop.f32.mrb[0].mxu0
      %1496 = vmatprep.mubr.bf16.mxu0 0
      %1497 = vmatmul.mubr.bf16.gmra.mrb[0].mxu0 %v1437
      %v1498 = vpop.f32.mrb[0].mxu0
      %v1499 = vadd.f32 0.0, %v1498
      %v1500 = vpop.f32.mrb[0].mxu0
      %v1501 = vpop.f32.mrb[0].mxu0
      %v1502 = vadd.f32 0.0, %v1501
      %v1503 = vpop.f32.mrb[0].mxu0
      %1504 = vmatprep.mubr.bf16.mxu0 0
      %1505 = vmatmul.mubr.bf16.gmra.mrb[0].mxu0 %v1440
      %v1506 = vpop.f32.mrb[0].mxu0
      %v1507 = vadd.f32 0.0, %v1506
      %v1508 = vpop.f32.mrb[0].mxu0
      %v1509 = vpop.f32.mrb[0].mxu0
      %v1510 = vadd.f32 0.0, %v1509
      %v1511 = vpop.f32.mrb[0].mxu0
      %1512 = vmatprep.mubr.bf16.mxu0 0
      %1513 = vmatmul.mubr.bf16.gmra.mrb[0].mxu0 %v1443
      %v1514 = vpop.f32.mrb[0].mxu0
      %v1515 = vadd.f32 0.0, %v1514
      %v1516 = vpop.f32.mrb[0].mxu0
      %v1517 = vpop.f32.mrb[0].mxu0
      %v1518 = vpop.f32.mrb[0].mxu0
      %1519 = vdwg.mxu0
      %v1520 = vadd.f32 %v1345, %v1483
      %v1521 = vadd.f32 %v1346, %v1486
      %v1522 = vadd.f32 %v1347, %v1491
      %v1523 = vadd.f32 %v1348, %v1494
      %v1524 = vadd.f32 %v1349, %v1499
      %v1525 = vadd.f32 %v1350, %v1502
      %v1526 = vadd.f32 %v1351, %v1507
      %v1527 = vadd.f32 %v1352, %v1510
      %v1528 = vadd.f32 %v1353, %v1515
      %v1529 = vld [vmem:[%s291 + $0x4] sm:$0xe]
      %s1530 = scalar_lea.vmem %s4, 16
      %v1531 = vld [vmem:[%s1530] sm:$0x3]
      %v1533 = vunpack.c.l.b16 %v1529
      %v1534 = vpack.c.b16 %v1202, %v1533
      %vm1535 = vcmask 1046528
      %v1536 = vrot.slane %v1534, 1
      %v1537 = vrot.slane %v1212, 1
      %v1538 = vsel %vm1535, %v1536, %v1537
      %v1539 = vrot.slane %v1213, 1
      %v1540 = vsel %vm1535, %v1537, %v1539
      %v1541 = vrot.slane %v1214, 1
      %v1542 = vsel %vm1535, %v1539, %v1541
      %v1543 = vrot.slane %v1215, 1
      %v1544 = vsel %vm1535, %v1541, %v1543
      %v1546 = vsel %vm357, %v1538, 0
      %v1549 = vsel %vm357, %v1540, 0
      %v1552 = vsel %vm357, %v1542, 0
      %v1555 = vsel %vm357, %v1544, 0
      %v1558 = vsel %vm357, %v1543, 0
      %v1561 = vsel %vm373, %v1531, 0
      %1563 = vmatprep.subr.bf16.mxu0 0
      %1564 = vmatpush1.bf16.msra.mxu0 %v1561
      %1565 = vmatprep.subr.bf16.mxu0 0
      %1566 = vmatpush1.bf16.msra.mxu0 0
      %1567 = vmatprep.subr.bf16.mxu0 0
      %1568 = vmatpush1.bf16.msra.mxu0 0
      %1569 = vmatprep.subr.bf16.mxu0 0
      %1570 = vmatpush1.bf16.msra.mxu0 0
      %1571 = vmatprep.subr.bf16.mxu0 0
      %1572 = vmatpush1.bf16.msra.mxu0 0
      %1573 = vmatprep.subr.bf16.mxu0 0
      %1574 = vmatpush1.bf16.msra.mxu0 0
      %1575 = vmatprep.subr.bf16.mxu0 0
      %1576 = vmatpush1.bf16.msra.mxu0 0
      %1577 = vmatprep.subr.bf16.mxu0 0
      %1578 = vmatpush1.bf16.msra.mxu0 0
      %1579 = vmatprep.subr.bf16.mxu0 0
      %1580 = vmatpush1.bf16.msra.mxu0 0
      %1581 = vmatprep.subr.bf16.mxu0 0
      %1582 = vmatpush1.bf16.msra.mxu0 0
      %1583 = vmatprep.subr.bf16.mxu0 0
      %1584 = vmatpush1.bf16.msra.mxu0 0
      %1585 = vmatprep.subr.bf16.mxu0 0
      %1586 = vmatpush1.bf16.msra.mxu0 0
      %1587 = vmatprep.subr.bf16.mxu0 0
      %1588 = vmatpush1.bf16.msra.mxu0 0
      %1589 = vmatprep.subr.bf16.mxu0 0
      %1590 = vmatpush1.bf16.msra.mxu0 0
      %1591 = vmatprep.subr.bf16.mxu0 0
      %1592 = vmatpush1.bf16.msra.mxu0 0
      %1593 = vmatprep.subr.bf16.mxu0 0
      %1594 = vmatpush1.bf16.msra.mxu0 0
      %1595 = vmatprep.mubr.bf16.mxu0 0
      %1596 = vmatmul.mubr.bf16.gmra.mrb[0].mxu0 %v1546
      %v1597 = vpop.f32.mrb[0].mxu0
      %v1598 = vadd.f32 0.0, %v1597
      %v1599 = vpop.f32.mrb[0].mxu0
      %v1600 = vpop.f32.mrb[0].mxu0
      %v1601 = vadd.f32 0.0, %v1600
      %v1602 = vpop.f32.mrb[0].mxu0
      %1603 = vmatprep.mubr.bf16.mxu0 0
      %1604 = vmatmul.mubr.bf16.gmra.mrb[0].mxu0 %v1549
      %v1605 = vpop.f32.mrb[0].mxu0
      %v1606 = vadd.f32 0.0, %v1605
      %v1607 = vpop.f32.mrb[0].mxu0
      %v1608 = vpop.f32.mrb[0].mxu0
      %v1609 = vadd.f32 0.0, %v1608
      %v1610 = vpop.f32.mrb[0].mxu0
      %1611 = vmatprep.mubr.bf16.mxu0 0
      %1612 = vmatmul.mubr.bf16.gmra.mrb[0].mxu0 %v1552
      %v1613 = vpop.f32.mrb[0].mxu0
      %v1614 = vadd.f32 0.0, %v1613
      %v1615 = vpop.f32.mrb[0].mxu0
      %v1616 = vpop.f32.mrb[0].mxu0
      %v1617 = vadd.f32 0.0, %v1616
      %v1618 = vpop.f32.mrb[0].mxu0
      %1619 = vmatprep.mubr.bf16.mxu0 0
      %1620 = vmatmul.mubr.bf16.gmra.mrb[0].mxu0 %v1555
      %v1621 = vpop.f32.mrb[0].mxu0
      %v1622 = vadd.f32 0.0, %v1621
      %v1623 = vpop.f32.mrb[0].mxu0
      %v1624 = vpop.f32.mrb[0].mxu0
      %v1625 = vadd.f32 0.0, %v1624
      %v1626 = vpop.f32.mrb[0].mxu0
      %1627 = vmatprep.mubr.bf16.mxu0 0
      %1628 = vmatmul.mubr.bf16.gmra.mrb[0].mxu0 %v1558
      %v1629 = vpop.f32.mrb[0].mxu0
      %v1630 = vadd.f32 0.0, %v1629
      %v1631 = vpop.f32.mrb[0].mxu0
      %v1632 = vpop.f32.mrb[0].mxu0
      %v1633 = vpop.f32.mrb[0].mxu0
      %1634 = vdwg.mxu0
      %v1635 = vadd.f32 %v1520, %v1598
      %v1636 = vadd.f32 %v1521, %v1601
      %v1637 = vadd.f32 %v1522, %v1606
      %v1638 = vadd.f32 %v1523, %v1609
      %v1639 = vadd.f32 %v1524, %v1614
      %v1640 = vadd.f32 %v1525, %v1617
      %v1641 = vadd.f32 %v1526, %v1622
      %v1642 = vadd.f32 %v1527, %v1625
      %v1643 = vadd.f32 %v1528, %v1630
      %v1644 = vld [vmem:[%s5] sm:$0x1]
      %v1646 = vlaneseq
      %v1647 = vshrl.u32 %v1646, 7
      %v1648 = vsub.s32 0, %v1647
      %v1649 = vrot.slane %v1644, %v1648
      %v1651 = vadd.f32 %v1635, %v1649
      %v1652 = vadd.f32 %v1636, %v1649
      %v1653 = vadd.f32 %v1637, %v1649
      %v1654 = vadd.f32 %v1638, %v1649
      %v1655 = vadd.f32 %v1639, %v1649
      %v1656 = vadd.f32 %v1640, %v1649
      %v1657 = vadd.f32 %v1641, %v1649
      %v1658 = vadd.f32 %v1642, %v1649
      %v1659 = vadd.f32 %v1643, %v1649
      %1660 = vst [vmem:[%s311] sm:$0xff] %v1651
      %1661 = vst [vmem:[%s311 + $0x8] sm:$0xff] %v1652
      %1662 = vst [vmem:[%s311 + $0x10] sm:$0xff] %v1653
      %1663 = vst [vmem:[%s311 + $0x18] sm:$0xff] %v1654
      %1664 = vst [vmem:[%s311 + $0x20] sm:$0xff] %v1655
      %1665 = vst [vmem:[%s311 + $0x28] sm:$0xff] %v1656
      %1666 = vst [vmem:[%s311 + $0x30] sm:$0xff] %v1657
      %1667 = vst [vmem:[%s311 + $0x38] sm:$0xff] %v1658
      %1668 = vst [vmem:[%s311 + $0x40] sm:$0xff] %v1659
      %p1669 = scmp.lt.s32.totalorder %s17, 1
      %s1670 = scalar_select %p1669, %s17, 1
      %s1671 = smul.addr %s1670, 9
      %s1672 = smul.addr %s1671, 8
      %s1673 = scalar_lea.vmem %s6, %s1672
      // Predicated region
      $region45: #{residual_block_forward.2} parent=43 // pred_check
        %p1674 = pneg %p181
      $region46: #{residual_block_forward.2} parent=43 // pred_check_branch
        %1676 = sbr.rel (%p1674) target = $region48
      $region47: #{residual_block_forward.2} parent=43 // pred_region
        _
      $region48: #{residual_block_forward.2} parent=43 // pred_fallthru
        _
    $region44: #{residual_block_forward.2} parent=5 // pred_fallthru
      _
    %p1677 = scmp.le.s32.totalorder 2, %s12
    // Predicated region
    $region49: #{residual_block_forward.2} parent=5 // pred_check
      %p1678 = pneg %p1677
    $region50: #{residual_block_forward.2} parent=5 // pred_check_branch
      %1680 = sbr.rel (%p1678) target = $region52
    $region51: #{residual_block_forward.2} parent=5 // pred_region
      %s1681 = ssub.s32 %s12, 2
      // Predicated region
      $region53: #{residual_block_forward.2} parent=51 // pred_check
        %p1682 = pneg %p187
      $region54: #{residual_block_forward.2} parent=51 // pred_check_branch
        %1684 = sbr.rel (%p1682) target = $region56
      $region55: #{residual_block_forward.2} parent=51 // pred_region
        %p1685 = scmp.lt.s32.totalorder %s18, 1
        %s1686 = scalar_select %p1685, %s18, 1
        %s1687 = smul.addr %s1686, 9
        %s1688 = smul.addr %s1687, 8
        %s1689 = scalar_lea.vmem %s6, %s1688
      $region56: #{residual_block_forward.2} parent=51 // pred_fallthru
        _
    $region52: #{residual_block_forward.2} parent=5 // pred_fallthru
      _
  $region6: #{residual_block_forward.2} parent=0 // loop_footer
    %s16 = sadd.s32 1, %s12
  $region7: #{residual_block_forward.2} parent=0 // loop_footer_branch
    %11 = sbr.rel target = $region3
  $region8: #{residual_block_forward.2} parent=0 // loop_exit
    _

// kernel: residual_block_forward.3
$region0: #{residual_block_forward.3}
  #allocation0 [shape = 'u32[]', space=smem, size = 0x4, offset = 0x4, fixed_abs, tag = 'smem constant byte address 0x4 - core index']
  #allocation1 [shape = 'u32[144,128]{1,0:T(1,128)}', space=vmem, size = 0x12000, scoped, tag = 'internal scratch']
  %s0 = inlined_call_operand.vmem [shape: bf16[2,102,8], index: 0, kind: input, shape index: {}]
  %s1 = inlined_call_operand.vmem [shape: bf16[9,8,128], index: 1, kind: input, shape index: {}]
  %s2 = inlined_call_operand.vmem [shape: f32[1,128], index: 2, kind: input, shape index: {}]
  %s3 = inlined_call_operand.vmem [shape: f32[2,80,128], index: 3, kind: input, shape index: {}]
  %s4 = inlined_call_operand.vmem [shape: f32[2,80,128], index: 4, kind: output, shape index: {}]
  %s5 = sld [smem:[#allocation0]]
  $region49: #{residual_block_forward.3} parent=0
    _
  %s7 = ssub.s32 1, %s5
  %s8 = scalar_select 0, %s7, %s5
  loop: start=0, step=1, limit=4
  $region2: #{residual_block_forward.3} parent=0 // loop_pre_header
    _
  $region3: #{residual_block_forward.3} parent=0 // loop_header
    %s10 = sphi 0, %s14
    %p11 = scmp.ge.s32.totalorder %s10, 4
    %s20 = sphi 0, %s22
    %s23 = sphi 0, %s20
    %s24 = sphi 0, %s23
    %s40 = sphi 0, %s24
    %s44 = sphi 0, %s44
    %s46 = sphi 0, %s44
    %s47 = sphi 0, %s46
    %s61 = sphi 0, %s47
    %s65 = sphi 0, %s65
    %s67 = sphi 0, %s65
    %s68 = sphi 0, %s67
    %s82 = sphi 0, %s68
    %s88 = sphi 0, %s90
    %s91 = sphi 0, %s88
    %s92 = sphi 0, %s91
    %s108 = sphi 0, %s92
    %s114 = sphi 0, %s116
    %s117 = sphi 0, %s114
    %s118 = sphi 0, %s117
    %s134 = sphi 0, %s118
  $region4: #{residual_block_forward.3} parent=0 // loop_header_branch
    %13 = sbr.rel (%p11) target = $region8
  $region5: #{residual_block_forward.3} parent=0 // loop_body
    %s15 = ssub.s32 %s10, 1
    %s16 = ssub.s32 %s10, 2
    %s17 = sadd.s32 %s10, 1
    %s18 = ssub.s32 %s10, %s17
    %p19 = scmp.eq.s32.totalorder %s18, 0
    %s21 = sadd.s32 %s20, 1
    %s22 = scalar_select %p19, %s20, %s21
    %p25 = pneg %p19
    %p26 = scmp.eq.s32.totalorder %s10, 1
    %p27 = por %p25, %p26
    %p28 = scmp.ne.s32.totalorder %s20, %s23
    %p29 = scmp.eq.s32.totalorder %s10, 0
    %p30 = por %p28, %p29
    %p31 = scmp.ne.s32.totalorder %s20, %s23
    %p32 = scmp.eq.s32.totalorder %s15, 1
    %p33 = por %p31, %p32
    %p34 = scmp.ne.s32.totalorder %s23, %s24
    %p35 = scmp.eq.s32.totalorder %s15, 0
    %p36 = por %p34, %p35
    %p37 = scmp.ne.s32.totalorder %s23, %s24
    %p38 = scmp.eq.s32.totalorder %s16, 1
    %p39 = por %p37, %p38
    %p41 = scmp.ne.s32.totalorder %s24, %s40
    %p42 = scmp.eq.s32.totalorder %s16, 0
    %p43 = por %p41, %p42
    %s45 = sadd.s32 %s44, 1
    %p48 = scmp.eq.s32.totalorder %s10, 1
    %p49 = scmp.ne.s32.totalorder %s44, %s46
    %p50 = scmp.eq.s32.totalorder %s10, 0
    %p51 = por %p49, %p50
    %p52 = scmp.ne.s32.totalorder %s44, %s46
    %p53 = scmp.eq.s32.totalorder %s15, 1
    %p54 = por %p52, %p53
    %p55 = scmp.ne.s32.totalorder %s46, %s47
    %p56 = scmp.eq.s32.totalorder %s15, 0
    %p57 = por %p55, %p56
    %p58 = scmp.ne.s32.totalorder %s46, %s47
    %p59 = scmp.eq.s32.totalorder %s16, 1
    %p60 = por %p58, %p59
    %p62 = scmp.ne.s32.totalorder %s47, %s61
    %p63 = scmp.eq.s32.totalorder %s16, 0
    %p64 = por %p62, %p63
    %s66 = sadd.s32 %s65, 1
    %p69 = scmp.eq.s32.totalorder %s10, 1
    %p70 = scmp.ne.s32.totalorder %s65, %s67
    %p71 = scmp.eq.s32.totalorder %s10, 0
    %p72 = por %p70, %p71
    %p73 = scmp.ne.s32.totalorder %s65, %s67
    %p74 = scmp.eq.s32.totalorder %s15, 1
    %p75 = por %p73, %p74
    %p76 = scmp.ne.s32.totalorder %s67, %s68
    %p77 = scmp.eq.s32.totalorder %s15, 0
    %p78 = por %p76, %p77
    %p79 = scmp.ne.s32.totalorder %s67, %s68
    %p80 = scmp.eq.s32.totalorder %s16, 1
    %p81 = por %p79, %p80
    %p83 = scmp.ne.s32.totalorder %s68, %s82
    %p84 = scmp.eq.s32.totalorder %s16, 0
    %p85 = por %p83, %p84
    %s86 = ssub.s32 %s10, %s17
    %p87 = scmp.eq.s32.totalorder %s86, 0
    %s89 = sadd.s32 %s88, 1
    %s90 = scalar_select %p87, %s88, %s89
    %p93 = pneg %p87
    %p94 = scmp.eq.s32.totalorder %s10, 1
    %p95 = por %p93, %p94
    %p96 = scmp.ne.s32.totalorder %s88, %s91
    %p97 = scmp.eq.s32.totalorder %s10, 0
    %p98 = por %p96, %p97
    %p99 = scmp.ne.s32.totalorder %s88, %s91
    %p100 = scmp.eq.s32.totalorder %s15, 1
    %p101 = por %p99, %p100
    %p102 = scmp.ne.s32.totalorder %s91, %s92
    %p103 = scmp.eq.s32.totalorder %s15, 0
    %p104 = por %p102, %p103
    %p105 = scmp.ne.s32.totalorder %s91, %s92
    %p106 = scmp.eq.s32.totalorder %s16, 1
    %p107 = por %p105, %p106
    %p109 = scmp.ne.s32.totalorder %s92, %s108
    %p110 = scmp.eq.s32.totalorder %s16, 0
    %p111 = por %p109, %p110
    %s112 = ssub.s32 %s10, %s17
    %p113 = scmp.eq.s32.totalorder %s112, 0
    %s115 = sadd.s32 %s114, 1
    %s116 = scalar_select %p113, %s114, %s115
    %p119 = pneg %p113
    %p120 = scmp.eq.s32.totalorder %s10, 1
    %p121 = por %p119, %p120
    %p122 = scmp.ne.s32.totalorder %s114, %s117
    %p123 = scmp.eq.s32.totalorder %s10, 0
    %p124 = por %p122, %p123
    %p125 = scmp.ne.s32.totalorder %s114, %s117
    %p126 = scmp.eq.s32.totalorder %s15, 1
    %p127 = por %p125, %p126
    %p128 = scmp.ne.s32.totalorder %s117, %s118
    %p129 = scmp.eq.s32.totalorder %s15, 0
    %p130 = por %p128, %p129
    %p131 = scmp.ne.s32.totalorder %s117, %s118
    %p132 = scmp.eq.s32.totalorder %s16, 1
    %p133 = por %p131, %p132
    %p135 = scmp.ne.s32.totalorder %s118, %s134
    %p136 = scmp.eq.s32.totalorder %s16, 0
    %p137 = por %p135, %p136
    %p138 = scmp.le.s32.totalorder 1, %s10
    %p139 = scmp.lt.s32.totalorder %s10, 3
    %p140 = pnand %p138, %p139
    %p141 = pneg %p140
    // Predicated region
    $region9: #{residual_block_forward.3} parent=5 // pred_check
      _
    $region10: #{residual_block_forward.3} parent=5 // pred_check_branch
      %143 = sbr.rel (%p140) target = $region12
    $region11: #{residual_block_forward.3} parent=5 // pred_region
      %s144 = ssub.s32 %s10, 1
      // Predicated region
      $region13: #{residual_block_forward.3} parent=11 // pred_check
        %p145 = pneg %p57
      $region14: #{residual_block_forward.3} parent=11 // pred_check_branch
        %147 = sbr.rel (%p145) target = $region16
      $region15: #{residual_block_forward.3} parent=11 // pred_region
        _
      $region16: #{residual_block_forward.3} parent=11 // pred_fallthru
        _
      // Predicated region
      $region17: #{residual_block_forward.3} parent=11 // pred_check
        %p148 = pneg %p78
      $region18: #{residual_block_forward.3} parent=11 // pred_check_branch
        %150 = sbr.rel (%p148) target = $region20
      $region19: #{residual_block_forward.3} parent=11 // pred_region
        _
      $region20: #{residual_block_forward.3} parent=11 // pred_fallthru
        _
    $region12: #{residual_block_forward.3} parent=5 // pred_fallthru
      _
    %p151 = scmp.lt.s32.totalorder %s10, 2
    // Predicated region
    $region21: #{residual_block_forward.3} parent=5 // pred_check
      %p152 = pneg %p151
    $region22: #{residual_block_forward.3} parent=5 // pred_check_branch
      %154 = sbr.rel (%p152) target = $region24
    $region23: #{residual_block_forward.3} parent=5 // pred_region
      // Predicated region
      $region25: #{residual_block_forward.3} parent=23 // pred_check
        %p155 = pneg %p30
      $region26: #{residual_block_forward.3} parent=23 // pred_check_branch
        %157 = sbr.rel (%p155) target = $region28
      $region27: #{residual_block_forward.3} parent=23 // pred_region
        %p158 = scmp.lt.s32.totalorder %s10, 1
        %s159 = scalar_select %p158, %s10, 1
        %s160 = smul.addr %s159, 13
        %s161 = smul.addr %s160, 4
        %s162 = scalar_lea.vmem %s0, %s161
      $region28: #{residual_block_forward.3} parent=23 // pred_fallthru
        _
      // Predicated region
      $region29: #{residual_block_forward.3} parent=23 // pred_check
        %p163 = pneg %p98
      $region30: #{residual_block_forward.3} parent=23 // pred_check_branch
        %165 = sbr.rel (%p163) target = $region32
      $region31: #{residual_block_forward.3} parent=23 // pred_region
        %p166 = scmp.lt.s32.totalorder %s10, 1
        %s167 = scalar_select %p166, %s10, 1
        %s168 = smul.addr %s167, 10
        %s169 = smul.addr %s168, 8
        %s170 = scalar_lea.vmem %s3, %s169
      $region32: #{residual_block_forward.3} parent=23 // pred_fallthru
        _
    $region24: #{residual_block_forward.3} parent=5 // pred_fallthru
      _
    %p171 = scmp.le.s32.totalorder 1, %s10
    %p172 = scmp.lt.s32.totalorder %s10, 3
    %p173 = pnand %p171, %p172
    %p174 = pneg %p173
    // Predicated region
    $region33: #{residual_block_forward.3} parent=5 // pred_check
      _
    $region34: #{residual_block_forward.3} parent=5 // pred_check_branch
      %176 = sbr.rel (%p173) target = $region36
    $region35: #{residual_block_forward.3} parent=5 // pred_region
      %s177 = ssub.s32 %s10, 1
      %p178 = scmp.lt.s32.totalorder %s15, 1
      %s179 = scalar_select %p178, %s15, 1
      %s180 = smul.addr %s179, 13
      %s181 = smul.addr %s180, 4
      %s182 = scalar_lea.vmem %s0, %s181
      %p183 = pneg %p36
      %p184 = pneg %p33
      %p185 = pneg %p57
      %p186 = pneg %p54
      %p187 = pneg %p78
      %p188 = pneg %p75
      %p189 = scmp.lt.s32.totalorder %s15, 1
      %s190 = scalar_select %p189, %s15, 1
      %s191 = smul.addr %s190, 10
      %s192 = smul.addr %s191, 8
      %s193 = scalar_lea.vmem %s3, %s192
      %p194 = pneg %p104
      %p195 = pneg %p101
      %p196 = pneg %p130
      %p197 = pneg %p127
      %p198 = scmp.lt.s32.totalorder %s15, 1
      %s199 = scalar_select %p198, %s15, 1
      %s200 = smul.addr %s199, 10
      %s201 = smul.addr %s200, 8
      %s202 = scalar_lea.vmem %s4, %s201
      %p203 = scmp.lt.s32.totalorder %s15, 1
      %s204 = scalar_select %p203, %s15, 1
      %s205 = smul.addr %s204, 13
      %s206 = smul.addr %s205, 4
      %s207 = scalar_lea.vmem %s0, %s206
      %p208 = scmp.lt.s32.totalorder %s15, 1
      %s209 = scalar_select %p208, %s15, 1
      %s210 = smul.addr %s209, 10
      %s211 = smul.addr %s210, 8
      %s212 = scalar_lea.vmem %s3, %s211
      %p213 = scmp.lt.s32.totalorder %s15, 1
      %s214 = scalar_select %p213, %s15, 1
      %s215 = smul.addr %s214, 10
      %s216 = smul.addr %s215, 8
      %s217 = scalar_lea.vmem %s4, %s216
      %v219 = vld [vmem:[%s207] sm:$0xf]
      %v220 = vld [vmem:[%s207 + $0x4] sm:$0xf]
      %v221 = vld [vmem:[%s207 + $0x8] sm:$0xf]
      %v222 = vld [vmem:[%s207 + $0xc] sm:$0xf]
      %v223 = vld [vmem:[%s207 + $0x10] sm:$0xf]
      %v224 = vld [vmem:[%s207 + $0x14] sm:$0xf]
      %v225 = vld [vmem:[%s207 + $0x18] sm:$0xf]
      %v226 = vld [vmem:[%s207 + $0x1c] sm:$0xf]
      %v227 = vld [vmem:[%s207 + $0x20] sm:$0xf]
      %v228 = vld [vmem:[%s207 + $0x24] sm:$0xf]
      %v229 = vld [vmem:[%s1] sm:$0xf]
      %v230 = vld [vmem:[%s207 + $0x28] sm:$0x1]
      %s231 = scalar_lea.vmem %s1, 4
      %v232 = vld [vmem:[%s231] sm:$0xf]
      %v244 = vunpack.c.l.b16 %v219
      %v245 = vunpack.c.l.b16 %v220
      %v246 = vunpack.c.l.b16 %v221
      %v247 = vunpack.c.l.b16 %v222
      %v248 = vunpack.c.l.b16 %v223
      %v249 = vunpack.c.l.b16 %v224
      %v250 = vunpack.c.l.b16 %v225
      %v251 = vunpack.c.l.b16 %v226
      %v252 = vunpack.c.l.b16 %v227
      %v253 = vunpack.c.l.b16 %v228
      %v254 = vunpack.c.l.b16 %v230
      %v255 = vpack.c.b16 %v245, %v244
      %v256 = vpack.c.b16 %v247, %v246
      %v257 = vpack.c.b16 %v249, %v248
      %v258 = vpack.c.b16 %v251, %v250
      %v259 = vpack.c.b16 %v253, %v252
      %v260 = vpack.c.b16 %v254, %v254
      %vm261 = vsmask.f32 7424
      %v263 = vshrl.u32 %v255, 16
      %v265 = vshll.u32 %v255, 16
      %v267 = vrot.slane %v265, 1
      %v268 = vor.u32 %v263, %v267
      %v270 = vshll.u32 %v256, 16
      %v272 = vrot.slane %v270, 1
      %v273 = vsel %vm261, %v268, %v272
      %v274 = vshrl.u32 %v256, 16
      %v276 = vor.u32 %v274, %v272
      %v278 = vshll.u32 %v257, 16
      %v280 = vrot.slane %v278, 1
      %v281 = vsel %vm261, %v276, %v280
      %v282 = vshrl.u32 %v257, 16
      %v284 = vor.u32 %v282, %v280
      %v286 = vshll.u32 %v258, 16
      %v288 = vrot.slane %v286, 1
      %v289 = vsel %vm261, %v284, %v288
      %v290 = vshrl.u32 %v258, 16
      %v292 = vor.u32 %v290, %v288
      %v294 = vshll.u32 %v259, 16
      %v296 = vrot.slane %v294, 1
      %v297 = vsel %vm261, %v292, %v296
      %v298 = vshrl.u32 %v259, 16
      %v300 = vor.u32 %v298, %v296
      %v302 = vshll.u32 %v260, 16
      %v304 = vrot.slane %v302, 1
      %v305 = vsel %vm261, %v300, %v304
      %vm306 = vcmask 64512
      %v308 = vsel %vm306, %v273, 0
      %v311 = vsel %vm306, %v281, 0
      %v314 = vsel %vm306, %v289, 0
      %v317 = vsel %vm306, %v297, 0
      %v320 = vsel %vm306, %v305, 0
      %vm322 = vcmask 1043456
      %v324 = vsel %vm322, %v232, 0
      %326 = vmatprep.subr.bf16.mxu0 0
      %327 = vmatpush1.bf16.msra.mxu0 %v324
      %328 = vmatprep.subr.bf16.mxu0 0
      %329 = vmatpush1.bf16.msra.mxu0 0
      %330 = vmatprep.subr.bf16.mxu0 0
      %331 = vmatpush1.bf16.msra.mxu0 0
      %332 = vmatprep.subr.bf16.mxu0 0
      %333 = vmatpush1.bf16.msra.mxu0 0
      %334 = vmatprep.subr.bf16.mxu0 0
      %335 = vmatpush1.bf16.msra.mxu0 0
      %336 = vmatprep.subr.bf16.mxu0 0
      %337 = vmatpush1.bf16.msra.mxu0 0
      %338 = vmatprep.subr.bf16.mxu0 0
      %339 = vmatpush1.bf16.msra.mxu0 0
      %340 = vmatprep.subr.bf16.mxu0 0
      %341 = vmatpush1.bf16.msra.mxu0 0
      %342 = vmatprep.subr.bf16.mxu0 0
      %343 = vmatpush1.bf16.msra.mxu0 0
      %344 = vmatprep.subr.bf16.mxu0 0
      %345 = vmatpush1.bf16.msra.mxu0 0
      %346 = vmatprep.subr.bf16.mxu0 0
      %347 = vmatpush1.bf16.msra.mxu0 0
      %348 = vmatprep.subr.bf16.mxu0 0
      %349 = vmatpush1.bf16.msra.mxu0 0
      %350 = vmatprep.subr.bf16.mxu0 0
      %351 = vmatpush1.bf16.msra.mxu0 0
      %352 = vmatprep.subr.bf16.mxu0 0
      %353 = vmatpush1.bf16.msra.mxu0 0
      %354 = vmatprep.subr.bf16.mxu0 0
      %355 = vmatpush1.bf16.msra.mxu0 0
      %356 = vmatprep.subr.bf16.mxu0 0
      %357 = vmatpush1.bf16.msra.mxu0 0
      %358 = vmatprep.mubr.bf16.mxu0 0
      %359 = vmatmul.mubr.bf16.gmra.mrb[0].mxu0 %v308
      %v360 = vpop.f32.mrb[0].mxu0
      %v361 = vadd.f32 0.0, %v360
      %v362 = vpop.f32.mrb[0].mxu0
      %v363 = vpop.f32.mrb[0].mxu0
      %v364 = vadd.f32 0.0, %v363
      %v365 = vpop.f32.mrb[0].mxu0
      %366 = vmatprep.mubr.bf16.mxu0 0
      %367 = vmatmul.mubr.bf16.gmra.mrb[0].mxu0 %v311
      %v368 = vpop.f32.mrb[0].mxu0
      %v369 = vadd.f32 0.0, %v368
      %v370 = vpop.f32.mrb[0].mxu0
      %v371 = vpop.f32.mrb[0].mxu0
      %v372 = vadd.f32 0.0, %v371
      %v373 = vpop.f32.mrb[0].mxu0
      %374 = vmatprep.mubr.bf16.mxu0 0
      %375 = vmatmul.mubr.bf16.gmra.mrb[0].mxu0 %v314
      %v376 = vpop.f32.mrb[0].mxu0
      %v377 = vadd.f32 0.0, %v376
      %v378 = vpop.f32.mrb[0].mxu0
      %v379 = vpop.f32.mrb[0].mxu0
      %v380 = vadd.f32 0.0, %v379
      %v381 = vpop.f32.mrb[0].mxu0
      %382 = vmatprep.mubr.bf16.mxu0 0
      %383 = vmatmul.mubr.bf16.gmra.mrb[0].mxu0 %v317
      %v384 = vpop.f32.mrb[0].mxu0
      %v385 = vadd.f32 0.0, %v384
      %v386 = vpop.f32.mrb[0].mxu0
      %v387 = vpop.f32.mrb[0].mxu0
      %v388 = vadd.f32 0.0, %v387
      %v389 = vpop.f32.mrb[0].mxu0
      %390 = vmatprep.mubr.bf16.mxu0 0
      %391 = vmatmul.mubr.bf16.gmra.mrb[0].mxu0 %v320
      %v392 = vpop.f32.mrb[0].mxu0
      %v393 = vadd.f32 0.0, %v392
      %v394 = vpop.f32.mrb[0].mxu0
      %v395 = vpop.f32.mrb[0].mxu0
      %v396 = vadd.f32 0.0, %v395
      %v397 = vpop.f32.mrb[0].mxu0
      %398 = vdwg.mxu0
      %v399 = vsel %vm306, %v255, 0
      %v401 = vsel %vm306, %v256, 0
      %v403 = vsel %vm306, %v257, 0
      %v405 = vsel %vm306, %v258, 0
      %v407 = vsel %vm306, %v259, 0
      %v410 = vsel %vm322, %v229, 0
      %412 = vmatprep.subr.bf16.mxu0 0
      %413 = vmatpush1.bf16.msra.mxu0 %v410
      %414 = vmatprep.subr.bf16.mxu0 0
      %415 = vmatpush1.bf16.msra.mxu0 0
      %416 = vmatprep.subr.bf16.mxu0 0
      %417 = vmatpush1.bf16.msra.mxu0 0
      %418 = vmatprep.subr.bf16.mxu0 0
      %419 = vmatpush1.bf16.msra.mxu0 0
      %420 = vmatprep.subr.bf16.mxu0 0
      %421 = vmatpush1.bf16.msra.mxu0 0
      %422 = vmatprep.subr.bf16.mxu0 0
      %423 = vmatpush1.bf16.msra.mxu0 0
      %424 = vmatprep.subr.bf16.mxu0 0
      %425 = vmatpush1.bf16.msra.mxu0 0
      %426 = vmatprep.subr.bf16.mxu0 0
      %427 = vmatpush1.bf16.msra.mxu0 0
      %428 = vmatprep.subr.bf16.mxu0 0
      %429 = vmatpush1.bf16.msra.mxu0 0
      %430 = vmatprep.subr.bf16.mxu0 0
      %431 = vmatpush1.bf16.msra.mxu0 0
      %432 = vmatprep.subr.bf16.mxu0 0
      %433 = vmatpush1.bf16.msra.mxu0 0
      %434 = vmatprep.subr.bf16.mxu0 0
      %435 = vmatpush1.bf16.msra.mxu0 0
      %436 = vmatprep.subr.bf16.mxu0 0
      %437 = vmatpush1.bf16.msra.mxu0 0
      %438 = vmatprep.subr.bf16.mxu0 0
      %439 = vmatpush1.bf16.msra.mxu0 0
      %440 = vmatprep.subr.bf16.mxu0 0
      %441 = vmatpush1.bf16.msra.mxu0 0
      %442 = vmatprep.subr.bf16.mxu0 0
      %443 = vmatpush1.bf16.msra.mxu0 0
      %444 = vmatprep.mubr.bf16.mxu0 0
      %445 = vmatmul.mubr.bf16.gmra.mrb[0].mxu0 %v399
      %v446 = vpop.f32.mrb[0].mxu0
      %v447 = vadd.f32 %v361, %v446
      %v448 = vpop.f32.mrb[0].mxu0
      %v449 = vpop.f32.mrb[0].mxu0
      %v450 = vadd.f32 %v364, %v449
      %v451 = vpop.f32.mrb[0].mxu0
      %452 = vmatprep.mubr.bf16.mxu0 0
      %453 = vmatmul.mubr.bf16.gmra.mrb[0].mxu0 %v401
      %v454 = vpop.f32.mrb[0].mxu0
      %v455 = vadd.f32 %v369, %v454
      %v456 = vpop.f32.mrb[0].mxu0
      %v457 = vpop.f32.mrb[0].mxu0
      %v458 = vadd.f32 %v372, %v457
      %v459 = vpop.f32.mrb[0].mxu0
      %460 = vmatprep.mubr.bf16.mxu0 0
      %461 = vmatmul.mubr.bf16.gmra.mrb[0].mxu0 %v403
      %v462 = vpop.f32.mrb[0].mxu0
      %v463 = vadd.f32 %v377, %v462
      %v464 = vpop.f32.mrb[0].mxu0
      %v465 = vpop.f32.mrb[0].mxu0
      %v466 = vadd.f32 %v380, %v465
      %v467 = vpop.f32.mrb[0].mxu0
      %468 = vmatprep.mubr.bf16.mxu0 0
      %469 = vmatmul.mubr.bf16.gmra.mrb[0].mxu0 %v405
      %v470 = vpop.f32.mrb[0].mxu0
      %v471 = vadd.f32 %v385, %v470
      %v472 = vpop.f32.mrb[0].mxu0
      %v473 = vpop.f32.mrb[0].mxu0
      %v474 = vadd.f32 %v388, %v473
      %v475 = vpop.f32.mrb[0].mxu0
      %476 = vmatprep.mubr.bf16.mxu0 0
      %477 = vmatmul.mubr.bf16.gmra.mrb[0].mxu0 %v407
      %v478 = vpop.f32.mrb[0].mxu0
      %v479 = vadd.f32 %v393, %v478
      %v480 = vpop.f32.mrb[0].mxu0
      %v481 = vpop.f32.mrb[0].mxu0
      %v482 = vadd.f32 %v396, %v481
      %v483 = vpop.f32.mrb[0].mxu0
      %484 = vdwg.mxu0
      %v485 = vld [vmem:[%s207] sm:$0xe]
      %s486 = scalar_lea.vmem %s1, 8
      %v487 = vld [vmem:[%s486] sm:$0xf]
      %v489 = vunpack.c.l.b16 %v485
      %v490 = vpack.c.b16 %v245, %v489
      %vm491 = vcmask 1046528
      %v492 = vrot.slane %v490, 1
      %v493 = vrot.slane %v256, 1
      %v494 = vsel %vm491, %v492, %v493
      %v495 = vrot.slane %v257, 1
      %v496 = vsel %vm491, %v493, %v495
      %v497 = vrot.slane %v258, 1
      %v498 = vsel %vm491, %v495, %v497
      %v499 = vrot.slane %v259, 1
      %v500 = vsel %vm491, %v497, %v499
      %v501 = vrot.slane %v260, 1
      %v502 = vsel %vm491, %v499, %v501
      %v504 = vsel %vm306, %v494, 0
      %v507 = vsel %vm306, %v496, 0
      %v510 = vsel %vm306, %v498, 0
      %v513 = vsel %vm306, %v500, 0
      %v516 = vsel %vm306, %v502, 0
      %v519 = vsel %vm322, %v487, 0
      %521 = vmatprep.subr.bf16.mxu0 0
      %522 = vmatpush1.bf16.msra.mxu0 %v519
      %523 = vmatprep.subr.bf16.mxu0 0
      %524 = vmatpush1.bf16.msra.mxu0 0
      %525 = vmatprep.subr.bf16.mxu0 0
      %526 = vmatpush1.bf16.msra.mxu0 0
      %527 = vmatprep.subr.bf16.mxu0 0
      %528 = vmatpush1.bf16.msra.mxu0 0
      %529 = vmatprep.subr.bf16.mxu0 0
      %530 = vmatpush1.bf16.msra.mxu0 0
      %531 = vmatprep.subr.bf16.mxu0 0
      %532 = vmatpush1.bf16.msra.mxu0 0
      %533 = vmatprep.subr.bf16.mxu0 0
      %534 = vmatpush1.bf16.msra.mxu0 0
      %535 = vmatprep.subr.bf16.mxu0 0
      %536 = vmatpush1.bf16.msra.mxu0 0
      %537 = vmatprep.subr.bf16.mxu0 0
      %538 = vmatpush1.bf16.msra.mxu0 0
      %539 = vmatprep.subr.bf16.mxu0 0
      %540 = vmatpush1.bf16.msra.mxu0 0
      %541 = vmatprep.subr.bf16.mxu0 0
      %542 = vmatpush1.bf16.msra.mxu0 0
      %543 = vmatprep.subr.bf16.mxu0 0
      %544 = vmatpush1.bf16.msra.mxu0 0
      %545 = vmatprep.subr.bf16.mxu0 0
      %546 = vmatpush1.bf16.msra.mxu0 0
      %547 = vmatprep.subr.bf16.mxu0 0
      %548 = vmatpush1.bf16.msra.mxu0 0
      %549 = vmatprep.subr.bf16.mxu0 0
      %550 = vmatpush1.bf16.msra.mxu0 0
      %551 = vmatprep.subr.bf16.mxu0 0
      %552 = vmatpush1.bf16.msra.mxu0 0
      %553 = vmatprep.mubr.bf16.mxu0 0
      %554 = vmatmul.mubr.bf16.gmra.mrb[0].mxu0 %v504
      %v555 = vpop.f32.mrb[0].mxu0
      %v556 = vadd.f32 0.0, %v555
      %v557 = vpop.f32.mrb[0].mxu0
      %v558 = vpop.f32.mrb[0].mxu0
      %v559 = vadd.f32 0.0, %v558
      %v560 = vpop.f32.mrb[0].mxu0
      %561 = vmatprep.mubr.bf16.mxu0 0
      %562 = vmatmul.mubr.bf16.gmra.mrb[0].mxu0 %v507
      %v563 = vpop.f32.mrb[0].mxu0
      %v564 = vadd.f32 0.0, %v563
      %v565 = vpop.f32.mrb[0].mxu0
      %v566 = vpop.f32.mrb[0].mxu0
      %v567 = vadd.f32 0.0, %v566
      %v568 = vpop.f32.mrb[0].mxu0
      %569 = vmatprep.mubr.bf16.mxu0 0
      %570 = vmatmul.mubr.bf16.gmra.mrb[0].mxu0 %v510
      %v571 = vpop.f32.mrb[0].mxu0
      %v572 = vadd.f32 0.0, %v571
      %v573 = vpop.f32.mrb[0].mxu0
      %v574 = vpop.f32.mrb[0].mxu0
      %v575 = vadd.f32 0.0, %v574
      %v576 = vpop.f32.mrb[0].mxu0
      %577 = vmatprep.mubr.bf16.mxu0 0
      %578 = vmatmul.mubr.bf16.gmra.mrb[0].mxu0 %v513
      %v579 = vpop.f32.mrb[0].mxu0
      %v580 = vadd.f32 0.0, %v579
      %v581 = vpop.f32.mrb[0].mxu0
      %v582 = vpop.f32.mrb[0].mxu0
      %v583 = vadd.f32 0.0, %v582
      %v584 = vpop.f32.mrb[0].mxu0
      %585 = vmatprep.mubr.bf16.mxu0 0
      %586 = vmatmul.mubr.bf16.gmra.mrb[0].mxu0 %v516
      %v587 = vpop.f32.mrb[0].mxu0
      %v588 = vadd.f32 0.0, %v587
      %v589 = vpop.f32.mrb[0].mxu0
      %v590 = vpop.f32.mrb[0].mxu0
      %v591 = vadd.f32 0.0, %v590
      %v592 = vpop.f32.mrb[0].mxu0
      %593 = vdwg.mxu0
      %v594 = vadd.f32 %v447, %v556
      %v595 = vadd.f32 %v450, %v559
      %v596 = vadd.f32 %v455, %v564
      %v597 = vadd.f32 %v458, %v567
      %v598 = vadd.f32 %v463, %v572
      %v599 = vadd.f32 %v466, %v575
      %v600 = vadd.f32 %v471, %v580
      %v601 = vadd.f32 %v474, %v583
      %v602 = vadd.f32 %v479, %v588
      %v603 = vadd.f32 %v482, %v591
      %v604 = vld [vmem:[%s207 + $0x4] sm:$0xe]
      %v605 = vld [vmem:[%s207 + $0x8] sm:$0xf]
      %v606 = vld [vmem:[%s207 + $0xc] sm:$0xf]
      %v607 = vld [vmem:[%s207 + $0x10] sm:$0xf]
      %v608 = vld [vmem:[%s207 + $0x14] sm:$0xf]
      %v609 = vld [vmem:[%s207 + $0x18] sm:$0xf]
      %v610 = vld [vmem:[%s207 + $0x1c] sm:$0xf]
      %v611 = vld [vmem:[%s207 + $0x20] sm:$0xf]
      %v612 = vld [vmem:[%s207 + $0x24] sm:$0xf]
      %v613 = vld [vmem:[%s207 + $0x28] sm:$0xf]
      %v614 = vld [vmem:[%s207 + $0x2c] sm:$0x1]
      %s615 = scalar_lea.vmem %s1, 12
      %v616 = vld [vmem:[%s615] sm:$0xf]
      %v628 = vunpack.c.l.b16 %v604
      %v629 = vunpack.c.l.b16 %v605
      %v630 = vunpack.c.l.b16 %v606
      %v631 = vunpack.c.l.b16 %v607
      %v632 = vunpack.c.l.b16 %v608
      %v633 = vunpack.c.l.b16 %v609
      %v634 = vunpack.c.l.b16 %v610
      %v635 = vunpack.c.l.b16 %v611
      %v636 = vunpack.c.l.b16 %v612
      %v637 = vunpack.c.l.b16 %v613
      %v638 = vunpack.c.l.b16 %v614
      %v639 = vpack.c.b16 %v629, %v628
      %v640 = vpack.c.b16 %v631, %v630
      %v641 = vpack.c.b16 %v633, %v632
      %v642 = vpack.c.b16 %v635, %v634
      %v643 = vpack.c.b16 %v637, %v636
      %v644 = vpack.c.b16 %v638, %v638
      %v645 = vrot.slane %v639, 1
      %v646 = vrot.slane %v640, 1
      %v647 = vsel %vm491, %v645, %v646
      %v648 = vrot.slane %v641, 1
      %v649 = vsel %vm491, %v646, %v648
      %v650 = vrot.slane %v642, 1
      %v651 = vsel %vm491, %v648, %v650
      %v652 = vrot.slane %v643, 1
      %v653 = vsel %vm491, %v650, %v652
      %v654 = vrot.slane %v644, 1
      %v655 = vsel %vm491, %v652, %v654
      %v657 = vsel %vm306, %v647, 0
      %v660 = vsel %vm306, %v649, 0
      %v663 = vsel %vm306, %v651, 0
      %v666 = vsel %vm306, %v653, 0
      %v669 = vsel %vm306, %v655, 0
      %v672 = vsel %vm322, %v616, 0
      %674 = vmatprep.subr.bf16.mxu0 0
      %675 = vmatpush1.bf16.msra.mxu0 %v672
      %676 = vmatprep.subr.bf16.mxu0 0
      %677 = vmatpush1.bf16.msra.mxu0 0
      %678 = vmatprep.subr.bf16.mxu0 0
      %679 = vmatpush1.bf16.msra.mxu0 0
      %680 = vmatprep.subr.bf16.mxu0 0
      %681 = vmatpush1.bf16.msra.mxu0 0
      %682 = vmatprep.subr.bf16.mxu0 0
      %683 = vmatpush1.bf16.msra.mxu0 0
      %684 = vmatprep.subr.bf16.mxu0 0
      %685 = vmatpush1.bf16.msra.mxu0 0
      %686 = vmatprep.subr.bf16.mxu0 0
      %687 = vmatpush1.bf16.msra.mxu0 0
      %688 = vmatprep.subr.bf16.mxu0 0
      %689 = vmatpush1.bf16.msra.mxu0 0
      %690 = vmatprep.subr.bf16.mxu0 0
      %691 = vmatpush1.bf16.msra.mxu0 0
      %692 = vmatprep.subr.bf16.mxu0 0
      %693 = vmatpush1.bf16.msra.mxu0 0
      %694 = vmatprep.subr.bf16.mxu0 0
      %695 = vmatpush1.bf16.msra.mxu0 0
      %696 = vmatprep.subr.bf16.mxu0 0
      %697 = vmatpush1.bf16.msra.mxu0 0
      %698 = vmatprep.subr.bf16.mxu0 0
      %699 = vmatpush1.bf16.msra.mxu0 0
      %700 = vmatprep.subr.bf16.mxu0 0
      %701 = vmatpush1.bf16.msra.mxu0 0
      %702 = vmatprep.subr.bf16.mxu0 0
      %703 = vmatpush1.bf16.msra.mxu0 0
      %704 = vmatprep.subr.bf16.mxu0 0
      %705 = vmatpush1.bf16.msra.mxu0 0
      %706 = vmatprep.mubr.bf16.mxu0 0
      %707 = vmatmul.mubr.bf16.gmra.mrb[0].mxu0 %v657
      %v708 = vpop.f32.mrb[0].mxu0
      %v709 = vadd.f32 0.0, %v708
      %v710 = vpop.f32.mrb[0].mxu0
      %v711 = vpop.f32.mrb[0].mxu0
      %v712 = vadd.f32 0.0, %v711
      %v713 = vpop.f32.mrb[0].mxu0
      %714 = vmatprep.mubr.bf16.mxu0 0
      %715 = vmatmul.mubr.bf16.gmra.mrb[0].mxu0 %v660
      %v716 = vpop.f32.mrb[0].mxu0
      %v717 = vadd.f32 0.0, %v716
      %v718 = vpop.f32.mrb[0].mxu0
      %v719 = vpop.f32.mrb[0].mxu0
      %v720 = vadd.f32 0.0, %v719
      %v721 = vpop.f32.mrb[0].mxu0
      %722 = vmatprep.mubr.bf16.mxu0 0
      %723 = vmatmul.mubr.bf16.gmra.mrb[0].mxu0 %v663
      %v724 = vpop.f32.mrb[0].mxu0
      %v725 = vadd.f32 0.0, %v724
      %v726 = vpop.f32.mrb[0].mxu0
      %v727 = vpop.f32.mrb[0].mxu0
      %v728 = vadd.f32 0.0, %v727
      %v729 = vpop.f32.mrb[0].mxu0
      %730 = vmatprep.mubr.bf16.mxu0 0
      %731 = vmatmul.mubr.bf16.gmra.mrb[0].mxu0 %v666
      %v732 = vpop.f32.mrb[0].mxu0
      %v733 = vadd.f32 0.0, %v732
      %v734 = vpop.f32.mrb[0].mxu0
      %v735 = vpop.f32.mrb[0].mxu0
      %v736 = vadd.f32 0.0, %v735
      %v737 = vpop.f32.mrb[0].mxu0
      %738 = vmatprep.mubr.bf16.mxu0 0
      %739 = vmatmul.mubr.bf16.gmra.mrb[0].mxu0 %v669
      %v740 = vpop.f32.mrb[0].mxu0
      %v741 = vadd.f32 0.0, %v740
      %v742 = vpop.f32.mrb[0].mxu0
      %v743 = vpop.f32.mrb[0].mxu0
      %v744 = vadd.f32 0.0, %v743
      %v745 = vpop.f32.mrb[0].mxu0
      %746 = vdwg.mxu0
      %v747 = vadd.f32 %v594, %v709
      %v748 = vadd.f32 %v595, %v712
      %v749 = vadd.f32 %v596, %v717
      %v750 = vadd.f32 %v597, %v720
      %v751 = vadd.f32 %v598, %v725
      %v752 = vadd.f32 %v599, %v728
      %v753 = vadd.f32 %v600, %v733
      %v754 = vadd.f32 %v601, %v736
      %v755 = vadd.f32 %v602, %v741
      %v756 = vadd.f32 %v603, %v744
      %v757 = vld [vmem:[%s207 + $0x2c] sm:$0x3]
      %s758 = scalar_lea.vmem %s1, 16
      %v759 = vld [vmem:[%s758] sm:$0xf]
      %v761 = vunpack.c.l.b16 %v757
      %v762 = vpack.c.b16 %v761, %v761
      %vm763 = vsmask.f32 6400
      %v765 = vshrl.u32 %v639, 16
      %v767 = vrot.slane %v765, 1
      %v768 = vshll.u32 %v639, 16
      %v770 = vrot.slane %v768, 2
      %v771 = vor.u32 %v767, %v770
      %v773 = vshrl.u32 %v640, 16
      %v775 = vrot.slane %v773, 1
      %v776 = vshll.u32 %v640, 16
      %v778 = vrot.slane %v776, 2
      %v779 = vor.u32 %v775, %v778
      %v780 = vsel %vm763, %v771, %v779
      %v782 = vshrl.u32 %v641, 16
      %v784 = vrot.slane %v782, 1
      %v785 = vshll.u32 %v641, 16
      %v787 = vrot.slane %v785, 2
      %v788 = vor.u32 %v784, %v787
      %v789 = vsel %vm763, %v779, %v788
      %v791 = vshrl.u32 %v642, 16
      %v793 = vrot.slane %v791, 1
      %v794 = vshll.u32 %v642, 16
      %v796 = vrot.slane %v794, 2
      %v797 = vor.u32 %v793, %v796
      %v798 = vsel %vm763, %v788, %v797
      %v800 = vshrl.u32 %v643, 16
      %v802 = vrot.slane %v800, 1
      %v803 = vshll.u32 %v643, 16
      %v805 = vrot.slane %v803, 2
      %v806 = vor.u32 %v802, %v805
      %v807 = vsel %vm763, %v797, %v806
      %v809 = vshrl.u32 %v762, 16
      %v811 = vrot.slane %v809, 1
      %v812 = vshll.u32 %v762, 16
      %v814 = vrot.slane %v812, 2
      %v815 = vor.u32 %v811, %v814
      %v816 = vsel %vm763, %v806, %v815
      %v818 = vsel %vm306, %v780, 0
      %v821 = vsel %vm306, %v789, 0
      %v824 = vsel %vm306, %v798, 0
      %v827 = vsel %vm306, %v807, 0
      %v830 = vsel %vm306, %v816, 0
      %v833 = vsel %vm322, %v759, 0
      %835 = vmatprep.subr.bf16.mxu0 0
      %836 = vmatpush1.bf16.msra.mxu0 %v833
      %837 = vmatprep.subr.bf16.mxu0 0
      %838 = vmatpush1.bf16.msra.mxu0 0
      %839 = vmatprep.subr.bf16.mxu0 0
      %840 = vmatpush1.bf16.msra.mxu0 0
      %841 = vmatprep.subr.bf16.mxu0 0
      %842 = vmatpush1.bf16.msra.mxu0 0
      %843 = vmatprep.subr.bf16.mxu0 0
      %844 = vmatpush1.bf16.msra.mxu0 0
      %845 = vmatprep.subr.bf16.mxu0 0
      %846 = vmatpush1.bf16.msra.mxu0 0
      %847 = vmatprep.subr.bf16.mxu0 0
      %848 = vmatpush1.bf16.msra.mxu0 0
      %849 = vmatprep.subr.bf16.mxu0 0
      %850 = vmatpush1.bf16.msra.mxu0 0
      %851 = vmatprep.subr.bf16.mxu0 0
      %852 = vmatpush1.bf16.msra.mxu0 0
      %853 = vmatprep.subr.bf16.mxu0 0
      %854 = vmatpush1.bf16.msra.mxu0 0
      %855 = vmatprep.subr.bf16.mxu0 0
      %856 = vmatpush1.bf16.msra.mxu0 0
      %857 = vmatprep.subr.bf16.mxu0 0
      %858 = vmatpush1.bf16.msra.mxu0 0
      %859 = vmatprep.subr.bf16.mxu0 0
      %860 = vmatpush1.bf16.msra.mxu0 0
      %861 = vmatprep.subr.bf16.mxu0 0
      %862 = vmatpush1.bf16.msra.mxu0 0
      %863 = vmatprep.subr.bf16.mxu0 0
      %864 = vmatpush1.bf16.msra.mxu0 0
      %865 = vmatprep.subr.bf16.mxu0 0
      %866 = vmatpush1.bf16.msra.mxu0 0
      %867 = vmatprep.mubr.bf16.mxu0 0
      %868 = vmatmul.mubr.bf16.gmra.mrb[0].mxu0 %v818
      %v869 = vpop.f32.mrb[0].mxu0
      %v870 = vadd.f32 0.0, %v869
      %v871 = vpop.f32.mrb[0].mxu0
      %v872 = vpop.f32.mrb[0].mxu0
      %v873 = vadd.f32 0.0, %v872
      %v874 = vpop.f32.mrb[0].mxu0
      %875 = vmatprep.mubr.bf16.mxu0 0
      %876 = vmatmul.mubr.bf16.gmra.mrb[0].mxu0 %v821
      %v877 = vpop.f32.mrb[0].mxu0
      %v878 = vadd.f32 0.0, %v877
      %v879 = vpop.f32.mrb[0].mxu0
      %v880 = vpop.f32.mrb[0].mxu0
      %v881 = vadd.f32 0.0, %v880
      %v882 = vpop.f32.mrb[0].mxu0
      %883 = vmatprep.mubr.bf16.mxu0 0
      %884 = vmatmul.mubr.bf16.gmra.mrb[0].mxu0 %v824
      %v885 = vpop.f32.mrb[0].mxu0
      %v886 = vadd.f32 0.0, %v885
      %v887 = vpop.f32.mrb[0].mxu0
      %v888 = vpop.f32.mrb[0].mxu0
      %v889 = vadd.f32 0.0, %v888
      %v890 = vpop.f32.mrb[0].mxu0
      %891 = vmatprep.mubr.bf16.mxu0 0
      %892 = vmatmul.mubr.bf16.gmra.mrb[0].mxu0 %v827
      %v893 = vpop.f32.mrb[0].mxu0
      %v894 = vadd.f32 0.0, %v893
      %v895 = vpop.f32.mrb[0].mxu0
      %v896 = vpop.f32.mrb[0].mxu0
      %v897 = vadd.f32 0.0, %v896
      %v898 = vpop.f32.mrb[0].mxu0
      %899 = vmatprep.mubr.bf16.mxu0 0
      %900 = vmatmul.mubr.bf16.gmra.mrb[0].mxu0 %v830
      %v901 = vpop.f32.mrb[0].mxu0
      %v902 = vadd.f32 0.0, %v901
      %v903 = vpop.f32.mrb[0].mxu0
      %v904 = vpop.f32.mrb[0].mxu0
      %v905 = vadd.f32 0.0, %v904
      %v906 = vpop.f32.mrb[0].mxu0
      %907 = vdwg.mxu0
      %v908 = vadd.f32 %v747, %v870
      %v909 = vadd.f32 %v748, %v873
      %v910 = vadd.f32 %v749, %v878
      %v911 = vadd.f32 %v750, %v881
      %v912 = vadd.f32 %v751, %v886
      %v913 = vadd.f32 %v752, %v889
      %v914 = vadd.f32 %v753, %v894
      %v915 = vadd.f32 %v754, %v897
      %v916 = vadd.f32 %v755, %v902
      %v917 = vadd.f32 %v756, %v905
      %v918 = vld [vmem:[%s207 + $0x4] sm:$0xc]
      %s919 = scalar_lea.vmem %s1, 20
      %v920 = vld [vmem:[%s919] sm:$0xf]
      %v922 = vunpack.c.l.b16 %v918
      %v923 = vpack.c.b16 %v629, %v922
      %vm924 = vcmask 1045504
      %v925 = vrot.slane %v923, 2
      %v926 = vrot.slane %v640, 2
      %v927 = vsel %vm924, %v925, %v926
      %v928 = vrot.slane %v641, 2
      %v929 = vsel %vm924, %v926, %v928
      %v930 = vrot.slane %v642, 2
      %v931 = vsel %vm924, %v928, %v930
      %v932 = vrot.slane %v643, 2
      %v933 = vsel %vm924, %v930, %v932
      %v934 = vrot.slane %v762, 2
      %v935 = vsel %vm924, %v932, %v934
      %v937 = vsel %vm306, %v927, 0
      %v940 = vsel %vm306, %v929, 0
      %v943 = vsel %vm306, %v931, 0
      %v946 = vsel %vm306, %v933, 0
      %v949 = vsel %vm306, %v935, 0
      %v952 = vsel %vm322, %v920, 0
      %954 = vmatprep.subr.bf16.mxu0 0
      %955 = vmatpush1.bf16.msra.mxu0 %v952
      %956 = vmatprep.subr.bf16.mxu0 0
      %957 = vmatpush1.bf16.msra.mxu0 0
      %958 = vmatprep.subr.bf16.mxu0 0
      %959 = vmatpush1.bf16.msra.mxu0 0
      %960 = vmatprep.subr.bf16.mxu0 0
      %961 = vmatpush1.bf16.msra.mxu0 0
      %962 = vmatprep.subr.bf16.mxu0 0
      %963 = vmatpush1.bf16.msra.mxu0 0
      %964 = vmatprep.subr.bf16.mxu0 0
      %965 = vmatpush1.bf16.msra.mxu0 0
      %966 = vmatprep.subr.bf16.mxu0 0
      %967 = vmatpush1.bf16.msra.mxu0 0
      %968 = vmatprep.subr.bf16.mxu0 0
      %969 = vmatpush1.bf16.msra.mxu0 0
      %970 = vmatprep.subr.bf16.mxu0 0
      %971 = vmatpush1.bf16.msra.mxu0 0
      %972 = vmatprep.subr.bf16.mxu0 0
      %973 = vmatpush1.bf16.msra.mxu0 0
      %974 = vmatprep.subr.bf16.mxu0 0
      %975 = vmatpush1.bf16.msra.mxu0 0
      %976 = vmatprep.subr.bf16.mxu0 0
      %977 = vmatpush1.bf16.msra.mxu0 0
      %978 = vmatprep.subr.bf16.mxu0 0
      %979 = vmatpush1.bf16.msra.mxu0 0
      %980 = vmatprep.subr.bf16.mxu0 0
      %981 = vmatpush1.bf16.msra.mxu0 0
      %982 = vmatprep.subr.bf16.mxu0 0
      %983 = vmatpush1.bf16.msra.mxu0 0
      %984 = vmatprep.subr.bf16.mxu0 0
      %985 = vmatpush1.bf16.msra.mxu0 0
      %986 = vmatprep.mubr.bf16.mxu0 0
      %987 = vmatmul.mubr.bf16.gmra.mrb[0].mxu0 %v937
      %v988 = vpop.f32.mrb[0].mxu0
      %v989 = vadd.f32 0.0, %v988
      %v990 = vpop.f32.mrb[0].mxu0
      %v991 = vpop.f32.mrb[0].mxu0
      %v992 = vadd.f32 0.0, %v991
      %v993 = vpop.f32.mrb[0].mxu0
      %994 = vmatprep.mubr.bf16.mxu0 0
      %995 = vmatmul.mubr.bf16.gmra.mrb[0].mxu0 %v940
      %v996 = vpop.f32.mrb[0].mxu0
      %v997 = vadd.f32 0.0, %v996
      %v998 = vpop.f32.mrb[0].mxu0
      %v999 = vpop.f32.mrb[0].mxu0
      %v1000 = vadd.f32 0.0, %v999
      %v1001 = vpop.f32.mrb[0].mxu0
      %1002 = vmatprep.mubr.bf16.mxu0 0
      %1003 = vmatmul.mubr.bf16.gmra.mrb[0].mxu0 %v943
      %v1004 = vpop.f32.mrb[0].mxu0
      %v1005 = vadd.f32 0.0, %v1004
      %v1006 = vpop.f32.mrb[0].mxu0
      %v1007 = vpop.f32.mrb[0].mxu0
      %v1008 = vadd.f32 0.0, %v1007
      %v1009 = vpop.f32.mrb[0].mxu0
      %1010 = vmatprep.mubr.bf16.mxu0 0
      %1011 = vmatmul.mubr.bf16.gmra.mrb[0].mxu0 %v946
      %v1012 = vpop.f32.mrb[0].mxu0
      %v1013 = vadd.f32 0.0, %v1012
      %v1014 = vpop.f32.mrb[0].mxu0
      %v1015 = vpop.f32.mrb[0].mxu0
      %v1016 = vadd.f32 0.0, %v1015
      %v1017 = vpop.f32.mrb[0].mxu0
      %1018 = vmatprep.mubr.bf16.mxu0 0
      %1019 = vmatmul.mubr.bf16.gmra.mrb[0].mxu0 %v949
      %v1020 = vpop.f32.mrb[0].mxu0
      %v1021 = vadd.f32 0.0, %v1020
      %v1022 = vpop.f32.mrb[0].mxu0
      %v1023 = vpop.f32.mrb[0].mxu0
      %v1024 = vadd.f32 0.0, %v1023
      %v1025 = vpop.f32.mrb[0].mxu0
      %1026 = vdwg.mxu0
      %v1027 = vadd.f32 %v908, %v989
      %v1028 = vadd.f32 %v909, %v992
      %v1029 = vadd.f32 %v910, %v997
      %v1030 = vadd.f32 %v911, %v1000
      %v1031 = vadd.f32 %v912, %v1005
      %v1032 = vadd.f32 %v913, %v1008
      %v1033 = vadd.f32 %v914, %v1013
      %v1034 = vadd.f32 %v915, %v1016
      %v1035 = vadd.f32 %v916, %v1021
      %v1036 = vadd.f32 %v917, %v1024
      %v1037 = vld [vmem:[%s207 + $0x8] sm:$0xc]
      %v1038 = vld [vmem:[%s207 + $0xc] sm:$0xf]
      %v1039 = vld [vmem:[%s207 + $0x10] sm:$0xf]
      %v1040 = vld [vmem:[%s207 + $0x14] sm:$0xf]
      %v1041 = vld [vmem:[%s207 + $0x18] sm:$0xf]
      %v1042 = vld [vmem:[%s207 + $0x1c] sm:$0xf]
      %v1043 = vld [vmem:[%s207 + $0x20] sm:$0xf]
      %v1044 = vld [vmem:[%s207 + $0x24] sm:$0xf]
      %v1045 = vld [vmem:[%s207 + $0x28] sm:$0xf]
      %v1046 = vld [vmem:[%s207 + $0x2c] sm:$0xf]
      %v1047 = vld [vmem:[%s207 + $0x30] sm:$0x3]
      %s1048 = scalar_lea.vmem %s1, 24
      %v1049 = vld [vmem:[%s1048] sm:$0xf]
      %v1061 = vunpack.c.l.b16 %v1037
      %v1062 = vunpack.c.l.b16 %v1038
      %v1063 = vunpack.c.l.b16 %v1039
      %v1064 = vunpack.c.l.b16 %v1040
      %v1065 = vunpack.c.l.b16 %v1041
      %v1066 = vunpack.c.l.b16 %v1042
      %v1067 = vunpack.c.l.b16 %v1043
      %v1068 = vunpack.c.l.b16 %v1044
      %v1069 = vunpack.c.l.b16 %v1045
      %v1070 = vunpack.c.l.b16 %v1046
      %v1071 = vunpack.c.l.b16 %v1047
      %v1072 = vpack.c.b16 %v1062, %v1061
      %v1073 = vpack.c.b16 %v1064, %v1063
      %v1074 = vpack.c.b16 %v1066, %v1065
      %v1075 = vpack.c.b16 %v1068, %v1067
      %v1076 = vpack.c.b16 %v1070, %v1069
      %v1077 = vpack.c.b16 %v1071, %v1071
      %v1078 = vrot.slane %v1072, 2
      %v1079 = vrot.slane %v1073, 2
      %v1080 = vsel %vm924, %v1078, %v1079
      %v1081 = vrot.slane %v1074, 2
      %v1082 = vsel %vm924, %v1079, %v1081
      %v1083 = vrot.slane %v1075, 2
      %v1084 = vsel %vm924, %v1081, %v1083
      %v1085 = vrot.slane %v1076, 2
      %v1086 = vsel %vm924, %v1083, %v1085
      %v1087 = vrot.slane %v1077, 2
      %v1088 = vsel %vm924, %v1085, %v1087
      %v1090 = vsel %vm306, %v1080, 0
      %v1093 = vsel %vm306, %v1082, 0
      %v1096 = vsel %vm306, %v1084, 0
      %v1099 = vsel %vm306, %v1086, 0
      %v1102 = vsel %vm306, %v1088, 0
      %v1105 = vsel %vm322, %v1049, 0
      %1107 = vmatprep.subr.bf16.mxu0 0
      %1108 = vmatpush1.bf16.msra.mxu0 %v1105
      %1109 = vmatprep.subr.bf16.mxu0 0
      %1110 = vmatpush1.bf16.msra.mxu0 0
      %1111 = vmatprep.subr.bf16.mxu0 0
      %1112 = vmatpush1.bf16.msra.mxu0 0
      %1113 = vmatprep.subr.bf16.mxu0 0
      %1114 = vmatpush1.bf16.msra.mxu0 0
      %1115 = vmatprep.subr.bf16.mxu0 0
      %1116 = vmatpush1.bf16.msra.mxu0 0
      %1117 = vmatprep.subr.bf16.mxu0 0
      %1118 = vmatpush1.bf16.msra.mxu0 0
      %1119 = vmatprep.subr.bf16.mxu0 0
      %1120 = vmatpush1.bf16.msra.mxu0 0
      %1121 = vmatprep.subr.bf16.mxu0 0
      %1122 = vmatpush1.bf16.msra.mxu0 0
      %1123 = vmatprep.subr.bf16.mxu0 0
      %1124 = vmatpush1.bf16.msra.mxu0 0
      %1125 = vmatprep.subr.bf16.mxu0 0
      %1126 = vmatpush1.bf16.msra.mxu0 0
      %1127 = vmatprep.subr.bf16.mxu0 0
      %1128 = vmatpush1.bf16.msra.mxu0 0
      %1129 = vmatprep.subr.bf16.mxu0 0
      %1130 = vmatpush1.bf16.msra.mxu0 0
      %1131 = vmatprep.subr.bf16.mxu0 0
      %1132 = vmatpush1.bf16.msra.mxu0 0
      %1133 = vmatprep.subr.bf16.mxu0 0
      %1134 = vmatpush1.bf16.msra.mxu0 0
      %1135 = vmatprep.subr.bf16.mxu0 0
      %1136 = vmatpush1.bf16.msra.mxu0 0
      %1137 = vmatprep.subr.bf16.mxu0 0
      %1138 = vmatpush1.bf16.msra.mxu0 0
      %1139 = vmatprep.mubr.bf16.mxu0 0
      %1140 = vmatmul.mubr.bf16.gmra.mrb[0].mxu0 %v1090
      %v1141 = vpop.f32.mrb[0].mxu0
      %v1142 = vadd.f32 0.0, %v1141
      %v1143 = vpop.f32.mrb[0].mxu0
      %v1144 = vpop.f32.mrb[0].mxu0
      %v1145 = vadd.f32 0.0, %v1144
      %v1146 = vpop.f32.mrb[0].mxu0
      %1147 = vmatprep.mubr.bf16.mxu0 0
      %1148 = vmatmul.mubr.bf16.gmra.mrb[0].mxu0 %v1093
      %v1149 = vpop.f32.mrb[0].mxu0
      %v1150 = vadd.f32 0.0, %v1149
      %v1151 = vpop.f32.mrb[0].mxu0
      %v1152 = vpop.f32.mrb[0].mxu0
      %v1153 = vadd.f32 0.0, %v1152
      %v1154 = vpop.f32.mrb[0].mxu0
      %1155 = vmatprep.mubr.bf16.mxu0 0
      %1156 = vmatmul.mubr.bf16.gmra.mrb[0].mxu0 %v1096
      %v1157 = vpop.f32.mrb[0].mxu0
      %v1158 = vadd.f32 0.0, %v1157
      %v1159 = vpop.f32.mrb[0].mxu0
      %v1160 = vpop.f32.mrb[0].mxu0
      %v1161 = vadd.f32 0.0, %v1160
      %v1162 = vpop.f32.mrb[0].mxu0
      %1163 = vmatprep.mubr.bf16.mxu0 0
      %1164 = vmatmul.mubr.bf16.gmra.mrb[0].mxu0 %v1099
      %v1165 = vpop.f32.mrb[0].mxu0
      %v1166 = vadd.f32 0.0, %v1165
      %v1167 = vpop.f32.mrb[0].mxu0
      %v1168 = vpop.f32.mrb[0].mxu0
      %v1169 = vadd.f32 0.0, %v1168
      %v1170 = vpop.f32.mrb[0].mxu0
      %1171 = vmatprep.mubr.bf16.mxu0 0
      %1172 = vmatmul.mubr.bf16.gmra.mrb[0].mxu0 %v1102
      %v1173 = vpop.f32.mrb[0].mxu0
      %v1174 = vadd.f32 0.0, %v1173
      %v1175 = vpop.f32.mrb[0].mxu0
      %v1176 = vpop.f32.mrb[0].mxu0
      %v1177 = vadd.f32 0.0, %v1176
      %v1178 = vpop.f32.mrb[0].mxu0
      %1179 = vdwg.mxu0
      %v1180 = vadd.f32 %v1027, %v1142
      %v1181 = vadd.f32 %v1028, %v1145
      %v1182 = vadd.f32 %v1029, %v1150
      %v1183 = vadd.f32 %v1030, %v1153
      %v1184 = vadd.f32 %v1031, %v1158
      %v1185 = vadd.f32 %v1032, %v1161
      %v1186 = vadd.f32 %v1033, %v1166
      %v1187 = vadd.f32 %v1034, %v1169
      %v1188 = vadd.f32 %v1035, %v1174
      %v1189 = vadd.f32 %v1036, %v1177
      %v1190 = vld [vmem:[%s207 + $0x30] sm:$0x7]
      %s1191 = scalar_lea.vmem %s1, 28
      %v1192 = vld [vmem:[%s1191] sm:$0xf]
      %v1194 = vunpack.c.l.b16 %v1190
      %v1195 = vpack.c.b16 %v1194, %v1194
      %vm1196 = vsmask.f32 5376
      %v1198 = vshrl.u32 %v1072, 16
      %v1200 = vrot.slane %v1198, 2
      %v1201 = vshll.u32 %v1072, 16
      %v1203 = vrot.slane %v1201, 3
      %v1204 = vor.u32 %v1200, %v1203
      %v1206 = vshrl.u32 %v1073, 16
      %v1208 = vrot.slane %v1206, 2
      %v1209 = vshll.u32 %v1073, 16
      %v1211 = vrot.slane %v1209, 3
      %v1212 = vor.u32 %v1208, %v1211
      %v1213 = vsel %vm1196, %v1204, %v1212
      %v1215 = vshrl.u32 %v1074, 16
      %v1217 = vrot.slane %v1215, 2
      %v1218 = vshll.u32 %v1074, 16
      %v1220 = vrot.slane %v1218, 3
      %v1221 = vor.u32 %v1217, %v1220
      %v1222 = vsel %vm1196, %v1212, %v1221
      %v1224 = vshrl.u32 %v1075, 16
      %v1226 = vrot.slane %v1224, 2
      %v1227 = vshll.u32 %v1075, 16
      %v1229 = vrot.slane %v1227, 3
      %v1230 = vor.u32 %v1226, %v1229
      %v1231 = vsel %vm1196, %v1221, %v1230
      %v1233 = vshrl.u32 %v1076, 16
      %v1235 = vrot.slane %v1233, 2
      %v1236 = vshll.u32 %v1076, 16
      %v1238 = vrot.slane %v1236, 3
      %v1239 = vor.u32 %v1235, %v1238
      %v1240 = vsel %vm1196, %v1230, %v1239
      %v1242 = vshrl.u32 %v1195, 16
      %v1244 = vrot.slane %v1242, 2
      %v1245 = vshll.u32 %v1195, 16
      %v1247 = vrot.slane %v1245, 3
      %v1248 = vor.u32 %v1244, %v1247
      %v1249 = vsel %vm1196, %v1239, %v1248
      %v1251 = vsel %vm306, %v1213, 0
      %v1254 = vsel %vm306, %v1222, 0
      %v1257 = vsel %vm306, %v1231, 0
      %v1260 = vsel %vm306, %v1240, 0
      %v1263 = vsel %vm306, %v1249, 0
      %v1266 = vsel %vm322, %v1192, 0
      %1268 = vmatprep.subr.bf16.mxu0 0
      %1269 = vmatpush1.bf16.msra.mxu0 %v1266
      %1270 = vmatprep.subr.bf16.mxu0 0
      %1271 = vmatpush1.bf16.msra.mxu0 0
      %1272 = vmatprep.subr.bf16.mxu0 0
      %1273 = vmatpush1.bf16.msra.mxu0 0
      %1274 = vmatprep.subr.bf16.mxu0 0
      %1275 = vmatpush1.bf16.msra.mxu0 0
      %1276 = vmatprep.subr.bf16.mxu0 0
      %1277 = vmatpush1.bf16.msra.mxu0 0
      %1278 = vmatprep.subr.bf16.mxu0 0
      %1279 = vmatpush1.bf16.msra.mxu0 0
      %1280 = vmatprep.subr.bf16.mxu0 0
      %1281 = vmatpush1.bf16.msra.mxu0 0
      %1282 = vmatprep.subr.bf16.mxu0 0
      %1283 = vmatpush1.bf16.msra.mxu0 0
      %1284 = vmatprep.subr.bf16.mxu0 0
      %1285 = vmatpush1.bf16.msra.mxu0 0
      %1286 = vmatprep.subr.bf16.mxu0 0
      %1287 = vmatpush1.bf16.msra.mxu0 0
      %1288 = vmatprep.subr.bf16.mxu0 0
      %1289 = vmatpush1.bf16.msra.mxu0 0
      %1290 = vmatprep.subr.bf16.mxu0 0
      %1291 = vmatpush1.bf16.msra.mxu0 0
      %1292 = vmatprep.subr.bf16.mxu0 0
      %1293 = vmatpush1.bf16.msra.mxu0 0
      %1294 = vmatprep.subr.bf16.mxu0 0
      %1295 = vmatpush1.bf16.msra.mxu0 0
      %1296 = vmatprep.subr.bf16.mxu0 0
      %1297 = vmatpush1.bf16.msra.mxu0 0
      %1298 = vmatprep.subr.bf16.mxu0 0
      %1299 = vmatpush1.bf16.msra.mxu0 0
      %1300 = vmatprep.mubr.bf16.mxu0 0
      %1301 = vmatmul.mubr.bf16.gmra.mrb[0].mxu0 %v1251
      %v1302 = vpop.f32.mrb[0].mxu0
      %v1303 = vadd.f32 0.0, %v1302
      %v1304 = vpop.f32.mrb[0].mxu0
      %v1305 = vpop.f32.mrb[0].mxu0
      %v1306 = vadd.f32 0.0, %v1305
      %v1307 = vpop.f32.mrb[0].mxu0
      %1308 = vmatprep.mubr.bf16.mxu0 0
      %1309 = vmatmul.mubr.bf16.gmra.mrb[0].mxu0 %v1254
      %v1310 = vpop.f32.mrb[0].mxu0
      %v1311 = vadd.f32 0.0, %v1310
      %v1312 = vpop.f32.mrb[0].mxu0
      %v1313 = vpop.f32.mrb[0].mxu0
      %v1314 = vadd.f32 0.0, %v1313
      %v1315 = vpop.f32.mrb[0].mxu0
      %1316 = vmatprep.mubr.bf16.mxu0 0
      %1317 = vmatmul.mubr.bf16.gmra.mrb[0].mxu0 %v1257
      %v1318 = vpop.f32.mrb[0].mxu0
      %v1319 = vadd.f32 0.0, %v1318
      %v1320 = vpop.f32.mrb[0].mxu0
      %v1321 = vpop.f32.mrb[0].mxu0
      %v1322 = vadd.f32 0.0, %v1321
      %v1323 = vpop.f32.mrb[0].mxu0
      %1324 = vmatprep.mubr.bf16.mxu0 0
      %1325 = vmatmul.mubr.bf16.gmra.mrb[0].mxu0 %v1260
      %v1326 = vpop.f32.mrb[0].mxu0
      %v1327 = vadd.f32 0.0, %v1326
      %v1328 = vpop.f32.mrb[0].mxu0
      %v1329 = vpop.f32.mrb[0].mxu0
      %v1330 = vadd.f32 0.0, %v1329
      %v1331 = vpop.f32.mrb[0].mxu0
      %1332 = vmatprep.mubr.bf16.mxu0 0
      %1333 = vmatmul.mubr.bf16.gmra.mrb[0].mxu0 %v1263
      %v1334 = vpop.f32.mrb[0].mxu0
      %v1335 = vadd.f32 0.0, %v1334
      %v1336 = vpop.f32.mrb[0].mxu0
      %v1337 = vpop.f32.mrb[0].mxu0
      %v1338 = vadd.f32 0.0, %v1337
      %v1339 = vpop.f32.mrb[0].mxu0
      %1340 = vdwg.mxu0
      %v1341 = vadd.f32 %v1180, %v1303
      %v1342 = vadd.f32 %v1181, %v1306
      %v1343 = vadd.f32 %v1182, %v1311
      %v1344 = vadd.f32 %v1183, %v1314
      %v1345 = vadd.f32 %v1184, %v1319
      %v1346 = vadd.f32 %v1185, %v1322
      %v1347 = vadd.f32 %v1186, %v1327
      %v1348 = vadd.f32 %v1187, %v1330
      %v1349 = vadd.f32 %v1188, %v1335
      %v1350 = vadd.f32 %v1189, %v1338
      %v1351 = vld [vmem:[%s207 + $0x8] sm:$0x8]
      %s1352 = scalar_lea.vmem %s1, 32
      %v1353 = vld [vmem:[%s1352] sm:$0xf]
      %v1355 = vunpack.c.l.b16 %v1351
      %v1356 = vpack.c.b16 %v1062, %v1355
      %vm1357 = vcmask 1044480
      %v1358 = vrot.slane %v1356, 3
      %v1359 = vrot.slane %v1073, 3
      %v1360 = vsel %vm1357, %v1358, %v1359
      %v1361 = vrot.slane %v1074, 3
      %v1362 = vsel %vm1357, %v1359, %v1361
      %v1363 = vrot.slane %v1075, 3
      %v1364 = vsel %vm1357, %v1361, %v1363
      %v1365 = vrot.slane %v1076, 3
      %v1366 = vsel %vm1357, %v1363, %v1365
      %v1367 = vrot.slane %v1195, 3
      %v1368 = vsel %vm1357, %v1365, %v1367
      %v1370 = vsel %vm306, %v1360, 0
      %v1373 = vsel %vm306, %v1362, 0
      %v1376 = vsel %vm306, %v1364, 0
      %v1379 = vsel %vm306, %v1366, 0
      %v1382 = vsel %vm306, %v1368, 0
      %v1385 = vsel %vm322, %v1353, 0
      %1387 = vmatprep.subr.bf16.mxu0 0
      %1388 = vmatpush1.bf16.msra.mxu0 %v1385
      %1389 = vmatprep.subr.bf16.mxu0 0
      %1390 = vmatpush1.bf16.msra.mxu0 0
      %1391 = vmatprep.subr.bf16.mxu0 0
      %1392 = vmatpush1.bf16.msra.mxu0 0
      %1393 = vmatprep.subr.bf16.mxu0 0
      %1394 = vmatpush1.bf16.msra.mxu0 0
      %1395 = vmatprep.subr.bf16.mxu0 0
      %1396 = vmatpush1.bf16.msra.mxu0 0
      %1397 = vmatprep.subr.bf16.mxu0 0
      %1398 = vmatpush1.bf16.msra.mxu0 0
      %1399 = vmatprep.subr.bf16.mxu0 0
      %1400 = vmatpush1.bf16.msra.mxu0 0
      %1401 = vmatprep.subr.bf16.mxu0 0
      %1402 = vmatpush1.bf16.msra.mxu0 0
      %1403 = vmatprep.subr.bf16.mxu0 0
      %1404 = vmatpush1.bf16.msra.mxu0 0
      %1405 = vmatprep.subr.bf16.mxu0 0
      %1406 = vmatpush1.bf16.msra.mxu0 0
      %1407 = vmatprep.subr.bf16.mxu0 0
      %1408 = vmatpush1.bf16.msra.mxu0 0
      %1409 = vmatprep.subr.bf16.mxu0 0
      %1410 = vmatpush1.bf16.msra.mxu0 0
      %1411 = vmatprep.subr.bf16.mxu0 0
      %1412 = vmatpush1.bf16.msra.mxu0 0
      %1413 = vmatprep.subr.bf16.mxu0 0
      %1414 = vmatpush1.bf16.msra.mxu0 0
      %1415 = vmatprep.subr.bf16.mxu0 0
      %1416 = vmatpush1.bf16.msra.mxu0 0
      %1417 = vmatprep.subr.bf16.mxu0 0
      %1418 = vmatpush1.bf16.msra.mxu0 0
      %1419 = vmatprep.mubr.bf16.mxu0 0
      %1420 = vmatmul.mubr.bf16.gmra.mrb[0].mxu0 %v1370
      %v1421 = vpop.f32.mrb[0].mxu0
      %v1422 = vadd.f32 0.0, %v1421
      %v1423 = vpop.f32.mrb[0].mxu0
      %v1424 = vpop.f32.mrb[0].mxu0
      %v1425 = vadd.f32 0.0, %v1424
      %v1426 = vpop.f32.mrb[0].mxu0
      %1427 = vmatprep.mubr.bf16.mxu0 0
      %1428 = vmatmul.mubr.bf16.gmra.mrb[0].mxu0 %v1373
      %v1429 = vpop.f32.mrb[0].mxu0
      %v1430 = vadd.f32 0.0, %v1429
      %v1431 = vpop.f32.mrb[0].mxu0
      %v1432 = vpop.f32.mrb[0].mxu0
      %v1433 = vadd.f32 0.0, %v1432
      %v1434 = vpop.f32.mrb[0].mxu0
      %1435 = vmatprep.mubr.bf16.mxu0 0
      %1436 = vmatmul.mubr.bf16.gmra.mrb[0].mxu0 %v1376
      %v1437 = vpop.f32.mrb[0].mxu0
      %v1438 = vadd.f32 0.0, %v1437
      %v1439 = vpop.f32.mrb[0].mxu0
      %v1440 = vpop.f32.mrb[0].mxu0
      %v1441 = vadd.f32 0.0, %v1440
      %v1442 = vpop.f32.mrb[0].mxu0
      %1443 = vmatprep.mubr.bf16.mxu0 0
      %1444 = vmatmul.mubr.bf16.gmra.mrb[0].mxu0 %v1379
      %v1445 = vpop.f32.mrb[0].mxu0
      %v1446 = vadd.f32 0.0, %v1445
      %v1447 = vpop.f32.mrb[0].mxu0
      %v1448 = vpop.f32.mrb[0].mxu0
      %v1449 = vadd.f32 0.0, %v1448
      %v1450 = vpop.f32.mrb[0].mxu0
      %1451 = vmatprep.mubr.bf16.mxu0 0
      %1452 = vmatmul.mubr.bf16.gmra.mrb[0].mxu0 %v1382
      %v1453 = vpop.f32.mrb[0].mxu0
      %v1454 = vadd.f32 0.0, %v1453
      %v1455 = vpop.f32.mrb[0].mxu0
      %v1456 = vpop.f32.mrb[0].mxu0
      %v1457 = vadd.f32 0.0, %v1456
      %v1458 = vpop.f32.mrb[0].mxu0
      %1459 = vdwg.mxu0
      %v1460 = vadd.f32 %v1341, %v1422
      %v1461 = vadd.f32 %v1342, %v1425
      %v1462 = vadd.f32 %v1343, %v1430
      %v1463 = vadd.f32 %v1344, %v1433
      %v1464 = vadd.f32 %v1345, %v1438
      %v1465 = vadd.f32 %v1346, %v1441
      %v1466 = vadd.f32 %v1347, %v1446
      %v1467 = vadd.f32 %v1348, %v1449
      %v1468 = vadd.f32 %v1349, %v1454
      %v1469 = vadd.f32 %v1350, %v1457
      %v1470 = vld [vmem:[%s2] sm:$0x1]
      %v1472 = vlaneseq
      %v1473 = vshrl.u32 %v1472, 7
      %v1474 = vsub.s32 0, %v1473
      %v1475 = vrot.slane %v1470, %v1474
      %v1477 = vadd.f32 %v1460, %v1475
      %v1478 = vadd.f32 %v1461, %v1475
      %v1479 = vadd.f32 %v1462, %v1475
      %v1480 = vadd.f32 %v1463, %v1475
      %v1481 = vadd.f32 %v1464, %v1475
      %v1482 = vadd.f32 %v1465, %v1475
      %v1483 = vadd.f32 %v1466, %v1475
      %v1484 = vadd.f32 %v1467, %v1475
      %v1485 = vadd.f32 %v1468, %v1475
      %v1486 = vadd.f32 %v1469, %v1475
      %v1487 = vld [vmem:[%s212] sm:$0xff]
      %v1488 = vld [vmem:[%s212 + $0x8] sm:$0xff]
      %v1489 = vld [vmem:[%s212 + $0x10] sm:$0xff]
      %v1490 = vld [vmem:[%s212 + $0x18] sm:$0xff]
      %v1491 = vld [vmem:[%s212 + $0x20] sm:$0xff]
      %v1492 = vld [vmem:[%s212 + $0x28] sm:$0xff]
      %v1493 = vld [vmem:[%s212 + $0x30] sm:$0xff]
      %v1494 = vld [vmem:[%s212 + $0x38] sm:$0xff]
      %v1495 = vld [vmem:[%s212 + $0x40] sm:$0xff]
      %v1496 = vld [vmem:[%s212 + $0x48] sm:$0xff]
      %v1497 = vadd.f32 %v1477, %v1487
      %v1498 = vadd.f32 %v1478, %v1488
      %v1499 = vadd.f32 %v1479, %v1489
      %v1500 = vadd.f32 %v1480, %v1490
      %v1501 = vadd.f32 %v1481, %v1491
      %v1502 = vadd.f32 %v1482, %v1492
      %v1503 = vadd.f32 %v1483, %v1493
      %v1504 = vadd.f32 %v1484, %v1494
      %v1505 = vadd.f32 %v1485, %v1495
      %v1506 = vadd.f32 %v1486, %v1496
      %v1507 = vmax.f32 %v1497, 0.0
      %v1508 = vmax.f32 %v1498, 0.0
      %v1509 = vmax.f32 %v1499, 0.0
      %v1510 = vmax.f32 %v1500, 0.0
      %v1511 = vmax.f32 %v1501, 0.0
      %v1512 = vmax.f32 %v1502, 0.0
      %v1513 = vmax.f32 %v1503, 0.0
      %v1514 = vmax.f32 %v1504, 0.0
      %v1515 = vmax.f32 %v1505, 0.0
      %v1516 = vmax.f32 %v1506, 0.0
      %1517 = vst [vmem:[%s217] sm:$0xff] %v1507
      %1518 = vst [vmem:[%s217 + $0x8] sm:$0xff] %v1508
      %1519 = vst [vmem:[%s217 + $0x10] sm:$0xff] %v1509
      %1520 = vst [vmem:[%s217 + $0x18] sm:$0xff] %v1510
      %1521 = vst [vmem:[%s217 + $0x20] sm:$0xff] %v1511
      %1522 = vst [vmem:[%s217 + $0x28] sm:$0xff] %v1512
      %1523 = vst [vmem:[%s217 + $0x30] sm:$0xff] %v1513
      %1524 = vst [vmem:[%s217 + $0x38] sm:$0xff] %v1514
      %1525 = vst [vmem:[%s217 + $0x40] sm:$0xff] %v1515
      %1526 = vst [vmem:[%s217 + $0x48] sm:$0xff] %v1516
      %p1527 = scmp.lt.s32.totalorder %s15, 1
      %s1528 = scalar_select %p1527, %s15, 1
      %s1529 = smul.addr %s1528, 10
      %s1530 = smul.addr %s1529, 8
      %s1531 = scalar_lea.vmem %s4, %s1530
      // Predicated region
      $region37: #{residual_block_forward.3} parent=35 // pred_check
        %p1532 = pneg %p127
      $region38: #{residual_block_forward.3} parent=35 // pred_check_branch
        %1534 = sbr.rel (%p1532) target = $region40
      $region39: #{residual_block_forward.3} parent=35 // pred_region
        _
      $region40: #{residual_block_forward.3} parent=35 // pred_fallthru
        _
    $region36: #{residual_block_forward.3} parent=5 // pred_fallthru
      _
    %p1535 = scmp.le.s32.totalorder 2, %s10
    // Predicated region
    $region41: #{residual_block_forward.3} parent=5 // pred_check
      %p1536 = pneg %p1535
    $region42: #{residual_block_forward.3} parent=5 // pred_check_branch
      %1538 = sbr.rel (%p1536) target = $region44
    $region43: #{residual_block_forward.3} parent=5 // pred_region
      %s1539 = ssub.s32 %s10, 2
      // Predicated region
      $region45: #{residual_block_forward.3} parent=43 // pred_check
        %p1540 = pneg %p133
      $region46: #{residual_block_forward.3} parent=43 // pred_check_branch
        %1542 = sbr.rel (%p1540) target = $region48
      $region47: #{residual_block_forward.3} parent=43 // pred_region
        %p1543 = scmp.lt.s32.totalorder %s16, 1
        %s1544 = scalar_select %p1543, %s16, 1
        %s1545 = smul.addr %s1544, 10
        %s1546 = smul.addr %s1545, 8
        %s1547 = scalar_lea.vmem %s4, %s1546
      $region48: #{residual_block_forward.3} parent=43 // pred_fallthru
        _
    $region44: #{residual_block_forward.3} parent=5 // pred_fallthru
      _
  $region6: #{residual_block_forward.3} parent=0 // loop_footer
    %s14 = sadd.s32 1, %s10
  $region7: #{residual_block_forward.3} parent=0 // loop_footer_branch
    %9 = sbr.rel target = $region3
  $region8: #{residual_block_forward.3} parent=0 // loop_exit
    _

</llo_original>
